<compile_context>
chip_gen: v6e
topology: v6e:2x2x1
jax: 0.10.0
libtpu: 0.0.40
codegen_flags: <defaults>
</compile_context>

<pallas_src>
import functools

import jax
import jax.numpy as jnp
from jax.experimental import pallas as pl
from jax.experimental.pallas import tpu as pltpu


CFG = dict(vocab=50, max_pos=16, type_vocab=2, hidden=32, heads=2,
           intermediate=64, layers=2, n_classes=3)

_LN_EPS = 1e-12


# ------------------------------ fused kernel ------------------------------- #

def _layernorm(h, g, b):
    mu = jnp.mean(h, axis=-1, keepdims=True)
    d = h - mu
    var = jnp.mean(d * d, axis=-1, keepdims=True)
    return d * jax.lax.rsqrt(var + _LN_EPS) * g + b


def _gelu(x):
    # TODO(synk): PyTorch/HF BERT uses the exact erf GELU; this tanh approximation
    # differs by ~1e-3 relative.
    return 0.5 * x * (1.0 + jnp.tanh(0.7978845608028654 * (x + 0.044715 * x * x * x)))


def _fused_bert_kernel(x_ref, bias_ref, w_ref, v_ref, o_ref, ctx_sc, *,
                       n_layers, batch, seq, heads, inter, n_classes):
    """Whole-model forward, single invocation, everything resident in VMEM.

    x_ref    : (B*S, H)  embedded tokens (pre-LayerNorm)
    bias_ref : (B, S)    additive attention-mask bias
    w_ref    : (L*(3H+I)+2H, 3H)  packed weight matrices (sublane-stacked)
    v_ref    : (2+8L+2, 3H)       packed bias / LayerNorm vectors (one per row)
    o_ref    : (B, n_classes)     logits
    ctx_sc   : (B*S, H)  VMEM scratch for attention-context assembly
    """
    H = x_ref.shape[1]
    I = inter
    dh = H // heads
    W3 = 3 * H
    scale = 1.0 / float(dh) ** 0.5

    def W(row, rows, cols):          # weight slab slice (row offsets multiples of 8)
        return w_ref[pl.ds(row, rows), pl.ds(0, cols)]

    def V(row, cols):                # bias / LN vector row -> (1, cols)
        return v_ref[pl.ds(row, 1), pl.ds(0, cols)]

    # ---- embedding LayerNorm ----
    x = _layernorm(x_ref[...], V(0, H), V(1, H))                          # (B*S, H)

    for l in range(n_layers):
        wb = l * (3 * H + I)
        vb = 2 + l * 8
        wqkv = W(wb, H, W3)
        wo = W(wb + H, H, H)
        w1 = W(wb + 2 * H, H, I)
        w2 = W(wb + 3 * H, I, H)

        # ---- fused QKV projection: one (B*S,H) x (H,3H) MXU push ----
        qkv = jnp.dot(x, wqkv, preferred_element_type=jnp.float32) + V(vb, W3)

        # ---- self-attention for all (batch, head) pairs, fully in VMEM/vregs ----
        for b in range(batch):
            r0 = b * seq
            bias_b = bias_ref[pl.ds(b, 1), :]                             # (1, S)
            for h in range(heads):
                c0 = h * dh
                q_h = qkv[r0:r0 + seq, c0:c0 + dh]                        # (S, Dh)
                k_h = qkv[r0:r0 + seq, H + c0:H + c0 + dh]                # (S, Dh)
                v_h = qkv[r0:r0 + seq, 2 * H + c0:2 * H + c0 + dh]        # (S, Dh)
                s = jax.lax.dot_general(
                    q_h, k_h, (((1,), (1,)), ((), ())),
                    preferred_element_type=jnp.float32) * scale           # (S, S)
                s = s + bias_b                                            # mask bias
                s = s - jnp.max(s, axis=-1, keepdims=True)
                p = jnp.exp(s)
                p = p * pl.reciprocal(jnp.sum(p, axis=-1, keepdims=True),
                                      approx=True)
                ctx_sc[pl.ds(r0, seq), pl.ds(c0, dh)] = jnp.dot(
                    p, v_h, preferred_element_type=jnp.float32)

        attn_out = (jnp.dot(ctx_sc[...], wo,
                            preferred_element_type=jnp.float32) + V(vb + 1, H))
        x = _layernorm(attn_out + x, V(vb + 2, H), V(vb + 3, H))

        # ---- feed-forward ----
        hmid = _gelu(jnp.dot(x, w1, preferred_element_type=jnp.float32)
                     + V(vb + 4, I))
        ffn = jnp.dot(hmid, w2, preferred_element_type=jnp.float32) + V(vb + 5, H)
        x = _layernorm(ffn + x, V(vb + 6, H), V(vb + 7, H))

    # ---- [CLS] rows -> pooler tanh -> dropout(identity at inference) -> head ----
    wb = n_layers * (3 * H + I)
    vb = 2 + n_layers * 8
    cls = jnp.concatenate([x[b * seq:b * seq + 1, :] for b in range(batch)], axis=0)
    pooled = jnp.tanh(jnp.dot(cls, W(wb, H, H),
                              preferred_element_type=jnp.float32) + V(vb, H))
    o_ref[...] = (jnp.dot(pooled, W(wb + H, H, n_classes),
                          preferred_element_type=jnp.float32) + V(vb + 1, n_classes))


# --------------------------- params (packed slabs) -------------------------- #

def init_params(key):
    c = CFG
    H, I, C, L = c["hidden"], c["intermediate"], c["n_classes"], c["layers"]
    pack_w = max(3 * H, I)            # common lane width of both slabs (= 96 here)

    def nrm(k, shape, s=0.02):
        return s * jax.random.normal(k, shape, jnp.float32)

    def padc(a):
        a = jnp.asarray(a, jnp.float32)
        if a.ndim == 1:
            a = a.reshape(1, -1)
        return jnp.pad(a, ((0, 0), (0, pack_w - a.shape[1])))

    keys = iter(jax.random.split(key, 64))

    word_emb = nrm(next(keys), (c["vocab"], H))
    pos_emb = nrm(next(keys), (c["max_pos"], H))
    type_emb = nrm(next(keys), (c["type_vocab"], H))

    w_rows, v_rows = [], []
    v_rows += [padc(jnp.ones((H,))), padc(jnp.zeros((H,)))]        # emb LN g, b
    for _ in range(L):
        # Wq | Wk | Wv fused into one (H, 3H) projection.
        w_rows += [padc(nrm(next(keys), (H, 3 * H))),              # wqkv
                   padc(nrm(next(keys), (H, H))),                  # wo
                   padc(nrm(next(keys), (H, I))),                  # w1
                   padc(nrm(next(keys), (I, H)))]                  # w2
        v_rows += [padc(jnp.zeros((3 * H,))), padc(jnp.zeros((H,))),   # bqkv, bo
                   padc(jnp.ones((H,))), padc(jnp.zeros((H,))),        # ln1 g, b
                   padc(jnp.zeros((I,))), padc(jnp.zeros((H,))),       # b1, b2
                   padc(jnp.ones((H,))), padc(jnp.zeros((H,)))]        # ln2 g, b
    w_rows += [padc(nrm(next(keys), (H, H))),                      # pooler_w
               padc(nrm(next(keys), (H, C)))]                      # out_w
    v_rows += [padc(jnp.zeros((H,))), padc(jnp.zeros((C,)))]       # pooler_b, out_b

    return {
        "word_emb": word_emb, "pos_emb": pos_emb, "type_emb": type_emb,
        "w_pack": jnp.concatenate(w_rows, axis=0),   # (L*(3H+I)+2H, 3H)
        "v_pack": jnp.concatenate(v_rows, axis=0),   # (2+8L+2, 3H)
    }


# --------------------------- model (glue in JAX) ---------------------------- #

def sentiment_classifier_forward(params, input_ids, attention_mask):
    c = CFG
    B, S = input_ids.shape
    H = c["hidden"]

    # Embedding gather stays in XLA glue (one tiny (B*S,H) slab fed to the kernel).
    emb = (jnp.take(params["word_emb"], input_ids, axis=0)
           + params["pos_emb"][None, :S, :]
           + params["type_emb"][0][None, None, :])          # token_type_ids == 0
    x = emb.reshape(B * S, H)

    # additive attention-mask bias: 0 where attended, -10000 where masked
    mask_bias = (1.0 - attention_mask.astype(jnp.float32)) * -10000.0    # (B, S)

    kernel = functools.partial(_fused_bert_kernel,
                               n_layers=c["layers"], batch=B, seq=S,
                               heads=c["heads"], inter=c["intermediate"],
                               n_classes=c["n_classes"])
    return pl.pallas_call(
        kernel,
        out_shape=jax.ShapeDtypeStruct((B, c["n_classes"]), jnp.float32),
        scratch_shapes=[pltpu.VMEM((B * S, H), jnp.float32)],   # attention ctx
    )(x, mask_bias, params["w_pack"], params["v_pack"])


# --------------------------------- driver ----------------------------------- #

if __name__ == "__main__":
    key = jax.random.PRNGKey(0)
    pkey, ikey = jax.random.split(key)
    params = init_params(pkey)

    B, S = 2, 8
    input_ids = jax.random.randint(ikey, (B, S), 0, CFG["vocab"], dtype=jnp.int32)
    attention_mask = jnp.array([[1, 1, 1, 1, 1, 1, 0, 0],
                                [1, 1, 1, 1, 0, 0, 0, 0]], dtype=jnp.int32)

    logits = jax.jit(sentiment_classifier_forward)(params, input_ids, attention_mask)
    jax.block_until_ready(logits)
    assert logits.shape == (B, CFG["n_classes"])
    assert bool(jnp.all(jnp.isfinite(logits)))
    print("KERNEL_OK")
</pallas_src>

<mosaic_0001>
module attributes {stable_mosaic.version = 11 : i64} {
  func.func @_fused_bert_kernel(%arg0: memref<16x32xf32, #tpu.memory_space<vmem>>, %arg1: memref<2x8xf32, #tpu.memory_space<vmem>>, %arg2: memref<384x96xf32, #tpu.memory_space<vmem>>, %arg3: memref<20x96xf32, #tpu.memory_space<vmem>>, %arg4: memref<2x3xf32, #tpu.memory_space<vmem>>, %arg5: memref<16x32xf32, #tpu.memory_space<vmem>>) attributes {dimension_semantics = [], scalar_prefetch = 0 : i64, scratch_operands = 1 : i64, tpu.core_type = #tpu.core_type<tc>} {
    %c0 = arith.constant 0 : index
    %c0_0 = arith.constant 0 : index
    %0 = vector.load %arg0[%c0, %c0_0] : memref<16x32xf32, #tpu.memory_space<vmem>>, vector<16x32xf32>
    %c0_1 = arith.constant 0 : index
    %c0_2 = arith.constant 0 : index
    %1 = vector.load %arg3[%c0_1, %c0_2] : memref<20x96xf32, #tpu.memory_space<vmem>>, vector<1x32xf32>
    %c1 = arith.constant 1 : index
    %c0_3 = arith.constant 0 : index
    %2 = vector.load %arg3[%c1, %c0_3] : memref<20x96xf32, #tpu.memory_space<vmem>>, vector<1x32xf32>
    %cst = arith.constant dense<0.000000e+00> : vector<16xf32>
    %3 = vector.multi_reduction <add>, %0, %cst [1] : vector<16x32xf32> to vector<16xf32>
    %4 = vector.shape_cast %3 : vector<16xf32> to vector<16x1xf32>
    %cst_4 = arith.constant 3.200000e+01 : f32
    %5 = vector.broadcast %cst_4 : f32 to vector<16x1xf32>
    %6 = arith.divf %4, %5 : vector<16x1xf32>
    %7 = vector.broadcast %6 : vector<16x1xf32> to vector<16x32xf32>
    %8 = arith.subf %0, %7 : vector<16x32xf32>
    %9 = arith.mulf %8, %8 : vector<16x32xf32>
    %cst_5 = arith.constant dense<0.000000e+00> : vector<16xf32>
    %10 = vector.multi_reduction <add>, %9, %cst_5 [1] : vector<16x32xf32> to vector<16xf32>
    %11 = vector.shape_cast %10 : vector<16xf32> to vector<16x1xf32>
    %cst_6 = arith.constant 3.200000e+01 : f32
    %12 = vector.broadcast %cst_6 : f32 to vector<16x1xf32>
    %13 = arith.divf %11, %12 : vector<16x1xf32>
    %cst_7 = arith.constant 9.99999996E-13 : f32
    %14 = vector.broadcast %cst_7 : f32 to vector<16x1xf32>
    %15 = arith.addf %13, %14 : vector<16x1xf32>
    %16 = math.rsqrt %15 : vector<16x1xf32>
    %17 = vector.broadcast %16 : vector<16x1xf32> to vector<16x32xf32>
    %18 = arith.mulf %8, %17 : vector<16x32xf32>
    %19 = vector.broadcast %1 : vector<1x32xf32> to vector<16x32xf32>
    %20 = arith.mulf %18, %19 : vector<16x32xf32>
    %21 = vector.broadcast %2 : vector<1x32xf32> to vector<16x32xf32>
    %22 = arith.addf %20, %21 : vector<16x32xf32>
    %c0_8 = arith.constant 0 : index
    %c0_9 = arith.constant 0 : index
    %23 = vector.load %arg2[%c0_8, %c0_9] : memref<384x96xf32, #tpu.memory_space<vmem>>, vector<32x96xf32>
    %c32 = arith.constant 32 : index
    %c0_10 = arith.constant 0 : index
    %24 = vector.load %arg2[%c32, %c0_10] : memref<384x96xf32, #tpu.memory_space<vmem>>, vector<32x32xf32>
    %c64 = arith.constant 64 : index
    %c0_11 = arith.constant 0 : index
    %25 = vector.load %arg2[%c64, %c0_11] : memref<384x96xf32, #tpu.memory_space<vmem>>, vector<32x64xf32>
    %c96 = arith.constant 96 : index
    %c0_12 = arith.constant 0 : index
    %26 = vector.load %arg2[%c96, %c0_12] : memref<384x96xf32, #tpu.memory_space<vmem>>, vector<64x32xf32>
    %cst_13 = arith.constant dense<0.000000e+00> : vector<16x96xf32>
    %27 = tpu.matmul %22, %23, %cst_13 {dimension_numbers = #tpu.dot_dimension_numbers<[1], [0], [0], [1], [0, 0, 1, 1], [], []>} : vector<16x32xf32>, vector<32x96xf32>, vector<16x96xf32> -> vector<16x96xf32>
    %c2 = arith.constant 2 : index
    %c0_14 = arith.constant 0 : index
    %28 = vector.load %arg3[%c2, %c0_14] : memref<20x96xf32, #tpu.memory_space<vmem>>, vector<1x96xf32>
    %29 = vector.broadcast %28 : vector<1x96xf32> to vector<16x96xf32>
    %30 = arith.addf %27, %29 : vector<16x96xf32>
    %c0_15 = arith.constant 0 : index
    %c0_16 = arith.constant 0 : index
    %31 = vector.load %arg1[%c0_15, %c0_16] : memref<2x8xf32, #tpu.memory_space<vmem>>, vector<1x8xf32>
    %32 = vector.extract_strided_slice %30 {offsets = [0, 0], sizes = [8, 16], strides = [1, 1]} : vector<16x96xf32> to vector<8x16xf32>
    %33 = vector.extract_strided_slice %30 {offsets = [0, 32], sizes = [8, 16], strides = [1, 1]} : vector<16x96xf32> to vector<8x16xf32>
    %34 = vector.extract_strided_slice %30 {offsets = [0, 64], sizes = [8, 16], strides = [1, 1]} : vector<16x96xf32> to vector<8x16xf32>
    %cst_17 = arith.constant dense<0.000000e+00> : vector<8x8xf32>
    %35 = tpu.matmul %32, %33, %cst_17 {dimension_numbers = #tpu.dot_dimension_numbers<[1], [1], [0], [0], [0, 0, 1, 0], [], []>} : vector<8x16xf32>, vector<8x16xf32>, vector<8x8xf32> -> vector<8x8xf32>
    %cst_18 = arith.constant 2.500000e-01 : f32
    %36 = vector.broadcast %cst_18 : f32 to vector<8x8xf32>
    %37 = arith.mulf %35, %36 : vector<8x8xf32>
    %38 = vector.broadcast %31 : vector<1x8xf32> to vector<8x8xf32>
    %39 = arith.addf %37, %38 : vector<8x8xf32>
    %cst_19 = arith.constant dense<0xFF800000> : vector<8xf32>
    %40 = vector.multi_reduction <maximumf>, %39, %cst_19 [1] : vector<8x8xf32> to vector<8xf32>
    %41 = vector.shape_cast %40 : vector<8xf32> to vector<8x1xf32>
    %42 = vector.broadcast %41 : vector<8x1xf32> to vector<8x8xf32>
    %43 = arith.subf %39, %42 : vector<8x8xf32>
    %44 = math.exp %43 : vector<8x8xf32>
    %cst_20 = arith.constant dense<0.000000e+00> : vector<8xf32>
    %45 = vector.multi_reduction <add>, %44, %cst_20 [1] : vector<8x8xf32> to vector<8xf32>
    %46 = vector.shape_cast %45 : vector<8xf32> to vector<8x1xf32>
    %47 = tpu.reciprocal %46 {approx = true} : vector<8x1xf32> -> vector<8x1xf32>
    %48 = vector.broadcast %47 : vector<8x1xf32> to vector<8x8xf32>
    %49 = arith.mulf %44, %48 : vector<8x8xf32>
    %cst_21 = arith.constant dense<0.000000e+00> : vector<8x16xf32>
    %50 = tpu.matmul %49, %34, %cst_21 {dimension_numbers = #tpu.dot_dimension_numbers<[1], [0], [0], [1], [0, 0, 1, 1], [], []>} : vector<8x8xf32>, vector<8x16xf32>, vector<8x16xf32> -> vector<8x16xf32>
    %c0_22 = arith.constant 0 : index
    %c0_23 = arith.constant 0 : index
    %51 = vector.load %arg5[%c0_22, %c0_23] : memref<16x32xf32, #tpu.memory_space<vmem>>, vector<8x16xf32>
    tpu.vector_store %arg5[%c0_22, %c0_23], %50 {strides = array<i32>} : memref<16x32xf32, #tpu.memory_space<vmem>>, vector<8x16xf32>,
    %52 = vector.extract_strided_slice %30 {offsets = [0, 16], sizes = [8, 16], strides = [1, 1]} : vector<16x96xf32> to vector<8x16xf32>
    %53 = vector.extract_strided_slice %30 {offsets = [0, 48], sizes = [8, 16], strides = [1, 1]} : vector<16x96xf32> to vector<8x16xf32>
    %54 = vector.extract_strided_slice %30 {offsets = [0, 80], sizes = [8, 16], strides = [1, 1]} : vector<16x96xf32> to vector<8x16xf32>
    %cst_24 = arith.constant dense<0.000000e+00> : vector<8x8xf32>
    %55 = tpu.matmul %52, %53, %cst_24 {dimension_numbers = #tpu.dot_dimension_numbers<[1], [1], [0], [0], [0, 0, 1, 0], [], []>} : vector<8x16xf32>, vector<8x16xf32>, vector<8x8xf32> -> vector<8x8xf32>
    %cst_25 = arith.constant 2.500000e-01 : f32
    %56 = vector.broadcast %cst_25 : f32 to vector<8x8xf32>
    %57 = arith.mulf %55, %56 : vector<8x8xf32>
    %58 = vector.broadcast %31 : vector<1x8xf32> to vector<8x8xf32>
    %59 = arith.addf %57, %58 : vector<8x8xf32>
    %cst_26 = arith.constant dense<0xFF800000> : vector<8xf32>
    %60 = vector.multi_reduction <maximumf>, %59, %cst_26 [1] : vector<8x8xf32> to vector<8xf32>
    %61 = vector.shape_cast %60 : vector<8xf32> to vector<8x1xf32>
    %62 = vector.broadcast %61 : vector<8x1xf32> to vector<8x8xf32>
    %63 = arith.subf %59, %62 : vector<8x8xf32>
    %64 = math.exp %63 : vector<8x8xf32>
    %cst_27 = arith.constant dense<0.000000e+00> : vector<8xf32>
    %65 = vector.multi_reduction <add>, %64, %cst_27 [1] : vector<8x8xf32> to vector<8xf32>
    %66 = vector.shape_cast %65 : vector<8xf32> to vector<8x1xf32>
    %67 = tpu.reciprocal %66 {approx = true} : vector<8x1xf32> -> vector<8x1xf32>
    %68 = vector.broadcast %67 : vector<8x1xf32> to vector<8x8xf32>
    %69 = arith.mulf %64, %68 : vector<8x8xf32>
    %cst_28 = arith.constant dense<0.000000e+00> : vector<8x16xf32>
    %70 = tpu.matmul %69, %54, %cst_28 {dimension_numbers = #tpu.dot_dimension_numbers<[1], [0], [0], [1], [0, 0, 1, 1], [], []>} : vector<8x8xf32>, vector<8x16xf32>, vector<8x16xf32> -> vector<8x16xf32>
    %c0_29 = arith.constant 0 : index
    %c16 = arith.constant 16 : index
    %71 = vector.load %arg5[%c0_29, %c16] : memref<16x32xf32, #tpu.memory_space<vmem>>, vector<8x16xf32>
    tpu.vector_store %arg5[%c0_29, %c16], %70 {strides = array<i32>} : memref<16x32xf32, #tpu.memory_space<vmem>>, vector<8x16xf32>,
    %c1_30 = arith.constant 1 : index
    %c0_31 = arith.constant 0 : index
    %72 = vector.load %arg1[%c1_30, %c0_31] : memref<2x8xf32, #tpu.memory_space<vmem>>, vector<1x8xf32>
    %73 = vector.extract_strided_slice %30 {offsets = [8, 0], sizes = [8, 16], strides = [1, 1]} : vector<16x96xf32> to vector<8x16xf32>
    %74 = vector.extract_strided_slice %30 {offsets = [8, 32], sizes = [8, 16], strides = [1, 1]} : vector<16x96xf32> to vector<8x16xf32>
    %75 = vector.extract_strided_slice %30 {offsets = [8, 64], sizes = [8, 16], strides = [1, 1]} : vector<16x96xf32> to vector<8x16xf32>
    %cst_32 = arith.constant dense<0.000000e+00> : vector<8x8xf32>
    %76 = tpu.matmul %73, %74, %cst_32 {dimension_numbers = #tpu.dot_dimension_numbers<[1], [1], [0], [0], [0, 0, 1, 0], [], []>} : vector<8x16xf32>, vector<8x16xf32>, vector<8x8xf32> -> vector<8x8xf32>
    %cst_33 = arith.constant 2.500000e-01 : f32
    %77 = vector.broadcast %cst_33 : f32 to vector<8x8xf32>
    %78 = arith.mulf %76, %77 : vector<8x8xf32>
    %79 = vector.broadcast %72 : vector<1x8xf32> to vector<8x8xf32>
    %80 = arith.addf %78, %79 : vector<8x8xf32>
    %cst_34 = arith.constant dense<0xFF800000> : vector<8xf32>
    %81 = vector.multi_reduction <maximumf>, %80, %cst_34 [1] : vector<8x8xf32> to vector<8xf32>
    %82 = vector.shape_cast %81 : vector<8xf32> to vector<8x1xf32>
    %83 = vector.broadcast %82 : vector<8x1xf32> to vector<8x8xf32>
    %84 = arith.subf %80, %83 : vector<8x8xf32>
    %85 = math.exp %84 : vector<8x8xf32>
    %cst_35 = arith.constant dense<0.000000e+00> : vector<8xf32>
    %86 = vector.multi_reduction <add>, %85, %cst_35 [1] : vector<8x8xf32> to vector<8xf32>
    %87 = vector.shape_cast %86 : vector<8xf32> to vector<8x1xf32>
    %88 = tpu.reciprocal %87 {approx = true} : vector<8x1xf32> -> vector<8x1xf32>
    %89 = vector.broadcast %88 : vector<8x1xf32> to vector<8x8xf32>
    %90 = arith.mulf %85, %89 : vector<8x8xf32>
    %cst_36 = arith.constant dense<0.000000e+00> : vector<8x16xf32>
    %91 = tpu.matmul %90, %75, %cst_36 {dimension_numbers = #tpu.dot_dimension_numbers<[1], [0], [0], [1], [0, 0, 1, 1], [], []>} : vector<8x8xf32>, vector<8x16xf32>, vector<8x16xf32> -> vector<8x16xf32>
    %c8 = arith.constant 8 : index
    %c0_37 = arith.constant 0 : index
    %92 = vector.load %arg5[%c8, %c0_37] : memref<16x32xf32, #tpu.memory_space<vmem>>, vector<8x16xf32>
    tpu.vector_store %arg5[%c8, %c0_37], %91 {strides = array<i32>} : memref<16x32xf32, #tpu.memory_space<vmem>>, vector<8x16xf32>,
    %93 = vector.extract_strided_slice %30 {offsets = [8, 16], sizes = [8, 16], strides = [1, 1]} : vector<16x96xf32> to vector<8x16xf32>
    %94 = vector.extract_strided_slice %30 {offsets = [8, 48], sizes = [8, 16], strides = [1, 1]} : vector<16x96xf32> to vector<8x16xf32>
    %95 = vector.extract_strided_slice %30 {offsets = [8, 80], sizes = [8, 16], strides = [1, 1]} : vector<16x96xf32> to vector<8x16xf32>
    %cst_38 = arith.constant dense<0.000000e+00> : vector<8x8xf32>
    %96 = tpu.matmul %93, %94, %cst_38 {dimension_numbers = #tpu.dot_dimension_numbers<[1], [1], [0], [0], [0, 0, 1, 0], [], []>} : vector<8x16xf32>, vector<8x16xf32>, vector<8x8xf32> -> vector<8x8xf32>
    %cst_39 = arith.constant 2.500000e-01 : f32
    %97 = vector.broadcast %cst_39 : f32 to vector<8x8xf32>
    %98 = arith.mulf %96, %97 : vector<8x8xf32>
    %99 = vector.broadcast %72 : vector<1x8xf32> to vector<8x8xf32>
    %100 = arith.addf %98, %99 : vector<8x8xf32>
    %cst_40 = arith.constant dense<0xFF800000> : vector<8xf32>
    %101 = vector.multi_reduction <maximumf>, %100, %cst_40 [1] : vector<8x8xf32> to vector<8xf32>
    %102 = vector.shape_cast %101 : vector<8xf32> to vector<8x1xf32>
    %103 = vector.broadcast %102 : vector<8x1xf32> to vector<8x8xf32>
    %104 = arith.subf %100, %103 : vector<8x8xf32>
    %105 = math.exp %104 : vector<8x8xf32>
    %cst_41 = arith.constant dense<0.000000e+00> : vector<8xf32>
    %106 = vector.multi_reduction <add>, %105, %cst_41 [1] : vector<8x8xf32> to vector<8xf32>
    %107 = vector.shape_cast %106 : vector<8xf32> to vector<8x1xf32>
    %108 = tpu.reciprocal %107 {approx = true} : vector<8x1xf32> -> vector<8x1xf32>
    %109 = vector.broadcast %108 : vector<8x1xf32> to vector<8x8xf32>
    %110 = arith.mulf %105, %109 : vector<8x8xf32>
    %cst_42 = arith.constant dense<0.000000e+00> : vector<8x16xf32>
    %111 = tpu.matmul %110, %95, %cst_42 {dimension_numbers = #tpu.dot_dimension_numbers<[1], [0], [0], [1], [0, 0, 1, 1], [], []>} : vector<8x8xf32>, vector<8x16xf32>, vector<8x16xf32> -> vector<8x16xf32>
    %c8_43 = arith.constant 8 : index
    %c16_44 = arith.constant 16 : index
    %112 = vector.load %arg5[%c8_43, %c16_44] : memref<16x32xf32, #tpu.memory_space<vmem>>, vector<8x16xf32>
    tpu.vector_store %arg5[%c8_43, %c16_44], %111 {strides = array<i32>} : memref<16x32xf32, #tpu.memory_space<vmem>>, vector<8x16xf32>,
    %c0_45 = arith.constant 0 : index
    %c0_46 = arith.constant 0 : index
    %113 = vector.load %arg5[%c0_45, %c0_46] : memref<16x32xf32, #tpu.memory_space<vmem>>, vector<16x32xf32>
    %cst_47 = arith.constant dense<0.000000e+00> : vector<16x32xf32>
    %114 = tpu.matmul %113, %24, %cst_47 {dimension_numbers = #tpu.dot_dimension_numbers<[1], [0], [0], [1], [0, 0, 1, 1], [], []>} : vector<16x32xf32>, vector<32x32xf32>, vector<16x32xf32> -> vector<16x32xf32>
    %c3 = arith.constant 3 : index
    %c0_48 = arith.constant 0 : index
    %115 = vector.load %arg3[%c3, %c0_48] : memref<20x96xf32, #tpu.memory_space<vmem>>, vector<1x32xf32>
    %116 = vector.broadcast %115 : vector<1x32xf32> to vector<16x32xf32>
    %117 = arith.addf %114, %116 : vector<16x32xf32>
    %118 = arith.addf %117, %22 : vector<16x32xf32>
    %c4 = arith.constant 4 : index
    %c0_49 = arith.constant 0 : index
    %119 = vector.load %arg3[%c4, %c0_49] : memref<20x96xf32, #tpu.memory_space<vmem>>, vector<1x32xf32>
    %c5 = arith.constant 5 : index
    %c0_50 = arith.constant 0 : index
    %120 = vector.load %arg3[%c5, %c0_50] : memref<20x96xf32, #tpu.memory_space<vmem>>, vector<1x32xf32>
    %cst_51 = arith.constant dense<0.000000e+00> : vector<16xf32>
    %121 = vector.multi_reduction <add>, %118, %cst_51 [1] : vector<16x32xf32> to vector<16xf32>
    %122 = vector.shape_cast %121 : vector<16xf32> to vector<16x1xf32>
    %cst_52 = arith.constant 3.200000e+01 : f32
    %123 = vector.broadcast %cst_52 : f32 to vector<16x1xf32>
    %124 = arith.divf %122, %123 : vector<16x1xf32>
    %125 = vector.broadcast %124 : vector<16x1xf32> to vector<16x32xf32>
    %126 = arith.subf %118, %125 : vector<16x32xf32>
    %127 = arith.mulf %126, %126 : vector<16x32xf32>
    %cst_53 = arith.constant dense<0.000000e+00> : vector<16xf32>
    %128 = vector.multi_reduction <add>, %127, %cst_53 [1] : vector<16x32xf32> to vector<16xf32>
    %129 = vector.shape_cast %128 : vector<16xf32> to vector<16x1xf32>
    %cst_54 = arith.constant 3.200000e+01 : f32
    %130 = vector.broadcast %cst_54 : f32 to vector<16x1xf32>
    %131 = arith.divf %129, %130 : vector<16x1xf32>
    %cst_55 = arith.constant 9.99999996E-13 : f32
    %132 = vector.broadcast %cst_55 : f32 to vector<16x1xf32>
    %133 = arith.addf %131, %132 : vector<16x1xf32>
    %134 = math.rsqrt %133 : vector<16x1xf32>
    %135 = vector.broadcast %134 : vector<16x1xf32> to vector<16x32xf32>
    %136 = arith.mulf %126, %135 : vector<16x32xf32>
    %137 = vector.broadcast %119 : vector<1x32xf32> to vector<16x32xf32>
    %138 = arith.mulf %136, %137 : vector<16x32xf32>
    %139 = vector.broadcast %120 : vector<1x32xf32> to vector<16x32xf32>
    %140 = arith.addf %138, %139 : vector<16x32xf32>
    %cst_56 = arith.constant dense<0.000000e+00> : vector<16x64xf32>
    %141 = tpu.matmul %140, %25, %cst_56 {dimension_numbers = #tpu.dot_dimension_numbers<[1], [0], [0], [1], [0, 0, 1, 1], [], []>} : vector<16x32xf32>, vector<32x64xf32>, vector<16x64xf32> -> vector<16x64xf32>
    %c6 = arith.constant 6 : index
    %c0_57 = arith.constant 0 : index
    %142 = vector.load %arg3[%c6, %c0_57] : memref<20x96xf32, #tpu.memory_space<vmem>>, vector<1x64xf32>
    %143 = vector.broadcast %142 : vector<1x64xf32> to vector<16x64xf32>
    %144 = arith.addf %141, %143 : vector<16x64xf32>
    %cst_58 = arith.constant 5.000000e-01 : f32
    %145 = vector.broadcast %cst_58 : f32 to vector<16x64xf32>
    %146 = arith.mulf %145, %144 : vector<16x64xf32>
    %cst_59 = arith.constant 4.471500e-02 : f32
    %147 = vector.broadcast %cst_59 : f32 to vector<16x64xf32>
    %148 = arith.mulf %147, %144 : vector<16x64xf32>
    %149 = arith.mulf %148, %144 : vector<16x64xf32>
    %150 = arith.mulf %149, %144 : vector<16x64xf32>
    %151 = arith.addf %144, %150 : vector<16x64xf32>
    %cst_60 = arith.constant 0.797884583 : f32
    %152 = vector.broadcast %cst_60 : f32 to vector<16x64xf32>
    %153 = arith.mulf %152, %151 : vector<16x64xf32>
    %154 = math.tanh %153 : vector<16x64xf32>
    %cst_61 = arith.constant 1.000000e+00 : f32
    %155 = vector.broadcast %cst_61 : f32 to vector<16x64xf32>
    %156 = arith.addf %155, %154 : vector<16x64xf32>
    %157 = arith.mulf %146, %156 : vector<16x64xf32>
    %cst_62 = arith.constant dense<0.000000e+00> : vector<16x32xf32>
    %158 = tpu.matmul %157, %26, %cst_62 {dimension_numbers = #tpu.dot_dimension_numbers<[1], [0], [0], [1], [0, 0, 1, 1], [], []>} : vector<16x64xf32>, vector<64x32xf32>, vector<16x32xf32> -> vector<16x32xf32>
    %c7 = arith.constant 7 : index
    %c0_63 = arith.constant 0 : index
    %159 = vector.load %arg3[%c7, %c0_63] : memref<20x96xf32, #tpu.memory_space<vmem>>, vector<1x32xf32>
    %160 = vector.broadcast %159 : vector<1x32xf32> to vector<16x32xf32>
    %161 = arith.addf %158, %160 : vector<16x32xf32>
    %162 = arith.addf %161, %140 : vector<16x32xf32>
    %c8_64 = arith.constant 8 : index
    %c0_65 = arith.constant 0 : index
    %163 = vector.load %arg3[%c8_64, %c0_65] : memref<20x96xf32, #tpu.memory_space<vmem>>, vector<1x32xf32>
    %c9 = arith.constant 9 : index
    %c0_66 = arith.constant 0 : index
    %164 = vector.load %arg3[%c9, %c0_66] : memref<20x96xf32, #tpu.memory_space<vmem>>, vector<1x32xf32>
    %cst_67 = arith.constant dense<0.000000e+00> : vector<16xf32>
    %165 = vector.multi_reduction <add>, %162, %cst_67 [1] : vector<16x32xf32> to vector<16xf32>
    %166 = vector.shape_cast %165 : vector<16xf32> to vector<16x1xf32>
    %cst_68 = arith.constant 3.200000e+01 : f32
    %167 = vector.broadcast %cst_68 : f32 to vector<16x1xf32>
    %168 = arith.divf %166, %167 : vector<16x1xf32>
    %169 = vector.broadcast %168 : vector<16x1xf32> to vector<16x32xf32>
    %170 = arith.subf %162, %169 : vector<16x32xf32>
    %171 = arith.mulf %170, %170 : vector<16x32xf32>
    %cst_69 = arith.constant dense<0.000000e+00> : vector<16xf32>
    %172 = vector.multi_reduction <add>, %171, %cst_69 [1] : vector<16x32xf32> to vector<16xf32>
    %173 = vector.shape_cast %172 : vector<16xf32> to vector<16x1xf32>
    %cst_70 = arith.constant 3.200000e+01 : f32
    %174 = vector.broadcast %cst_70 : f32 to vector<16x1xf32>
    %175 = arith.divf %173, %174 : vector<16x1xf32>
    %cst_71 = arith.constant 9.99999996E-13 : f32
    %176 = vector.broadcast %cst_71 : f32 to vector<16x1xf32>
    %177 = arith.addf %175, %176 : vector<16x1xf32>
    %178 = math.rsqrt %177 : vector<16x1xf32>
    %179 = vector.broadcast %178 : vector<16x1xf32> to vector<16x32xf32>
    %180 = arith.mulf %170, %179 : vector<16x32xf32>
    %181 = vector.broadcast %163 : vector<1x32xf32> to vector<16x32xf32>
    %182 = arith.mulf %180, %181 : vector<16x32xf32>
    %183 = vector.broadcast %164 : vector<1x32xf32> to vector<16x32xf32>
    %184 = arith.addf %182, %183 : vector<16x32xf32>
    %c160 = arith.constant 160 : index
    %c0_72 = arith.constant 0 : index
    %185 = vector.load %arg2[%c160, %c0_72] : memref<384x96xf32, #tpu.memory_space<vmem>>, vector<32x96xf32>
    %c192 = arith.constant 192 : index
    %c0_73 = arith.constant 0 : index
    %186 = vector.load %arg2[%c192, %c0_73] : memref<384x96xf32, #tpu.memory_space<vmem>>, vector<32x32xf32>
    %c224 = arith.constant 224 : index
    %c0_74 = arith.constant 0 : index
    %187 = vector.load %arg2[%c224, %c0_74] : memref<384x96xf32, #tpu.memory_space<vmem>>, vector<32x64xf32>
    %c256 = arith.constant 256 : index
    %c0_75 = arith.constant 0 : index
    %188 = vector.load %arg2[%c256, %c0_75] : memref<384x96xf32, #tpu.memory_space<vmem>>, vector<64x32xf32>
    %cst_76 = arith.constant dense<0.000000e+00> : vector<16x96xf32>
    %189 = tpu.matmul %184, %185, %cst_76 {dimension_numbers = #tpu.dot_dimension_numbers<[1], [0], [0], [1], [0, 0, 1, 1], [], []>} : vector<16x32xf32>, vector<32x96xf32>, vector<16x96xf32> -> vector<16x96xf32>
    %c10 = arith.constant 10 : index
    %c0_77 = arith.constant 0 : index
    %190 = vector.load %arg3[%c10, %c0_77] : memref<20x96xf32, #tpu.memory_space<vmem>>, vector<1x96xf32>
    %191 = vector.broadcast %190 : vector<1x96xf32> to vector<16x96xf32>
    %192 = arith.addf %189, %191 : vector<16x96xf32>
    %c0_78 = arith.constant 0 : index
    %c0_79 = arith.constant 0 : index
    %193 = vector.load %arg1[%c0_78, %c0_79] : memref<2x8xf32, #tpu.memory_space<vmem>>, vector<1x8xf32>
    %194 = vector.extract_strided_slice %192 {offsets = [0, 0], sizes = [8, 16], strides = [1, 1]} : vector<16x96xf32> to vector<8x16xf32>
    %195 = vector.extract_strided_slice %192 {offsets = [0, 32], sizes = [8, 16], strides = [1, 1]} : vector<16x96xf32> to vector<8x16xf32>
    %196 = vector.extract_strided_slice %192 {offsets = [0, 64], sizes = [8, 16], strides = [1, 1]} : vector<16x96xf32> to vector<8x16xf32>
    %cst_80 = arith.constant dense<0.000000e+00> : vector<8x8xf32>
    %197 = tpu.matmul %194, %195, %cst_80 {dimension_numbers = #tpu.dot_dimension_numbers<[1], [1], [0], [0], [0, 0, 1, 0], [], []>} : vector<8x16xf32>, vector<8x16xf32>, vector<8x8xf32> -> vector<8x8xf32>
    %cst_81 = arith.constant 2.500000e-01 : f32
    %198 = vector.broadcast %cst_81 : f32 to vector<8x8xf32>
    %199 = arith.mulf %197, %198 : vector<8x8xf32>
    %200 = vector.broadcast %193 : vector<1x8xf32> to vector<8x8xf32>
    %201 = arith.addf %199, %200 : vector<8x8xf32>
    %cst_82 = arith.constant dense<0xFF800000> : vector<8xf32>
    %202 = vector.multi_reduction <maximumf>, %201, %cst_82 [1] : vector<8x8xf32> to vector<8xf32>
    %203 = vector.shape_cast %202 : vector<8xf32> to vector<8x1xf32>
    %204 = vector.broadcast %203 : vector<8x1xf32> to vector<8x8xf32>
    %205 = arith.subf %201, %204 : vector<8x8xf32>
    %206 = math.exp %205 : vector<8x8xf32>
    %cst_83 = arith.constant dense<0.000000e+00> : vector<8xf32>
    %207 = vector.multi_reduction <add>, %206, %cst_83 [1] : vector<8x8xf32> to vector<8xf32>
    %208 = vector.shape_cast %207 : vector<8xf32> to vector<8x1xf32>
    %209 = tpu.reciprocal %208 {approx = true} : vector<8x1xf32> -> vector<8x1xf32>
    %210 = vector.broadcast %209 : vector<8x1xf32> to vector<8x8xf32>
    %211 = arith.mulf %206, %210 : vector<8x8xf32>
    %cst_84 = arith.constant dense<0.000000e+00> : vector<8x16xf32>
    %212 = tpu.matmul %211, %196, %cst_84 {dimension_numbers = #tpu.dot_dimension_numbers<[1], [0], [0], [1], [0, 0, 1, 1], [], []>} : vector<8x8xf32>, vector<8x16xf32>, vector<8x16xf32> -> vector<8x16xf32>
    %c0_85 = arith.constant 0 : index
    %c0_86 = arith.constant 0 : index
    %213 = vector.load %arg5[%c0_85, %c0_86] : memref<16x32xf32, #tpu.memory_space<vmem>>, vector<8x16xf32>
    tpu.vector_store %arg5[%c0_85, %c0_86], %212 {strides = array<i32>} : memref<16x32xf32, #tpu.memory_space<vmem>>, vector<8x16xf32>,
    %214 = vector.extract_strided_slice %192 {offsets = [0, 16], sizes = [8, 16], strides = [1, 1]} : vector<16x96xf32> to vector<8x16xf32>
    %215 = vector.extract_strided_slice %192 {offsets = [0, 48], sizes = [8, 16], strides = [1, 1]} : vector<16x96xf32> to vector<8x16xf32>
    %216 = vector.extract_strided_slice %192 {offsets = [0, 80], sizes = [8, 16], strides = [1, 1]} : vector<16x96xf32> to vector<8x16xf32>
    %cst_87 = arith.constant dense<0.000000e+00> : vector<8x8xf32>
    %217 = tpu.matmul %214, %215, %cst_87 {dimension_numbers = #tpu.dot_dimension_numbers<[1], [1], [0], [0], [0, 0, 1, 0], [], []>} : vector<8x16xf32>, vector<8x16xf32>, vector<8x8xf32> -> vector<8x8xf32>
    %cst_88 = arith.constant 2.500000e-01 : f32
    %218 = vector.broadcast %cst_88 : f32 to vector<8x8xf32>
    %219 = arith.mulf %217, %218 : vector<8x8xf32>
    %220 = vector.broadcast %193 : vector<1x8xf32> to vector<8x8xf32>
    %221 = arith.addf %219, %220 : vector<8x8xf32>
    %cst_89 = arith.constant dense<0xFF800000> : vector<8xf32>
    %222 = vector.multi_reduction <maximumf>, %221, %cst_89 [1] : vector<8x8xf32> to vector<8xf32>
    %223 = vector.shape_cast %222 : vector<8xf32> to vector<8x1xf32>
    %224 = vector.broadcast %223 : vector<8x1xf32> to vector<8x8xf32>
    %225 = arith.subf %221, %224 : vector<8x8xf32>
    %226 = math.exp %225 : vector<8x8xf32>
    %cst_90 = arith.constant dense<0.000000e+00> : vector<8xf32>
    %227 = vector.multi_reduction <add>, %226, %cst_90 [1] : vector<8x8xf32> to vector<8xf32>
    %228 = vector.shape_cast %227 : vector<8xf32> to vector<8x1xf32>
    %229 = tpu.reciprocal %228 {approx = true} : vector<8x1xf32> -> vector<8x1xf32>
    %230 = vector.broadcast %229 : vector<8x1xf32> to vector<8x8xf32>
    %231 = arith.mulf %226, %230 : vector<8x8xf32>
    %cst_91 = arith.constant dense<0.000000e+00> : vector<8x16xf32>
    %232 = tpu.matmul %231, %216, %cst_91 {dimension_numbers = #tpu.dot_dimension_numbers<[1], [0], [0], [1], [0, 0, 1, 1], [], []>} : vector<8x8xf32>, vector<8x16xf32>, vector<8x16xf32> -> vector<8x16xf32>
    %c0_92 = arith.constant 0 : index
    %c16_93 = arith.constant 16 : index
    %233 = vector.load %arg5[%c0_92, %c16_93] : memref<16x32xf32, #tpu.memory_space<vmem>>, vector<8x16xf32>
    tpu.vector_store %arg5[%c0_92, %c16_93], %232 {strides = array<i32>} : memref<16x32xf32, #tpu.memory_space<vmem>>, vector<8x16xf32>,
    %c1_94 = arith.constant 1 : index
    %c0_95 = arith.constant 0 : index
    %234 = vector.load %arg1[%c1_94, %c0_95] : memref<2x8xf32, #tpu.memory_space<vmem>>, vector<1x8xf32>
    %235 = vector.extract_strided_slice %192 {offsets = [8, 0], sizes = [8, 16], strides = [1, 1]} : vector<16x96xf32> to vector<8x16xf32>
    %236 = vector.extract_strided_slice %192 {offsets = [8, 32], sizes = [8, 16], strides = [1, 1]} : vector<16x96xf32> to vector<8x16xf32>
    %237 = vector.extract_strided_slice %192 {offsets = [8, 64], sizes = [8, 16], strides = [1, 1]} : vector<16x96xf32> to vector<8x16xf32>
    %cst_96 = arith.constant dense<0.000000e+00> : vector<8x8xf32>
    %238 = tpu.matmul %235, %236, %cst_96 {dimension_numbers = #tpu.dot_dimension_numbers<[1], [1], [0], [0], [0, 0, 1, 0], [], []>} : vector<8x16xf32>, vector<8x16xf32>, vector<8x8xf32> -> vector<8x8xf32>
    %cst_97 = arith.constant 2.500000e-01 : f32
    %239 = vector.broadcast %cst_97 : f32 to vector<8x8xf32>
    %240 = arith.mulf %238, %239 : vector<8x8xf32>
    %241 = vector.broadcast %234 : vector<1x8xf32> to vector<8x8xf32>
    %242 = arith.addf %240, %241 : vector<8x8xf32>
    %cst_98 = arith.constant dense<0xFF800000> : vector<8xf32>
    %243 = vector.multi_reduction <maximumf>, %242, %cst_98 [1] : vector<8x8xf32> to vector<8xf32>
    %244 = vector.shape_cast %243 : vector<8xf32> to vector<8x1xf32>
    %245 = vector.broadcast %244 : vector<8x1xf32> to vector<8x8xf32>
    %246 = arith.subf %242, %245 : vector<8x8xf32>
    %247 = math.exp %246 : vector<8x8xf32>
    %cst_99 = arith.constant dense<0.000000e+00> : vector<8xf32>
    %248 = vector.multi_reduction <add>, %247, %cst_99 [1] : vector<8x8xf32> to vector<8xf32>
    %249 = vector.shape_cast %248 : vector<8xf32> to vector<8x1xf32>
    %250 = tpu.reciprocal %249 {approx = true} : vector<8x1xf32> -> vector<8x1xf32>
    %251 = vector.broadcast %250 : vector<8x1xf32> to vector<8x8xf32>
    %252 = arith.mulf %247, %251 : vector<8x8xf32>
    %cst_100 = arith.constant dense<0.000000e+00> : vector<8x16xf32>
    %253 = tpu.matmul %252, %237, %cst_100 {dimension_numbers = #tpu.dot_dimension_numbers<[1], [0], [0], [1], [0, 0, 1, 1], [], []>} : vector<8x8xf32>, vector<8x16xf32>, vector<8x16xf32> -> vector<8x16xf32>
    %c8_101 = arith.constant 8 : index
    %c0_102 = arith.constant 0 : index
    %254 = vector.load %arg5[%c8_101, %c0_102] : memref<16x32xf32, #tpu.memory_space<vmem>>, vector<8x16xf32>
    tpu.vector_store %arg5[%c8_101, %c0_102], %253 {strides = array<i32>} : memref<16x32xf32, #tpu.memory_space<vmem>>, vector<8x16xf32>,
    %255 = vector.extract_strided_slice %192 {offsets = [8, 16], sizes = [8, 16], strides = [1, 1]} : vector<16x96xf32> to vector<8x16xf32>
    %256 = vector.extract_strided_slice %192 {offsets = [8, 48], sizes = [8, 16], strides = [1, 1]} : vector<16x96xf32> to vector<8x16xf32>
    %257 = vector.extract_strided_slice %192 {offsets = [8, 80], sizes = [8, 16], strides = [1, 1]} : vector<16x96xf32> to vector<8x16xf32>
    %cst_103 = arith.constant dense<0.000000e+00> : vector<8x8xf32>
    %258 = tpu.matmul %255, %256, %cst_103 {dimension_numbers = #tpu.dot_dimension_numbers<[1], [1], [0], [0], [0, 0, 1, 0], [], []>} : vector<8x16xf32>, vector<8x16xf32>, vector<8x8xf32> -> vector<8x8xf32>
    %cst_104 = arith.constant 2.500000e-01 : f32
    %259 = vector.broadcast %cst_104 : f32 to vector<8x8xf32>
    %260 = arith.mulf %258, %259 : vector<8x8xf32>
    %261 = vector.broadcast %234 : vector<1x8xf32> to vector<8x8xf32>
    %262 = arith.addf %260, %261 : vector<8x8xf32>
    %cst_105 = arith.constant dense<0xFF800000> : vector<8xf32>
    %263 = vector.multi_reduction <maximumf>, %262, %cst_105 [1] : vector<8x8xf32> to vector<8xf32>
    %264 = vector.shape_cast %263 : vector<8xf32> to vector<8x1xf32>
    %265 = vector.broadcast %264 : vector<8x1xf32> to vector<8x8xf32>
    %266 = arith.subf %262, %265 : vector<8x8xf32>
    %267 = math.exp %266 : vector<8x8xf32>
    %cst_106 = arith.constant dense<0.000000e+00> : vector<8xf32>
    %268 = vector.multi_reduction <add>, %267, %cst_106 [1] : vector<8x8xf32> to vector<8xf32>
    %269 = vector.shape_cast %268 : vector<8xf32> to vector<8x1xf32>
    %270 = tpu.reciprocal %269 {approx = true} : vector<8x1xf32> -> vector<8x1xf32>
    %271 = vector.broadcast %270 : vector<8x1xf32> to vector<8x8xf32>
    %272 = arith.mulf %267, %271 : vector<8x8xf32>
    %cst_107 = arith.constant dense<0.000000e+00> : vector<8x16xf32>
    %273 = tpu.matmul %272, %257, %cst_107 {dimension_numbers = #tpu.dot_dimension_numbers<[1], [0], [0], [1], [0, 0, 1, 1], [], []>} : vector<8x8xf32>, vector<8x16xf32>, vector<8x16xf32> -> vector<8x16xf32>
    %c8_108 = arith.constant 8 : index
    %c16_109 = arith.constant 16 : index
    %274 = vector.load %arg5[%c8_108, %c16_109] : memref<16x32xf32, #tpu.memory_space<vmem>>, vector<8x16xf32>
    tpu.vector_store %arg5[%c8_108, %c16_109], %273 {strides = array<i32>} : memref<16x32xf32, #tpu.memory_space<vmem>>, vector<8x16xf32>,
    %c0_110 = arith.constant 0 : index
    %c0_111 = arith.constant 0 : index
    %275 = vector.load %arg5[%c0_110, %c0_111] : memref<16x32xf32, #tpu.memory_space<vmem>>, vector<16x32xf32>
    %cst_112 = arith.constant dense<0.000000e+00> : vector<16x32xf32>
    %276 = tpu.matmul %275, %186, %cst_112 {dimension_numbers = #tpu.dot_dimension_numbers<[1], [0], [0], [1], [0, 0, 1, 1], [], []>} : vector<16x32xf32>, vector<32x32xf32>, vector<16x32xf32> -> vector<16x32xf32>
    %c11 = arith.constant 11 : index
    %c0_113 = arith.constant 0 : index
    %277 = vector.load %arg3[%c11, %c0_113] : memref<20x96xf32, #tpu.memory_space<vmem>>, vector<1x32xf32>
    %278 = vector.broadcast %277 : vector<1x32xf32> to vector<16x32xf32>
    %279 = arith.addf %276, %278 : vector<16x32xf32>
    %280 = arith.addf %279, %184 : vector<16x32xf32>
    %c12 = arith.constant 12 : index
    %c0_114 = arith.constant 0 : index
    %281 = vector.load %arg3[%c12, %c0_114] : memref<20x96xf32, #tpu.memory_space<vmem>>, vector<1x32xf32>
    %c13 = arith.constant 13 : index
    %c0_115 = arith.constant 0 : index
    %282 = vector.load %arg3[%c13, %c0_115] : memref<20x96xf32, #tpu.memory_space<vmem>>, vector<1x32xf32>
    %cst_116 = arith.constant dense<0.000000e+00> : vector<16xf32>
    %283 = vector.multi_reduction <add>, %280, %cst_116 [1] : vector<16x32xf32> to vector<16xf32>
    %284 = vector.shape_cast %283 : vector<16xf32> to vector<16x1xf32>
    %cst_117 = arith.constant 3.200000e+01 : f32
    %285 = vector.broadcast %cst_117 : f32 to vector<16x1xf32>
    %286 = arith.divf %284, %285 : vector<16x1xf32>
    %287 = vector.broadcast %286 : vector<16x1xf32> to vector<16x32xf32>
    %288 = arith.subf %280, %287 : vector<16x32xf32>
    %289 = arith.mulf %288, %288 : vector<16x32xf32>
    %cst_118 = arith.constant dense<0.000000e+00> : vector<16xf32>
    %290 = vector.multi_reduction <add>, %289, %cst_118 [1] : vector<16x32xf32> to vector<16xf32>
    %291 = vector.shape_cast %290 : vector<16xf32> to vector<16x1xf32>
    %cst_119 = arith.constant 3.200000e+01 : f32
    %292 = vector.broadcast %cst_119 : f32 to vector<16x1xf32>
    %293 = arith.divf %291, %292 : vector<16x1xf32>
    %cst_120 = arith.constant 9.99999996E-13 : f32
    %294 = vector.broadcast %cst_120 : f32 to vector<16x1xf32>
    %295 = arith.addf %293, %294 : vector<16x1xf32>
    %296 = math.rsqrt %295 : vector<16x1xf32>
    %297 = vector.broadcast %296 : vector<16x1xf32> to vector<16x32xf32>
    %298 = arith.mulf %288, %297 : vector<16x32xf32>
    %299 = vector.broadcast %281 : vector<1x32xf32> to vector<16x32xf32>
    %300 = arith.mulf %298, %299 : vector<16x32xf32>
    %301 = vector.broadcast %282 : vector<1x32xf32> to vector<16x32xf32>
    %302 = arith.addf %300, %301 : vector<16x32xf32>
    %cst_121 = arith.constant dense<0.000000e+00> : vector<16x64xf32>
    %303 = tpu.matmul %302, %187, %cst_121 {dimension_numbers = #tpu.dot_dimension_numbers<[1], [0], [0], [1], [0, 0, 1, 1], [], []>} : vector<16x32xf32>, vector<32x64xf32>, vector<16x64xf32> -> vector<16x64xf32>
    %c14 = arith.constant 14 : index
    %c0_122 = arith.constant 0 : index
    %304 = vector.load %arg3[%c14, %c0_122] : memref<20x96xf32, #tpu.memory_space<vmem>>, vector<1x64xf32>
    %305 = vector.broadcast %304 : vector<1x64xf32> to vector<16x64xf32>
    %306 = arith.addf %303, %305 : vector<16x64xf32>
    %cst_123 = arith.constant 5.000000e-01 : f32
    %307 = vector.broadcast %cst_123 : f32 to vector<16x64xf32>
    %308 = arith.mulf %307, %306 : vector<16x64xf32>
    %cst_124 = arith.constant 4.471500e-02 : f32
    %309 = vector.broadcast %cst_124 : f32 to vector<16x64xf32>
    %310 = arith.mulf %309, %306 : vector<16x64xf32>
    %311 = arith.mulf %310, %306 : vector<16x64xf32>
    %312 = arith.mulf %311, %306 : vector<16x64xf32>
    %313 = arith.addf %306, %312 : vector<16x64xf32>
    %cst_125 = arith.constant 0.797884583 : f32
    %314 = vector.broadcast %cst_125 : f32 to vector<16x64xf32>
    %315 = arith.mulf %314, %313 : vector<16x64xf32>
    %316 = math.tanh %315 : vector<16x64xf32>
    %cst_126 = arith.constant 1.000000e+00 : f32
    %317 = vector.broadcast %cst_126 : f32 to vector<16x64xf32>
    %318 = arith.addf %317, %316 : vector<16x64xf32>
    %319 = arith.mulf %308, %318 : vector<16x64xf32>
    %cst_127 = arith.constant dense<0.000000e+00> : vector<16x32xf32>
    %320 = tpu.matmul %319, %188, %cst_127 {dimension_numbers = #tpu.dot_dimension_numbers<[1], [0], [0], [1], [0, 0, 1, 1], [], []>} : vector<16x64xf32>, vector<64x32xf32>, vector<16x32xf32> -> vector<16x32xf32>
    %c15 = arith.constant 15 : index
    %c0_128 = arith.constant 0 : index
    %321 = vector.load %arg3[%c15, %c0_128] : memref<20x96xf32, #tpu.memory_space<vmem>>, vector<1x32xf32>
    %322 = vector.broadcast %321 : vector<1x32xf32> to vector<16x32xf32>
    %323 = arith.addf %320, %322 : vector<16x32xf32>
    %324 = arith.addf %323, %302 : vector<16x32xf32>
    %c16_129 = arith.constant 16 : index
    %c0_130 = arith.constant 0 : index
    %325 = vector.load %arg3[%c16_129, %c0_130] : memref<20x96xf32, #tpu.memory_space<vmem>>, vector<1x32xf32>
    %c17 = arith.constant 17 : index
    %c0_131 = arith.constant 0 : index
    %326 = vector.load %arg3[%c17, %c0_131] : memref<20x96xf32, #tpu.memory_space<vmem>>, vector<1x32xf32>
    %cst_132 = arith.constant dense<0.000000e+00> : vector<16xf32>
    %327 = vector.multi_reduction <add>, %324, %cst_132 [1] : vector<16x32xf32> to vector<16xf32>
    %328 = vector.shape_cast %327 : vector<16xf32> to vector<16x1xf32>
    %cst_133 = arith.constant 3.200000e+01 : f32
    %329 = vector.broadcast %cst_133 : f32 to vector<16x1xf32>
    %330 = arith.divf %328, %329 : vector<16x1xf32>
    %331 = vector.broadcast %330 : vector<16x1xf32> to vector<16x32xf32>
    %332 = arith.subf %324, %331 : vector<16x32xf32>
    %333 = arith.mulf %332, %332 : vector<16x32xf32>
    %cst_134 = arith.constant dense<0.000000e+00> : vector<16xf32>
    %334 = vector.multi_reduction <add>, %333, %cst_134 [1] : vector<16x32xf32> to vector<16xf32>
    %335 = vector.shape_cast %334 : vector<16xf32> to vector<16x1xf32>
    %cst_135 = arith.constant 3.200000e+01 : f32
    %336 = vector.broadcast %cst_135 : f32 to vector<16x1xf32>
    %337 = arith.divf %335, %336 : vector<16x1xf32>
    %cst_136 = arith.constant 9.99999996E-13 : f32
    %338 = vector.broadcast %cst_136 : f32 to vector<16x1xf32>
    %339 = arith.addf %337, %338 : vector<16x1xf32>
    %340 = math.rsqrt %339 : vector<16x1xf32>
    %341 = vector.broadcast %340 : vector<16x1xf32> to vector<16x32xf32>
    %342 = arith.mulf %332, %341 : vector<16x32xf32>
    %343 = vector.broadcast %325 : vector<1x32xf32> to vector<16x32xf32>
    %344 = arith.mulf %342, %343 : vector<16x32xf32>
    %345 = vector.broadcast %326 : vector<1x32xf32> to vector<16x32xf32>
    %346 = arith.addf %344, %345 : vector<16x32xf32>
    %347 = vector.extract_strided_slice %346 {offsets = [0, 0], sizes = [1, 32], strides = [1, 1]} : vector<16x32xf32> to vector<1x32xf32>
    %348 = vector.extract_strided_slice %346 {offsets = [8, 0], sizes = [1, 32], strides = [1, 1]} : vector<16x32xf32> to vector<1x32xf32>
    %349 = tpu.concatenate %347, %348 in 0 : vector<1x32xf32>, vector<1x32xf32> -> vector<2x32xf32>
    %c320 = arith.constant 320 : index
    %c0_137 = arith.constant 0 : index
    %350 = vector.load %arg2[%c320, %c0_137] : memref<384x96xf32, #tpu.memory_space<vmem>>, vector<32x32xf32>
    %cst_138 = arith.constant dense<0.000000e+00> : vector<2x32xf32>
    %351 = tpu.matmul %349, %350, %cst_138 {dimension_numbers = #tpu.dot_dimension_numbers<[1], [0], [0], [1], [0, 0, 1, 1], [], []>} : vector<2x32xf32>, vector<32x32xf32>, vector<2x32xf32> -> vector<2x32xf32>
    %c18 = arith.constant 18 : index
    %c0_139 = arith.constant 0 : index
    %352 = vector.load %arg3[%c18, %c0_139] : memref<20x96xf32, #tpu.memory_space<vmem>>, vector<1x32xf32>
    %353 = vector.broadcast %352 : vector<1x32xf32> to vector<2x32xf32>
    %354 = arith.addf %351, %353 : vector<2x32xf32>
    %355 = math.tanh %354 : vector<2x32xf32>
    %c352 = arith.constant 352 : index
    %c0_140 = arith.constant 0 : index
    %356 = vector.load %arg2[%c352, %c0_140] : memref<384x96xf32, #tpu.memory_space<vmem>>, vector<32x3xf32>
    %cst_141 = arith.constant dense<0.000000e+00> : vector<2x3xf32>
    %357 = tpu.matmul %355, %356, %cst_141 {dimension_numbers = #tpu.dot_dimension_numbers<[1], [0], [0], [1], [0, 0, 1, 1], [], []>} : vector<2x32xf32>, vector<32x3xf32>, vector<2x3xf32> -> vector<2x3xf32>
    %c19 = arith.constant 19 : index
    %c0_142 = arith.constant 0 : index
    %358 = vector.load %arg3[%c19, %c0_142] : memref<20x96xf32, #tpu.memory_space<vmem>>, vector<1x3xf32>
    %359 = vector.broadcast %358 : vector<1x3xf32> to vector<2x3xf32>
    %360 = arith.addf %357, %359 : vector<2x3xf32>
    %c0_143 = arith.constant 0 : index
    %c0_144 = arith.constant 0 : index
    %361 = vector.load %arg4[%c0_143, %c0_144] : memref<2x3xf32, #tpu.memory_space<vmem>>, vector<2x3xf32>
    tpu.vector_store %arg4[%c0_143, %c0_144], %360 {strides = array<i32>} : memref<2x3xf32, #tpu.memory_space<vmem>>, vector<2x3xf32>,
    return
  }
}

</mosaic_0001>

<llo_original>
// kernel: sentiment_classifier_forward.1
$region0: #{sentiment_classifier_forward.1}
  #allocation0 [shape = 'u32[]', space=smem, size = 0x4, offset = 0x4, fixed_abs, tag = 'smem constant byte address 0x4 - core index']
  #allocation1 [shape = 'u32[144,128]{1,0:T(1,128)}', space=vmem, size = 0x12000, scoped, tag = 'internal scratch']
  #allocation2 [shape = 'f32[16,32]{1,0:T(8,128)}', space=vmem, size = 0x2000, scoped, tag = 'scratch operand']
  %s0 = inlined_call_operand.vmem [shape: f32[16,32], index: 0, kind: input, shape index: {}]
  %s1 = inlined_call_operand.vmem [shape: f32[2,8], index: 1, kind: input, shape index: {}]
  %s2 = inlined_call_operand.vmem [shape: f32[384,96], index: 2, kind: input, shape index: {}]
  %s3 = inlined_call_operand.vmem [shape: f32[20,96], index: 3, kind: input, shape index: {}]
  %s4 = inlined_call_operand.hbm [shape: f32[2,3], index: 4, kind: output, shape index: {}]
  %s5 = sld [smem:[#allocation0]]
  $region26: #{sentiment_classifier_forward.1} parent=0
    _
  %s7 = ssub.s32 1, %s5
  %s8 = scalar_select 0, %s7, %s5
  $region1: #{sentiment_classifier_forward.1} parent=0
    #allocation3 [shape = 'u8[1024]{0}', space=vmem, size = 0x400, scoped, tag = 'output window, operand 0, single buffered']
    #allocation4 [shape = 's32[1]{0}', space=sflag, size = 0x4, scoped, tag = 'scoped memory for sentiment_classifier_forward.1']
    %9 = vsyncpa [#allocation4], 0
    // Predicated region
    $region2: #{sentiment_classifier_forward.1} parent=1 // pred_check
      _
    $region3: #{sentiment_classifier_forward.1} parent=1 // pred_check_branch
      %11 = sbr.rel (0) target = $region5
    $region4: #{sentiment_classifier_forward.1} parent=1 // pred_region
      _
    $region5: #{sentiment_classifier_forward.1} parent=1 // pred_fallthru
      _
    // Predicated region
    $region6: #{sentiment_classifier_forward.1} parent=1 // pred_check
      _
    $region7: #{sentiment_classifier_forward.1} parent=1 // pred_check_branch
      %13 = sbr.rel (0) target = $region9
    $region8: #{sentiment_classifier_forward.1} parent=1 // pred_region
      _
    $region9: #{sentiment_classifier_forward.1} parent=1 // pred_fallthru
      _
    // Predicated region
    $region10: #{sentiment_classifier_forward.1} parent=1 // pred_check
      _
    $region11: #{sentiment_classifier_forward.1} parent=1 // pred_check_branch
      %15 = sbr.rel (0) target = $region13
    $region12: #{sentiment_classifier_forward.1} parent=1 // pred_region
      _
    $region13: #{sentiment_classifier_forward.1} parent=1 // pred_fallthru
      _
    // Predicated region
    $region14: #{sentiment_classifier_forward.1} parent=1 // pred_check
      _
    $region15: #{sentiment_classifier_forward.1} parent=1 // pred_check_branch
      %17 = sbr.rel (0) target = $region17
    $region16: #{sentiment_classifier_forward.1} parent=1 // pred_region
      _
    $region17: #{sentiment_classifier_forward.1} parent=1 // pred_fallthru
      _
    %v18 = vld [vmem:[%s0] sm:$0xff]
    %v19 = vld [vmem:[%s0 + $0x8] sm:$0xff]
    %v20 = vld [vmem:[%s3] sm:$0x1]
    %v21 = vld [vmem:[%s3 + $0x1] sm:$0x1]
    %vm22 = vcmask 261120
    %v23 = vsel %vm22, %v18, 0.0
    %24 = vadd.xlane.f32.xlu0 %v23
    %v25 = vpop.xlane.xlu0 %24
    %v26 = vsel %vm22, %v19, 0.0
    %27 = vadd.xlane.f32.xlu0 %v26
    %v28 = vpop.xlane.xlu0 %27
    %v29 = vrcp.pop 32.0
    %v30 = vmul.f32 %v25, %v29
    %v31 = vmul.f32 %v28, %v29
    %v32 = vsub.f32 %v18, %v30
    %v33 = vsub.f32 %v19, %v31
    %v34 = vmul.f32 %v32, %v32
    %v35 = vmul.f32 %v33, %v33
    %v36 = vsel %vm22, %v34, 0.0
    %37 = vadd.xlane.f32.xlu0 %v36
    %v38 = vpop.xlane.xlu0 %37
    %v39 = vsel %vm22, %v35, 0.0
    %40 = vadd.xlane.f32.xlu0 %v39
    %v41 = vpop.xlane.xlu0 %40
    %v42 = vmul.f32 %v38, %v29
    %v43 = vmul.f32 %v41, %v29
    %v44 = vadd.f32 %v42, 1e-12
    %v45 = vadd.f32 %v43, 1e-12
    %v46 = vrsqrt.pop %v44
    %v47 = vrsqrt.pop %v45
    %v48 = vmul.f32 %v32, %v46
    %v49 = vmul.f32 %v33, %v47
    %v50 = vlaneseq
    %v51 = vshrl.u32 %v50, 7
    %v52 = vsub.s32 0, %v51
    %v53 = vrot.slane %v20, %v52
    %v54 = vmul.f32 %v48, %v53
    %v55 = vmul.f32 %v49, %v53
    %v56 = vlaneseq
    %v57 = vshrl.u32 %v56, 7
    %v58 = vsub.s32 0, %v57
    %v59 = vrot.slane %v21, %v58
    %v60 = vadd.f32 %v54, %v59
    %v61 = vadd.f32 %v55, %v59
    %v62 = vld [vmem:[%s2] sm:$0xff]
    %v63 = vld [vmem:[%s2 + $0x8] sm:$0xff]
    %v64 = vld [vmem:[%s2 + $0x10] sm:$0xff]
    %v65 = vld [vmem:[%s2 + $0x18] sm:$0xff]
    %v66 = vld [vmem:[%s2 + $0x20] sm:$0xff]
    %v67 = vld [vmem:[%s2 + $0x28] sm:$0xff]
    %v68 = vld [vmem:[%s2 + $0x30] sm:$0xff]
    %v69 = vld [vmem:[%s2 + $0x38] sm:$0xff]
    %v70 = vld [vmem:[%s2 + $0x40] sm:$0xff]
    %v71 = vld [vmem:[%s2 + $0x48] sm:$0xff]
    %v72 = vld [vmem:[%s2 + $0x50] sm:$0xff]
    %v73 = vld [vmem:[%s2 + $0x58] sm:$0xff]
    %v74 = vld [vmem:[%s2 + $0x60] sm:$0xff]
    %v75 = vld [vmem:[%s2 + $0x68] sm:$0xff]
    %v76 = vld [vmem:[%s2 + $0x70] sm:$0xff]
    %v77 = vld [vmem:[%s2 + $0x78] sm:$0xff]
    %v78 = vld [vmem:[%s2 + $0x80] sm:$0xff]
    %v79 = vld [vmem:[%s2 + $0x88] sm:$0xff]
    %v80 = vld [vmem:[%s2 + $0x90] sm:$0xff]
    %v81 = vld [vmem:[%s2 + $0x98] sm:$0xff]
    %v82 = vld [vmem:[%s3 + $0x2] sm:$0x1]
    %v83 = vlaneseq
    %v84 = vshrl.u32 %v83, 7
    %v85 = vsub.s32 0, %v84
    %v86 = vrot.slane %v82, %v85
    %v88 = vsel %vm22, %v60, 0
    %v91 = vsel %vm22, %v61, 0
    %93 = vmatprep.subr.mxu0 0.0
    %94 = vmatpush1.msra.mxu0 0.0
    %95 = vmatprep.subr.mxu0 0.0
    %96 = vmatpush1.msra.mxu0 0.0
    %97 = vmatprep.subr.mxu0 0.0
    %98 = vmatpush1.msra.mxu0 0.0
    %99 = vmatprep.subr.mxu0 0.0
    %100 = vmatpush1.msra.mxu0 0.0
    %101 = vmatprep.subr.mxu0 0.0
    %102 = vmatpush1.msra.mxu0 0.0
    %103 = vmatprep.subr.mxu0 0.0
    %104 = vmatpush1.msra.mxu0 0.0
    %105 = vmatprep.subr.mxu0 0.0
    %106 = vmatpush1.msra.mxu0 0.0
    %107 = vmatprep.subr.mxu0 0.0
    %108 = vmatpush1.msra.mxu0 0.0
    %109 = vmatprep.subr.mxu0 0.0
    %110 = vmatpush1.msra.mxu0 0.0
    %111 = vmatprep.subr.mxu0 0.0
    %112 = vmatpush1.msra.mxu0 0.0
    %113 = vmatprep.subr.mxu0 0.0
    %114 = vmatpush1.msra.mxu0 0.0
    %115 = vmatprep.subr.mxu0 0.0
    %116 = vmatpush1.msra.mxu0 0.0
    %117 = vmatprep.subr.mxu0 0.0
    %118 = vmatpush1.msra.mxu0 %v65
    %119 = vmatprep.subr.mxu0 0.0
    %120 = vmatpush1.msra.mxu0 %v64
    %121 = vmatprep.subr.mxu0 0.0
    %122 = vmatpush1.msra.mxu0 %v63
    %123 = vmatprep.subr.mxu0 0.0
    %124 = vmatpush1.msra.mxu0 %v62
    %125 = vmatprep.subr.mxu0 0.0
    %126 = vmatpush2.msra.mxu0 0.0
    %127 = vmatprep.subr.mxu0 0.0
    %128 = vmatpush2.msra.mxu0 0.0
    %129 = vmatprep.subr.mxu0 0.0
    %130 = vmatpush2.msra.mxu0 0.0
    %131 = vmatprep.subr.mxu0 0.0
    %132 = vmatpush2.msra.mxu0 0.0
    %133 = vmatprep.subr.mxu0 0.0
    %134 = vmatpush2.msra.mxu0 0.0
    %135 = vmatprep.subr.mxu0 0.0
    %136 = vmatpush2.msra.mxu0 0.0
    %137 = vmatprep.subr.mxu0 0.0
    %138 = vmatpush2.msra.mxu0 0.0
    %139 = vmatprep.subr.mxu0 0.0
    %140 = vmatpush2.msra.mxu0 0.0
    %141 = vmatprep.subr.mxu0 0.0
    %142 = vmatpush2.msra.mxu0 0.0
    %143 = vmatprep.subr.mxu0 0.0
    %144 = vmatpush2.msra.mxu0 0.0
    %145 = vmatprep.subr.mxu0 0.0
    %146 = vmatpush2.msra.mxu0 0.0
    %147 = vmatprep.subr.mxu0 0.0
    %148 = vmatpush2.msra.mxu0 0.0
    %149 = vmatprep.subr.mxu0 0.0
    %150 = vmatpush2.msra.mxu0 0.0
    %151 = vmatprep.subr.mxu0 0.0
    %152 = vmatpush2.msra.mxu0 0.0
    %153 = vmatprep.subr.mxu0 0.0
    %154 = vmatpush2.msra.mxu0 0.0
    %155 = vmatprep.subr.mxu0 0.0
    %156 = vmatpush2.msra.mxu0 0.0
    %157 = vmatprep.mubr.f32.mxu0 0.0
    %158 = vmatmul.mubr.f32.gmra.mxu0 %v88
    %v159 = vpop.f32.mrf.mxu0
    %v160 = vadd.f32 %v86, %v159
    %v161 = vpop.f32.mrf.mxu0
    %162 = vmatprep.mubr.f32.mxu0 0.0
    %163 = vmatmul.mubr.f32.gmra.mxu0 %v91
    %v164 = vpop.f32.mrf.mxu0
    %v165 = vadd.f32 %v86, %v164
    %v166 = vpop.f32.mrf.mxu0
    %167 = vdwg.mxu0
    %v168 = vld [vmem:[%s1] sm:$0x1]
    %170 = vrot.lane.b32.xlu0 %v160, 96
    %v171 = vpop.permute.xlu0 %170
    %vm172 = vcmask 130048
    %v173 = vsel %vm172, %v160, 0
    %v175 = vsel %vm172, %v171, 0
    %177 = vmatprep.subr.mxu0 0.0
    %178 = vmatpush1.xpose.msra.mxu0 0.0
    %179 = vmatprep.subr.mxu0 0.0
    %180 = vmatpush1.xpose.msra.mxu0 0.0
    %181 = vmatprep.subr.mxu0 0.0
    %182 = vmatpush1.xpose.msra.mxu0 0.0
    %183 = vmatprep.subr.mxu0 0.0
    %184 = vmatpush1.xpose.msra.mxu0 0.0
    %185 = vmatprep.subr.mxu0 0.0
    %186 = vmatpush1.xpose.msra.mxu0 0.0
    %187 = vmatprep.subr.mxu0 0.0
    %188 = vmatpush1.xpose.msra.mxu0 0.0
    %189 = vmatprep.subr.mxu0 0.0
    %190 = vmatpush1.xpose.msra.mxu0 0.0
    %191 = vmatprep.subr.mxu0 0.0
    %192 = vmatpush1.xpose.msra.mxu0 0.0
    %193 = vmatprep.subr.mxu0 0.0
    %194 = vmatpush1.xpose.msra.mxu0 0.0
    %195 = vmatprep.subr.mxu0 0.0
    %196 = vmatpush1.xpose.msra.mxu0 0.0
    %197 = vmatprep.subr.mxu0 0.0
    %198 = vmatpush1.xpose.msra.mxu0 0.0
    %199 = vmatprep.subr.mxu0 0.0
    %200 = vmatpush1.xpose.msra.mxu0 0.0
    %201 = vmatprep.subr.mxu0 0.0
    %202 = vmatpush1.xpose.msra.mxu0 0.0
    %203 = vmatprep.subr.mxu0 0.0
    %204 = vmatpush1.xpose.msra.mxu0 0.0
    %205 = vmatprep.subr.mxu0 0.0
    %206 = vmatpush1.xpose.msra.mxu0 0.0
    %207 = vmatprep.subr.mxu0 0.0
    %208 = vmatpush1.xpose.msra.mxu0 %v175
    %209 = vmatprep.subr.mxu0 0.0
    %210 = vmatpush2.xpose.msra.mxu0 0.0
    %211 = vmatprep.subr.mxu0 0.0
    %212 = vmatpush2.xpose.msra.mxu0 0.0
    %213 = vmatprep.subr.mxu0 0.0
    %214 = vmatpush2.xpose.msra.mxu0 0.0
    %215 = vmatprep.subr.mxu0 0.0
    %216 = vmatpush2.xpose.msra.mxu0 0.0
    %217 = vmatprep.subr.mxu0 0.0
    %218 = vmatpush2.xpose.msra.mxu0 0.0
    %219 = vmatprep.subr.mxu0 0.0
    %220 = vmatpush2.xpose.msra.mxu0 0.0
    %221 = vmatprep.subr.mxu0 0.0
    %222 = vmatpush2.xpose.msra.mxu0 0.0
    %223 = vmatprep.subr.mxu0 0.0
    %224 = vmatpush2.xpose.msra.mxu0 0.0
    %225 = vmatprep.subr.mxu0 0.0
    %226 = vmatpush2.xpose.msra.mxu0 0.0
    %227 = vmatprep.subr.mxu0 0.0
    %228 = vmatpush2.xpose.msra.mxu0 0.0
    %229 = vmatprep.subr.mxu0 0.0
    %230 = vmatpush2.xpose.msra.mxu0 0.0
    %231 = vmatprep.subr.mxu0 0.0
    %232 = vmatpush2.xpose.msra.mxu0 0.0
    %233 = vmatprep.subr.mxu0 0.0
    %234 = vmatpush2.xpose.msra.mxu0 0.0
    %235 = vmatprep.subr.mxu0 0.0
    %236 = vmatpush2.xpose.msra.mxu0 0.0
    %237 = vmatprep.subr.mxu0 0.0
    %238 = vmatpush2.xpose.msra.mxu0 0.0
    %239 = vmatprep.subr.mxu0 0.0
    %240 = vmatpush2.xpose.msra.mxu0 0.0
    %241 = vmatprep.mubr.f32.mxu0 0.0
    %242 = vmatmul.mubr.f32.gmra.mxu0 %v173
    %v243 = vpop.f32.mrf.mxu0
    %v244 = vadd.f32 0.0, %v243
    %v245 = vpop.f32.mrf.mxu0
    %246 = vdwg.mxu0
    %v247 = vmul.f32 %v244, 0.25
    %v248 = vlaneseq
    %v249 = vshrl.u32 %v248, 7
    %v250 = vsub.s32 0, %v249
    %v251 = vrot.slane %v168, %v250
    %v252 = vadd.f32 %v247, %v251
    %vm253 = vcmask 64512
    %v254 = vsel %vm253, %v252, -inf
    %255 = vmax.xlane.f32.xlu0 %v254
    %v256 = vpop.xlane.xlu0 %255
    %v257 = vsub.f32 %v252, %v256
    %v258 = vmul.f32 %v257, 1.442695
    %v259 = vpow.pop %v258
    %v260 = vsel %vm253, %v259, 0.0
    %261 = vadd.xlane.f32.xlu0 %v260
    %v262 = vpop.xlane.xlu0 %261
    %v263 = vrcp.pop %v262
    %v264 = vmul.f32 %v259, %v263
    %265 = vrot.lane.b32.xlu0 %v160, 64
    %v266 = vpop.permute.xlu0 %265
    %v269 = vsel %vm253, %v264, 0
    %271 = vmatprep.subr.mxu0 0.0
    %272 = vmatpush1.msra.mxu0 0.0
    %273 = vmatprep.subr.mxu0 0.0
    %274 = vmatpush1.msra.mxu0 0.0
    %275 = vmatprep.subr.mxu0 0.0
    %276 = vmatpush1.msra.mxu0 0.0
    %277 = vmatprep.subr.mxu0 0.0
    %278 = vmatpush1.msra.mxu0 0.0
    %279 = vmatprep.subr.mxu0 0.0
    %280 = vmatpush1.msra.mxu0 0.0
    %281 = vmatprep.subr.mxu0 0.0
    %282 = vmatpush1.msra.mxu0 0.0
    %283 = vmatprep.subr.mxu0 0.0
    %284 = vmatpush1.msra.mxu0 0.0
    %285 = vmatprep.subr.mxu0 0.0
    %286 = vmatpush1.msra.mxu0 0.0
    %287 = vmatprep.subr.mxu0 0.0
    %288 = vmatpush1.msra.mxu0 0.0
    %289 = vmatprep.subr.mxu0 0.0
    %290 = vmatpush1.msra.mxu0 0.0
    %291 = vmatprep.subr.mxu0 0.0
    %292 = vmatpush1.msra.mxu0 0.0
    %293 = vmatprep.subr.mxu0 0.0
    %294 = vmatpush1.msra.mxu0 0.0
    %295 = vmatprep.subr.mxu0 0.0
    %296 = vmatpush1.msra.mxu0 0.0
    %297 = vmatprep.subr.mxu0 0.0
    %298 = vmatpush1.msra.mxu0 0.0
    %299 = vmatprep.subr.mxu0 0.0
    %300 = vmatpush1.msra.mxu0 0.0
    %301 = vmatprep.subr.mxu0 0.0
    %302 = vmatpush1.msra.mxu0 %v266
    %303 = vmatprep.subr.mxu0 0.0
    %304 = vmatpush2.msra.mxu0 0.0
    %305 = vmatprep.subr.mxu0 0.0
    %306 = vmatpush2.msra.mxu0 0.0
    %307 = vmatprep.subr.mxu0 0.0
    %308 = vmatpush2.msra.mxu0 0.0
    %309 = vmatprep.subr.mxu0 0.0
    %310 = vmatpush2.msra.mxu0 0.0
    %311 = vmatprep.subr.mxu0 0.0
    %312 = vmatpush2.msra.mxu0 0.0
    %313 = vmatprep.subr.mxu0 0.0
    %314 = vmatpush2.msra.mxu0 0.0
    %315 = vmatprep.subr.mxu0 0.0
    %316 = vmatpush2.msra.mxu0 0.0
    %317 = vmatprep.subr.mxu0 0.0
    %318 = vmatpush2.msra.mxu0 0.0
    %319 = vmatprep.subr.mxu0 0.0
    %320 = vmatpush2.msra.mxu0 0.0
    %321 = vmatprep.subr.mxu0 0.0
    %322 = vmatpush2.msra.mxu0 0.0
    %323 = vmatprep.subr.mxu0 0.0
    %324 = vmatpush2.msra.mxu0 0.0
    %325 = vmatprep.subr.mxu0 0.0
    %326 = vmatpush2.msra.mxu0 0.0
    %327 = vmatprep.subr.mxu0 0.0
    %328 = vmatpush2.msra.mxu0 0.0
    %329 = vmatprep.subr.mxu0 0.0
    %330 = vmatpush2.msra.mxu0 0.0
    %331 = vmatprep.subr.mxu0 0.0
    %332 = vmatpush2.msra.mxu0 0.0
    %333 = vmatprep.subr.mxu0 0.0
    %334 = vmatpush2.msra.mxu0 0.0
    %335 = vmatprep.mubr.f32.mxu0 0.0
    %336 = vmatmul.mubr.f32.gmra.mxu0 %v269
    %v337 = vpop.f32.mrf.mxu0
    %v338 = vadd.f32 0.0, %v337
    %v339 = vpop.f32.mrf.mxu0
    %340 = vdwg.mxu0
    %341 = vst.msk [vmem:[#allocation2] sm:$0xff] %vm172, %v338
    %342 = vrot.lane.b32.xlu0 %v160, 112
    %v343 = vpop.permute.xlu0 %342
    %344 = vrot.lane.b32.xlu0 %v160, 80
    %v345 = vpop.permute.xlu0 %344
    %v346 = vsel %vm172, %v343, 0
    %v348 = vsel %vm172, %v345, 0
    %350 = vmatprep.subr.mxu0 0.0
    %351 = vmatpush1.xpose.msra.mxu0 0.0
    %352 = vmatprep.subr.mxu0 0.0
    %353 = vmatpush1.xpose.msra.mxu0 0.0
    %354 = vmatprep.subr.mxu0 0.0
    %355 = vmatpush1.xpose.msra.mxu0 0.0
    %356 = vmatprep.subr.mxu0 0.0
    %357 = vmatpush1.xpose.msra.mxu0 0.0
    %358 = vmatprep.subr.mxu0 0.0
    %359 = vmatpush1.xpose.msra.mxu0 0.0
    %360 = vmatprep.subr.mxu0 0.0
    %361 = vmatpush1.xpose.msra.mxu0 0.0
    %362 = vmatprep.subr.mxu0 0.0
    %363 = vmatpush1.xpose.msra.mxu0 0.0
    %364 = vmatprep.subr.mxu0 0.0
    %365 = vmatpush1.xpose.msra.mxu0 0.0
    %366 = vmatprep.subr.mxu0 0.0
    %367 = vmatpush1.xpose.msra.mxu0 0.0
    %368 = vmatprep.subr.mxu0 0.0
    %369 = vmatpush1.xpose.msra.mxu0 0.0
    %370 = vmatprep.subr.mxu0 0.0
    %371 = vmatpush1.xpose.msra.mxu0 0.0
    %372 = vmatprep.subr.mxu0 0.0
    %373 = vmatpush1.xpose.msra.mxu0 0.0
    %374 = vmatprep.subr.mxu0 0.0
    %375 = vmatpush1.xpose.msra.mxu0 0.0
    %376 = vmatprep.subr.mxu0 0.0
    %377 = vmatpush1.xpose.msra.mxu0 0.0
    %378 = vmatprep.subr.mxu0 0.0
    %379 = vmatpush1.xpose.msra.mxu0 0.0
    %380 = vmatprep.subr.mxu0 0.0
    %381 = vmatpush1.xpose.msra.mxu0 %v348
    %382 = vmatprep.subr.mxu0 0.0
    %383 = vmatpush2.xpose.msra.mxu0 0.0
    %384 = vmatprep.subr.mxu0 0.0
    %385 = vmatpush2.xpose.msra.mxu0 0.0
    %386 = vmatprep.subr.mxu0 0.0
    %387 = vmatpush2.xpose.msra.mxu0 0.0
    %388 = vmatprep.subr.mxu0 0.0
    %389 = vmatpush2.xpose.msra.mxu0 0.0
    %390 = vmatprep.subr.mxu0 0.0
    %391 = vmatpush2.xpose.msra.mxu0 0.0
    %392 = vmatprep.subr.mxu0 0.0
    %393 = vmatpush2.xpose.msra.mxu0 0.0
    %394 = vmatprep.subr.mxu0 0.0
    %395 = vmatpush2.xpose.msra.mxu0 0.0
    %396 = vmatprep.subr.mxu0 0.0
    %397 = vmatpush2.xpose.msra.mxu0 0.0
    %398 = vmatprep.subr.mxu0 0.0
    %399 = vmatpush2.xpose.msra.mxu0 0.0
    %400 = vmatprep.subr.mxu0 0.0
    %401 = vmatpush2.xpose.msra.mxu0 0.0
    %402 = vmatprep.subr.mxu0 0.0
    %403 = vmatpush2.xpose.msra.mxu0 0.0
    %404 = vmatprep.subr.mxu0 0.0
    %405 = vmatpush2.xpose.msra.mxu0 0.0
    %406 = vmatprep.subr.mxu0 0.0
    %407 = vmatpush2.xpose.msra.mxu0 0.0
    %408 = vmatprep.subr.mxu0 0.0
    %409 = vmatpush2.xpose.msra.mxu0 0.0
    %410 = vmatprep.subr.mxu0 0.0
    %411 = vmatpush2.xpose.msra.mxu0 0.0
    %412 = vmatprep.subr.mxu0 0.0
    %413 = vmatpush2.xpose.msra.mxu0 0.0
    %414 = vmatprep.mubr.f32.mxu0 0.0
    %415 = vmatmul.mubr.f32.gmra.mxu0 %v346
    %v416 = vpop.f32.mrf.mxu0
    %v417 = vadd.f32 0.0, %v416
    %v418 = vpop.f32.mrf.mxu0
    %419 = vdwg.mxu0
    %v420 = vmul.f32 %v417, 0.25
    %v421 = vadd.f32 %v420, %v251
    %v422 = vsel %vm253, %v421, -inf
    %423 = vmax.xlane.f32.xlu0 %v422
    %v424 = vpop.xlane.xlu0 %423
    %v425 = vsub.f32 %v421, %v424
    %v426 = vmul.f32 %v425, 1.442695
    %v427 = vpow.pop %v426
    %v428 = vsel %vm253, %v427, 0.0
    %429 = vadd.xlane.f32.xlu0 %v428
    %v430 = vpop.xlane.xlu0 %429
    %v431 = vrcp.pop %v430
    %v432 = vmul.f32 %v427, %v431
    %433 = vrot.lane.b32.xlu0 %v160, 48
    %v434 = vpop.permute.xlu0 %433
    %v437 = vsel %vm253, %v432, 0
    %439 = vmatprep.subr.mxu0 0.0
    %440 = vmatpush1.msra.mxu0 0.0
    %441 = vmatprep.subr.mxu0 0.0
    %442 = vmatpush1.msra.mxu0 0.0
    %443 = vmatprep.subr.mxu0 0.0
    %444 = vmatpush1.msra.mxu0 0.0
    %445 = vmatprep.subr.mxu0 0.0
    %446 = vmatpush1.msra.mxu0 0.0
    %447 = vmatprep.subr.mxu0 0.0
    %448 = vmatpush1.msra.mxu0 0.0
    %449 = vmatprep.subr.mxu0 0.0
    %450 = vmatpush1.msra.mxu0 0.0
    %451 = vmatprep.subr.mxu0 0.0
    %452 = vmatpush1.msra.mxu0 0.0
    %453 = vmatprep.subr.mxu0 0.0
    %454 = vmatpush1.msra.mxu0 0.0
    %455 = vmatprep.subr.mxu0 0.0
    %456 = vmatpush1.msra.mxu0 0.0
    %457 = vmatprep.subr.mxu0 0.0
    %458 = vmatpush1.msra.mxu0 0.0
    %459 = vmatprep.subr.mxu0 0.0
    %460 = vmatpush1.msra.mxu0 0.0
    %461 = vmatprep.subr.mxu0 0.0
    %462 = vmatpush1.msra.mxu0 0.0
    %463 = vmatprep.subr.mxu0 0.0
    %464 = vmatpush1.msra.mxu0 0.0
    %465 = vmatprep.subr.mxu0 0.0
    %466 = vmatpush1.msra.mxu0 0.0
    %467 = vmatprep.subr.mxu0 0.0
    %468 = vmatpush1.msra.mxu0 0.0
    %469 = vmatprep.subr.mxu0 0.0
    %470 = vmatpush1.msra.mxu0 %v434
    %471 = vmatprep.subr.mxu0 0.0
    %472 = vmatpush2.msra.mxu0 0.0
    %473 = vmatprep.subr.mxu0 0.0
    %474 = vmatpush2.msra.mxu0 0.0
    %475 = vmatprep.subr.mxu0 0.0
    %476 = vmatpush2.msra.mxu0 0.0
    %477 = vmatprep.subr.mxu0 0.0
    %478 = vmatpush2.msra.mxu0 0.0
    %479 = vmatprep.subr.mxu0 0.0
    %480 = vmatpush2.msra.mxu0 0.0
    %481 = vmatprep.subr.mxu0 0.0
    %482 = vmatpush2.msra.mxu0 0.0
    %483 = vmatprep.subr.mxu0 0.0
    %484 = vmatpush2.msra.mxu0 0.0
    %485 = vmatprep.subr.mxu0 0.0
    %486 = vmatpush2.msra.mxu0 0.0
    %487 = vmatprep.subr.mxu0 0.0
    %488 = vmatpush2.msra.mxu0 0.0
    %489 = vmatprep.subr.mxu0 0.0
    %490 = vmatpush2.msra.mxu0 0.0
    %491 = vmatprep.subr.mxu0 0.0
    %492 = vmatpush2.msra.mxu0 0.0
    %493 = vmatprep.subr.mxu0 0.0
    %494 = vmatpush2.msra.mxu0 0.0
    %495 = vmatprep.subr.mxu0 0.0
    %496 = vmatpush2.msra.mxu0 0.0
    %497 = vmatprep.subr.mxu0 0.0
    %498 = vmatpush2.msra.mxu0 0.0
    %499 = vmatprep.subr.mxu0 0.0
    %500 = vmatpush2.msra.mxu0 0.0
    %501 = vmatprep.subr.mxu0 0.0
    %502 = vmatpush2.msra.mxu0 0.0
    %503 = vmatprep.mubr.f32.mxu0 0.0
    %504 = vmatmul.mubr.f32.gmra.mxu0 %v437
    %v505 = vpop.f32.mrf.mxu0
    %v506 = vadd.f32 0.0, %v505
    %v507 = vpop.f32.mrf.mxu0
    %508 = vdwg.mxu0
    %510 = vrot.lane.b32.xlu0 %v506, 16
    %v511 = vpop.permute.xlu0 %510
    %vm513 = vcmask 261248
    %514 = vst.msk [vmem:[#allocation2] sm:$0xff] %vm513, %v511
    %v515 = vld [vmem:[%s1 + $0x1] sm:$0x1]
    %517 = vrot.lane.b32.xlu0 %v165, 96
    %v518 = vpop.permute.xlu0 %517
    %v519 = vsel %vm172, %v165, 0
    %v521 = vsel %vm172, %v518, 0
    %523 = vmatprep.subr.mxu0 0.0
    %524 = vmatpush1.xpose.msra.mxu0 0.0
    %525 = vmatprep.subr.mxu0 0.0
    %526 = vmatpush1.xpose.msra.mxu0 0.0
    %527 = vmatprep.subr.mxu0 0.0
    %528 = vmatpush1.xpose.msra.mxu0 0.0
    %529 = vmatprep.subr.mxu0 0.0
    %530 = vmatpush1.xpose.msra.mxu0 0.0
    %531 = vmatprep.subr.mxu0 0.0
    %532 = vmatpush1.xpose.msra.mxu0 0.0
    %533 = vmatprep.subr.mxu0 0.0
    %534 = vmatpush1.xpose.msra.mxu0 0.0
    %535 = vmatprep.subr.mxu0 0.0
    %536 = vmatpush1.xpose.msra.mxu0 0.0
    %537 = vmatprep.subr.mxu0 0.0
    %538 = vmatpush1.xpose.msra.mxu0 0.0
    %539 = vmatprep.subr.mxu0 0.0
    %540 = vmatpush1.xpose.msra.mxu0 0.0
    %541 = vmatprep.subr.mxu0 0.0
    %542 = vmatpush1.xpose.msra.mxu0 0.0
    %543 = vmatprep.subr.mxu0 0.0
    %544 = vmatpush1.xpose.msra.mxu0 0.0
    %545 = vmatprep.subr.mxu0 0.0
    %546 = vmatpush1.xpose.msra.mxu0 0.0
    %547 = vmatprep.subr.mxu0 0.0
    %548 = vmatpush1.xpose.msra.mxu0 0.0
    %549 = vmatprep.subr.mxu0 0.0
    %550 = vmatpush1.xpose.msra.mxu0 0.0
    %551 = vmatprep.subr.mxu0 0.0
    %552 = vmatpush1.xpose.msra.mxu0 0.0
    %553 = vmatprep.subr.mxu0 0.0
    %554 = vmatpush1.xpose.msra.mxu0 %v521
    %555 = vmatprep.subr.mxu0 0.0
    %556 = vmatpush2.xpose.msra.mxu0 0.0
    %557 = vmatprep.subr.mxu0 0.0
    %558 = vmatpush2.xpose.msra.mxu0 0.0
    %559 = vmatprep.subr.mxu0 0.0
    %560 = vmatpush2.xpose.msra.mxu0 0.0
    %561 = vmatprep.subr.mxu0 0.0
    %562 = vmatpush2.xpose.msra.mxu0 0.0
    %563 = vmatprep.subr.mxu0 0.0
    %564 = vmatpush2.xpose.msra.mxu0 0.0
    %565 = vmatprep.subr.mxu0 0.0
    %566 = vmatpush2.xpose.msra.mxu0 0.0
    %567 = vmatprep.subr.mxu0 0.0
    %568 = vmatpush2.xpose.msra.mxu0 0.0
    %569 = vmatprep.subr.mxu0 0.0
    %570 = vmatpush2.xpose.msra.mxu0 0.0
    %571 = vmatprep.subr.mxu0 0.0
    %572 = vmatpush2.xpose.msra.mxu0 0.0
    %573 = vmatprep.subr.mxu0 0.0
    %574 = vmatpush2.xpose.msra.mxu0 0.0
    %575 = vmatprep.subr.mxu0 0.0
    %576 = vmatpush2.xpose.msra.mxu0 0.0
    %577 = vmatprep.subr.mxu0 0.0
    %578 = vmatpush2.xpose.msra.mxu0 0.0
    %579 = vmatprep.subr.mxu0 0.0
    %580 = vmatpush2.xpose.msra.mxu0 0.0
    %581 = vmatprep.subr.mxu0 0.0
    %582 = vmatpush2.xpose.msra.mxu0 0.0
    %583 = vmatprep.subr.mxu0 0.0
    %584 = vmatpush2.xpose.msra.mxu0 0.0
    %585 = vmatprep.subr.mxu0 0.0
    %586 = vmatpush2.xpose.msra.mxu0 0.0
    %587 = vmatprep.mubr.f32.mxu0 0.0
    %588 = vmatmul.mubr.f32.gmra.mxu0 %v519
    %v589 = vpop.f32.mrf.mxu0
    %v590 = vadd.f32 0.0, %v589
    %v591 = vpop.f32.mrf.mxu0
    %592 = vdwg.mxu0
    %v593 = vmul.f32 %v590, 0.25
    %v594 = vlaneseq
    %v595 = vshrl.u32 %v594, 7
    %v596 = vsub.s32 0, %v595
    %v597 = vrot.slane %v515, %v596
    %v598 = vadd.f32 %v593, %v597
    %v599 = vsel %vm253, %v598, -inf
    %600 = vmax.xlane.f32.xlu0 %v599
    %v601 = vpop.xlane.xlu0 %600
    %v602 = vsub.f32 %v598, %v601
    %v603 = vmul.f32 %v602, 1.442695
    %v604 = vpow.pop %v603
    %v605 = vsel %vm253, %v604, 0.0
    %606 = vadd.xlane.f32.xlu0 %v605
    %v607 = vpop.xlane.xlu0 %606
    %v608 = vrcp.pop %v607
    %v609 = vmul.f32 %v604, %v608
    %610 = vrot.lane.b32.xlu0 %v165, 64
    %v611 = vpop.permute.xlu0 %610
    %v614 = vsel %vm253, %v609, 0
    %616 = vmatprep.subr.mxu0 0.0
    %617 = vmatpush1.msra.mxu0 0.0
    %618 = vmatprep.subr.mxu0 0.0
    %619 = vmatpush1.msra.mxu0 0.0
    %620 = vmatprep.subr.mxu0 0.0
    %621 = vmatpush1.msra.mxu0 0.0
    %622 = vmatprep.subr.mxu0 0.0
    %623 = vmatpush1.msra.mxu0 0.0
    %624 = vmatprep.subr.mxu0 0.0
    %625 = vmatpush1.msra.mxu0 0.0
    %626 = vmatprep.subr.mxu0 0.0
    %627 = vmatpush1.msra.mxu0 0.0
    %628 = vmatprep.subr.mxu0 0.0
    %629 = vmatpush1.msra.mxu0 0.0
    %630 = vmatprep.subr.mxu0 0.0
    %631 = vmatpush1.msra.mxu0 0.0
    %632 = vmatprep.subr.mxu0 0.0
    %633 = vmatpush1.msra.mxu0 0.0
    %634 = vmatprep.subr.mxu0 0.0
    %635 = vmatpush1.msra.mxu0 0.0
    %636 = vmatprep.subr.mxu0 0.0
    %637 = vmatpush1.msra.mxu0 0.0
    %638 = vmatprep.subr.mxu0 0.0
    %639 = vmatpush1.msra.mxu0 0.0
    %640 = vmatprep.subr.mxu0 0.0
    %641 = vmatpush1.msra.mxu0 0.0
    %642 = vmatprep.subr.mxu0 0.0
    %643 = vmatpush1.msra.mxu0 0.0
    %644 = vmatprep.subr.mxu0 0.0
    %645 = vmatpush1.msra.mxu0 0.0
    %646 = vmatprep.subr.mxu0 0.0
    %647 = vmatpush1.msra.mxu0 %v611
    %648 = vmatprep.subr.mxu0 0.0
    %649 = vmatpush2.msra.mxu0 0.0
    %650 = vmatprep.subr.mxu0 0.0
    %651 = vmatpush2.msra.mxu0 0.0
    %652 = vmatprep.subr.mxu0 0.0
    %653 = vmatpush2.msra.mxu0 0.0
    %654 = vmatprep.subr.mxu0 0.0
    %655 = vmatpush2.msra.mxu0 0.0
    %656 = vmatprep.subr.mxu0 0.0
    %657 = vmatpush2.msra.mxu0 0.0
    %658 = vmatprep.subr.mxu0 0.0
    %659 = vmatpush2.msra.mxu0 0.0
    %660 = vmatprep.subr.mxu0 0.0
    %661 = vmatpush2.msra.mxu0 0.0
    %662 = vmatprep.subr.mxu0 0.0
    %663 = vmatpush2.msra.mxu0 0.0
    %664 = vmatprep.subr.mxu0 0.0
    %665 = vmatpush2.msra.mxu0 0.0
    %666 = vmatprep.subr.mxu0 0.0
    %667 = vmatpush2.msra.mxu0 0.0
    %668 = vmatprep.subr.mxu0 0.0
    %669 = vmatpush2.msra.mxu0 0.0
    %670 = vmatprep.subr.mxu0 0.0
    %671 = vmatpush2.msra.mxu0 0.0
    %672 = vmatprep.subr.mxu0 0.0
    %673 = vmatpush2.msra.mxu0 0.0
    %674 = vmatprep.subr.mxu0 0.0
    %675 = vmatpush2.msra.mxu0 0.0
    %676 = vmatprep.subr.mxu0 0.0
    %677 = vmatpush2.msra.mxu0 0.0
    %678 = vmatprep.subr.mxu0 0.0
    %679 = vmatpush2.msra.mxu0 0.0
    %680 = vmatprep.mubr.f32.mxu0 0.0
    %681 = vmatmul.mubr.f32.gmra.mxu0 %v614
    %v682 = vpop.f32.mrf.mxu0
    %v683 = vadd.f32 0.0, %v682
    %v684 = vpop.f32.mrf.mxu0
    %685 = vdwg.mxu0
    %686 = vst.msk [vmem:[#allocation2 + $0x8] sm:$0xff] %vm172, %v683
    %687 = vrot.lane.b32.xlu0 %v165, 112
    %v688 = vpop.permute.xlu0 %687
    %689 = vrot.lane.b32.xlu0 %v165, 80
    %v690 = vpop.permute.xlu0 %689
    %v691 = vsel %vm172, %v688, 0
    %v693 = vsel %vm172, %v690, 0
    %695 = vmatprep.subr.mxu0 0.0
    %696 = vmatpush1.xpose.msra.mxu0 0.0
    %697 = vmatprep.subr.mxu0 0.0
    %698 = vmatpush1.xpose.msra.mxu0 0.0
    %699 = vmatprep.subr.mxu0 0.0
    %700 = vmatpush1.xpose.msra.mxu0 0.0
    %701 = vmatprep.subr.mxu0 0.0
    %702 = vmatpush1.xpose.msra.mxu0 0.0
    %703 = vmatprep.subr.mxu0 0.0
    %704 = vmatpush1.xpose.msra.mxu0 0.0
    %705 = vmatprep.subr.mxu0 0.0
    %706 = vmatpush1.xpose.msra.mxu0 0.0
    %707 = vmatprep.subr.mxu0 0.0
    %708 = vmatpush1.xpose.msra.mxu0 0.0
    %709 = vmatprep.subr.mxu0 0.0
    %710 = vmatpush1.xpose.msra.mxu0 0.0
    %711 = vmatprep.subr.mxu0 0.0
    %712 = vmatpush1.xpose.msra.mxu0 0.0
    %713 = vmatprep.subr.mxu0 0.0
    %714 = vmatpush1.xpose.msra.mxu0 0.0
    %715 = vmatprep.subr.mxu0 0.0
    %716 = vmatpush1.xpose.msra.mxu0 0.0
    %717 = vmatprep.subr.mxu0 0.0
    %718 = vmatpush1.xpose.msra.mxu0 0.0
    %719 = vmatprep.subr.mxu0 0.0
    %720 = vmatpush1.xpose.msra.mxu0 0.0
    %721 = vmatprep.subr.mxu0 0.0
    %722 = vmatpush1.xpose.msra.mxu0 0.0
    %723 = vmatprep.subr.mxu0 0.0
    %724 = vmatpush1.xpose.msra.mxu0 0.0
    %725 = vmatprep.subr.mxu0 0.0
    %726 = vmatpush1.xpose.msra.mxu0 %v693
    %727 = vmatprep.subr.mxu0 0.0
    %728 = vmatpush2.xpose.msra.mxu0 0.0
    %729 = vmatprep.subr.mxu0 0.0
    %730 = vmatpush2.xpose.msra.mxu0 0.0
    %731 = vmatprep.subr.mxu0 0.0
    %732 = vmatpush2.xpose.msra.mxu0 0.0
    %733 = vmatprep.subr.mxu0 0.0
    %734 = vmatpush2.xpose.msra.mxu0 0.0
    %735 = vmatprep.subr.mxu0 0.0
    %736 = vmatpush2.xpose.msra.mxu0 0.0
    %737 = vmatprep.subr.mxu0 0.0
    %738 = vmatpush2.xpose.msra.mxu0 0.0
    %739 = vmatprep.subr.mxu0 0.0
    %740 = vmatpush2.xpose.msra.mxu0 0.0
    %741 = vmatprep.subr.mxu0 0.0
    %742 = vmatpush2.xpose.msra.mxu0 0.0
    %743 = vmatprep.subr.mxu0 0.0
    %744 = vmatpush2.xpose.msra.mxu0 0.0
    %745 = vmatprep.subr.mxu0 0.0
    %746 = vmatpush2.xpose.msra.mxu0 0.0
    %747 = vmatprep.subr.mxu0 0.0
    %748 = vmatpush2.xpose.msra.mxu0 0.0
    %749 = vmatprep.subr.mxu0 0.0
    %750 = vmatpush2.xpose.msra.mxu0 0.0
    %751 = vmatprep.subr.mxu0 0.0
    %752 = vmatpush2.xpose.msra.mxu0 0.0
    %753 = vmatprep.subr.mxu0 0.0
    %754 = vmatpush2.xpose.msra.mxu0 0.0
    %755 = vmatprep.subr.mxu0 0.0
    %756 = vmatpush2.xpose.msra.mxu0 0.0
    %757 = vmatprep.subr.mxu0 0.0
    %758 = vmatpush2.xpose.msra.mxu0 0.0
    %759 = vmatprep.mubr.f32.mxu0 0.0
    %760 = vmatmul.mubr.f32.gmra.mxu0 %v691
    %v761 = vpop.f32.mrf.mxu0
    %v762 = vadd.f32 0.0, %v761
    %v763 = vpop.f32.mrf.mxu0
    %764 = vdwg.mxu0
    %v765 = vmul.f32 %v762, 0.25
    %v766 = vadd.f32 %v765, %v597
    %v767 = vsel %vm253, %v766, -inf
    %768 = vmax.xlane.f32.xlu0 %v767
    %v769 = vpop.xlane.xlu0 %768
    %v770 = vsub.f32 %v766, %v769
    %v771 = vmul.f32 %v770, 1.442695
    %v772 = vpow.pop %v771
    %v773 = vsel %vm253, %v772, 0.0
    %774 = vadd.xlane.f32.xlu0 %v773
    %v775 = vpop.xlane.xlu0 %774
    %v776 = vrcp.pop %v775
    %v777 = vmul.f32 %v772, %v776
    %778 = vrot.lane.b32.xlu0 %v165, 48
    %v779 = vpop.permute.xlu0 %778
    %v782 = vsel %vm253, %v777, 0
    %784 = vmatprep.subr.mxu0 0.0
    %785 = vmatpush1.msra.mxu0 0.0
    %786 = vmatprep.subr.mxu0 0.0
    %787 = vmatpush1.msra.mxu0 0.0
    %788 = vmatprep.subr.mxu0 0.0
    %789 = vmatpush1.msra.mxu0 0.0
    %790 = vmatprep.subr.mxu0 0.0
    %791 = vmatpush1.msra.mxu0 0.0
    %792 = vmatprep.subr.mxu0 0.0
    %793 = vmatpush1.msra.mxu0 0.0
    %794 = vmatprep.subr.mxu0 0.0
    %795 = vmatpush1.msra.mxu0 0.0
    %796 = vmatprep.subr.mxu0 0.0
    %797 = vmatpush1.msra.mxu0 0.0
    %798 = vmatprep.subr.mxu0 0.0
    %799 = vmatpush1.msra.mxu0 0.0
    %800 = vmatprep.subr.mxu0 0.0
    %801 = vmatpush1.msra.mxu0 0.0
    %802 = vmatprep.subr.mxu0 0.0
    %803 = vmatpush1.msra.mxu0 0.0
    %804 = vmatprep.subr.mxu0 0.0
    %805 = vmatpush1.msra.mxu0 0.0
    %806 = vmatprep.subr.mxu0 0.0
    %807 = vmatpush1.msra.mxu0 0.0
    %808 = vmatprep.subr.mxu0 0.0
    %809 = vmatpush1.msra.mxu0 0.0
    %810 = vmatprep.subr.mxu0 0.0
    %811 = vmatpush1.msra.mxu0 0.0
    %812 = vmatprep.subr.mxu0 0.0
    %813 = vmatpush1.msra.mxu0 0.0
    %814 = vmatprep.subr.mxu0 0.0
    %815 = vmatpush1.msra.mxu0 %v779
    %816 = vmatprep.subr.mxu0 0.0
    %817 = vmatpush2.msra.mxu0 0.0
    %818 = vmatprep.subr.mxu0 0.0
    %819 = vmatpush2.msra.mxu0 0.0
    %820 = vmatprep.subr.mxu0 0.0
    %821 = vmatpush2.msra.mxu0 0.0
    %822 = vmatprep.subr.mxu0 0.0
    %823 = vmatpush2.msra.mxu0 0.0
    %824 = vmatprep.subr.mxu0 0.0
    %825 = vmatpush2.msra.mxu0 0.0
    %826 = vmatprep.subr.mxu0 0.0
    %827 = vmatpush2.msra.mxu0 0.0
    %828 = vmatprep.subr.mxu0 0.0
    %829 = vmatpush2.msra.mxu0 0.0
    %830 = vmatprep.subr.mxu0 0.0
    %831 = vmatpush2.msra.mxu0 0.0
    %832 = vmatprep.subr.mxu0 0.0
    %833 = vmatpush2.msra.mxu0 0.0
    %834 = vmatprep.subr.mxu0 0.0
    %835 = vmatpush2.msra.mxu0 0.0
    %836 = vmatprep.subr.mxu0 0.0
    %837 = vmatpush2.msra.mxu0 0.0
    %838 = vmatprep.subr.mxu0 0.0
    %839 = vmatpush2.msra.mxu0 0.0
    %840 = vmatprep.subr.mxu0 0.0
    %841 = vmatpush2.msra.mxu0 0.0
    %842 = vmatprep.subr.mxu0 0.0
    %843 = vmatpush2.msra.mxu0 0.0
    %844 = vmatprep.subr.mxu0 0.0
    %845 = vmatpush2.msra.mxu0 0.0
    %846 = vmatprep.subr.mxu0 0.0
    %847 = vmatpush2.msra.mxu0 0.0
    %848 = vmatprep.mubr.f32.mxu0 0.0
    %849 = vmatmul.mubr.f32.gmra.mxu0 %v782
    %v850 = vpop.f32.mrf.mxu0
    %v851 = vadd.f32 0.0, %v850
    %v852 = vpop.f32.mrf.mxu0
    %853 = vdwg.mxu0
    %855 = vrot.lane.b32.xlu0 %v851, 16
    %v856 = vpop.permute.xlu0 %855
    %858 = vst.msk [vmem:[#allocation2 + $0x8] sm:$0xff] %vm513, %v856
    %v859 = vld [vmem:[#allocation2] sm:$0xff]
    %v860 = vld [vmem:[#allocation2 + $0x8] sm:$0xff]
    %v861 = vld [vmem:[%s3 + $0x3] sm:$0x1]
    %v862 = vlaneseq
    %v863 = vshrl.u32 %v862, 7
    %v864 = vsub.s32 0, %v863
    %v865 = vrot.slane %v861, %v864
    %v867 = vsel %vm22, %v859, 0
    %v870 = vsel %vm22, %v860, 0
    %872 = vmatprep.subr.mxu0 0.0
    %873 = vmatpush1.msra.mxu0 0.0
    %874 = vmatprep.subr.mxu0 0.0
    %875 = vmatpush1.msra.mxu0 0.0
    %876 = vmatprep.subr.mxu0 0.0
    %877 = vmatpush1.msra.mxu0 0.0
    %878 = vmatprep.subr.mxu0 0.0
    %879 = vmatpush1.msra.mxu0 0.0
    %880 = vmatprep.subr.mxu0 0.0
    %881 = vmatpush1.msra.mxu0 0.0
    %882 = vmatprep.subr.mxu0 0.0
    %883 = vmatpush1.msra.mxu0 0.0
    %884 = vmatprep.subr.mxu0 0.0
    %885 = vmatpush1.msra.mxu0 0.0
    %886 = vmatprep.subr.mxu0 0.0
    %887 = vmatpush1.msra.mxu0 0.0
    %888 = vmatprep.subr.mxu0 0.0
    %889 = vmatpush1.msra.mxu0 0.0
    %890 = vmatprep.subr.mxu0 0.0
    %891 = vmatpush1.msra.mxu0 0.0
    %892 = vmatprep.subr.mxu0 0.0
    %893 = vmatpush1.msra.mxu0 0.0
    %894 = vmatprep.subr.mxu0 0.0
    %895 = vmatpush1.msra.mxu0 0.0
    %896 = vmatprep.subr.mxu0 0.0
    %897 = vmatpush1.msra.mxu0 %v69
    %898 = vmatprep.subr.mxu0 0.0
    %899 = vmatpush1.msra.mxu0 %v68
    %900 = vmatprep.subr.mxu0 0.0
    %901 = vmatpush1.msra.mxu0 %v67
    %902 = vmatprep.subr.mxu0 0.0
    %903 = vmatpush1.msra.mxu0 %v66
    %904 = vmatprep.subr.mxu0 0.0
    %905 = vmatpush2.msra.mxu0 0.0
    %906 = vmatprep.subr.mxu0 0.0
    %907 = vmatpush2.msra.mxu0 0.0
    %908 = vmatprep.subr.mxu0 0.0
    %909 = vmatpush2.msra.mxu0 0.0
    %910 = vmatprep.subr.mxu0 0.0
    %911 = vmatpush2.msra.mxu0 0.0
    %912 = vmatprep.subr.mxu0 0.0
    %913 = vmatpush2.msra.mxu0 0.0
    %914 = vmatprep.subr.mxu0 0.0
    %915 = vmatpush2.msra.mxu0 0.0
    %916 = vmatprep.subr.mxu0 0.0
    %917 = vmatpush2.msra.mxu0 0.0
    %918 = vmatprep.subr.mxu0 0.0
    %919 = vmatpush2.msra.mxu0 0.0
    %920 = vmatprep.subr.mxu0 0.0
    %921 = vmatpush2.msra.mxu0 0.0
    %922 = vmatprep.subr.mxu0 0.0
    %923 = vmatpush2.msra.mxu0 0.0
    %924 = vmatprep.subr.mxu0 0.0
    %925 = vmatpush2.msra.mxu0 0.0
    %926 = vmatprep.subr.mxu0 0.0
    %927 = vmatpush2.msra.mxu0 0.0
    %928 = vmatprep.subr.mxu0 0.0
    %929 = vmatpush2.msra.mxu0 0.0
    %930 = vmatprep.subr.mxu0 0.0
    %931 = vmatpush2.msra.mxu0 0.0
    %932 = vmatprep.subr.mxu0 0.0
    %933 = vmatpush2.msra.mxu0 0.0
    %934 = vmatprep.subr.mxu0 0.0
    %935 = vmatpush2.msra.mxu0 0.0
    %936 = vmatprep.mubr.f32.mxu0 0.0
    %937 = vmatmul.mubr.f32.gmra.mxu0 %v867
    %v938 = vpop.f32.mrf.mxu0
    %v939 = vadd.f32 %v865, %v938
    %v940 = vpop.f32.mrf.mxu0
    %941 = vmatprep.mubr.f32.mxu0 0.0
    %942 = vmatmul.mubr.f32.gmra.mxu0 %v870
    %v943 = vpop.f32.mrf.mxu0
    %v944 = vadd.f32 %v865, %v943
    %v945 = vpop.f32.mrf.mxu0
    %946 = vdwg.mxu0
    %v947 = vadd.f32 %v939, %v60
    %v948 = vadd.f32 %v944, %v61
    %v949 = vld [vmem:[%s3 + $0x4] sm:$0x1]
    %v950 = vld [vmem:[%s3 + $0x5] sm:$0x1]
    %v951 = vsel %vm22, %v947, 0.0
    %952 = vadd.xlane.f32.xlu0 %v951
    %v953 = vpop.xlane.xlu0 %952
    %v954 = vsel %vm22, %v948, 0.0
    %955 = vadd.xlane.f32.xlu0 %v954
    %v956 = vpop.xlane.xlu0 %955
    %v957 = vmul.f32 %v953, %v29
    %v958 = vmul.f32 %v956, %v29
    %v959 = vsub.f32 %v947, %v957
    %v960 = vsub.f32 %v948, %v958
    %v961 = vmul.f32 %v959, %v959
    %v962 = vmul.f32 %v960, %v960
    %v963 = vsel %vm22, %v961, 0.0
    %964 = vadd.xlane.f32.xlu0 %v963
    %v965 = vpop.xlane.xlu0 %964
    %v966 = vsel %vm22, %v962, 0.0
    %967 = vadd.xlane.f32.xlu0 %v966
    %v968 = vpop.xlane.xlu0 %967
    %v969 = vmul.f32 %v965, %v29
    %v970 = vmul.f32 %v968, %v29
    %v971 = vadd.f32 %v969, 1e-12
    %v972 = vadd.f32 %v970, 1e-12
    %v973 = vrsqrt.pop %v971
    %v974 = vrsqrt.pop %v972
    %v975 = vmul.f32 %v959, %v973
    %v976 = vmul.f32 %v960, %v974
    %v977 = vlaneseq
    %v978 = vshrl.u32 %v977, 7
    %v979 = vsub.s32 0, %v978
    %v980 = vrot.slane %v949, %v979
    %v981 = vmul.f32 %v975, %v980
    %v982 = vmul.f32 %v976, %v980
    %v983 = vlaneseq
    %v984 = vshrl.u32 %v983, 7
    %v985 = vsub.s32 0, %v984
    %v986 = vrot.slane %v950, %v985
    %v987 = vadd.f32 %v981, %v986
    %v988 = vadd.f32 %v982, %v986
    %v989 = vld [vmem:[%s3 + $0x6] sm:$0x1]
    %v990 = vlaneseq
    %v991 = vshrl.u32 %v990, 7
    %v992 = vsub.s32 0, %v991
    %v993 = vrot.slane %v989, %v992
    %v995 = vsel %vm22, %v987, 0
    %v998 = vsel %vm22, %v988, 0
    %1000 = vmatprep.subr.mxu0 0.0
    %1001 = vmatpush1.msra.mxu0 0.0
    %1002 = vmatprep.subr.mxu0 0.0
    %1003 = vmatpush1.msra.mxu0 0.0
    %1004 = vmatprep.subr.mxu0 0.0
    %1005 = vmatpush1.msra.mxu0 0.0
    %1006 = vmatprep.subr.mxu0 0.0
    %1007 = vmatpush1.msra.mxu0 0.0
    %1008 = vmatprep.subr.mxu0 0.0
    %1009 = vmatpush1.msra.mxu0 0.0
    %1010 = vmatprep.subr.mxu0 0.0
    %1011 = vmatpush1.msra.mxu0 0.0
    %1012 = vmatprep.subr.mxu0 0.0
    %1013 = vmatpush1.msra.mxu0 0.0
    %1014 = vmatprep.subr.mxu0 0.0
    %1015 = vmatpush1.msra.mxu0 0.0
    %1016 = vmatprep.subr.mxu0 0.0
    %1017 = vmatpush1.msra.mxu0 0.0
    %1018 = vmatprep.subr.mxu0 0.0
    %1019 = vmatpush1.msra.mxu0 0.0
    %1020 = vmatprep.subr.mxu0 0.0
    %1021 = vmatpush1.msra.mxu0 0.0
    %1022 = vmatprep.subr.mxu0 0.0
    %1023 = vmatpush1.msra.mxu0 0.0
    %1024 = vmatprep.subr.mxu0 0.0
    %1025 = vmatpush1.msra.mxu0 %v73
    %1026 = vmatprep.subr.mxu0 0.0
    %1027 = vmatpush1.msra.mxu0 %v72
    %1028 = vmatprep.subr.mxu0 0.0
    %1029 = vmatpush1.msra.mxu0 %v71
    %1030 = vmatprep.subr.mxu0 0.0
    %1031 = vmatpush1.msra.mxu0 %v70
    %1032 = vmatprep.subr.mxu0 0.0
    %1033 = vmatpush2.msra.mxu0 0.0
    %1034 = vmatprep.subr.mxu0 0.0
    %1035 = vmatpush2.msra.mxu0 0.0
    %1036 = vmatprep.subr.mxu0 0.0
    %1037 = vmatpush2.msra.mxu0 0.0
    %1038 = vmatprep.subr.mxu0 0.0
    %1039 = vmatpush2.msra.mxu0 0.0
    %1040 = vmatprep.subr.mxu0 0.0
    %1041 = vmatpush2.msra.mxu0 0.0
    %1042 = vmatprep.subr.mxu0 0.0
    %1043 = vmatpush2.msra.mxu0 0.0
    %1044 = vmatprep.subr.mxu0 0.0
    %1045 = vmatpush2.msra.mxu0 0.0
    %1046 = vmatprep.subr.mxu0 0.0
    %1047 = vmatpush2.msra.mxu0 0.0
    %1048 = vmatprep.subr.mxu0 0.0
    %1049 = vmatpush2.msra.mxu0 0.0
    %1050 = vmatprep.subr.mxu0 0.0
    %1051 = vmatpush2.msra.mxu0 0.0
    %1052 = vmatprep.subr.mxu0 0.0
    %1053 = vmatpush2.msra.mxu0 0.0
    %1054 = vmatprep.subr.mxu0 0.0
    %1055 = vmatpush2.msra.mxu0 0.0
    %1056 = vmatprep.subr.mxu0 0.0
    %1057 = vmatpush2.msra.mxu0 0.0
    %1058 = vmatprep.subr.mxu0 0.0
    %1059 = vmatpush2.msra.mxu0 0.0
    %1060 = vmatprep.subr.mxu0 0.0
    %1061 = vmatpush2.msra.mxu0 0.0
    %1062 = vmatprep.subr.mxu0 0.0
    %1063 = vmatpush2.msra.mxu0 0.0
    %1064 = vmatprep.mubr.f32.mxu0 0.0
    %1065 = vmatmul.mubr.f32.gmra.mxu0 %v995
    %v1066 = vpop.f32.mrf.mxu0
    %v1067 = vadd.f32 %v993, %v1066
    %v1068 = vpop.f32.mrf.mxu0
    %1069 = vmatprep.mubr.f32.mxu0 0.0
    %1070 = vmatmul.mubr.f32.gmra.mxu0 %v998
    %v1071 = vpop.f32.mrf.mxu0
    %v1072 = vadd.f32 %v993, %v1071
    %v1073 = vpop.f32.mrf.mxu0
    %1074 = vdwg.mxu0
    %v1075 = vmul.f32 %v1067, 0.5
    %v1076 = vmul.f32 %v1072, 0.5
    %v1077 = vmul.f32 %v1067, 0.044715
    %v1078 = vmul.f32 %v1072, 0.044715
    %v1079 = vmul.f32 %v1077, %v1067
    %v1080 = vmul.f32 %v1078, %v1072
    %v1081 = vmul.f32 %v1079, %v1067
    %v1082 = vmul.f32 %v1080, %v1072
    %v1083 = vadd.f32 %v1067, %v1081
    %v1084 = vadd.f32 %v1072, %v1082
    %v1085 = vmul.f32 %v1083, 0.7978846
    %v1086 = vmul.f32 %v1084, 0.7978846
    %v1087 = vtanh.pop %v1085
    %v1088 = vtanh.pop %v1086
    %v1089 = vadd.f32 %v1087, 1.0
    %v1090 = vadd.f32 %v1088, 1.0
    %v1091 = vmul.f32 %v1075, %v1089
    %v1092 = vmul.f32 %v1076, %v1090
    %v1093 = vld [vmem:[%s3 + $0x7] sm:$0x1]
    %v1094 = vlaneseq
    %v1095 = vshrl.u32 %v1094, 7
    %v1096 = vsub.s32 0, %v1095
    %v1097 = vrot.slane %v1093, %v1096
    %vm1098 = vcmask 523264
    %v1100 = vsel %vm1098, %v1091, 0
    %v1103 = vsel %vm1098, %v1092, 0
    %1105 = vmatprep.subr.mxu0 0.0
    %1106 = vmatpush1.msra.mxu0 0.0
    %1107 = vmatprep.subr.mxu0 0.0
    %1108 = vmatpush1.msra.mxu0 0.0
    %1109 = vmatprep.subr.mxu0 0.0
    %1110 = vmatpush1.msra.mxu0 0.0
    %1111 = vmatprep.subr.mxu0 0.0
    %1112 = vmatpush1.msra.mxu0 0.0
    %1113 = vmatprep.subr.mxu0 0.0
    %1114 = vmatpush1.msra.mxu0 0.0
    %1115 = vmatprep.subr.mxu0 0.0
    %1116 = vmatpush1.msra.mxu0 0.0
    %1117 = vmatprep.subr.mxu0 0.0
    %1118 = vmatpush1.msra.mxu0 0.0
    %1119 = vmatprep.subr.mxu0 0.0
    %1120 = vmatpush1.msra.mxu0 0.0
    %1121 = vmatprep.subr.mxu0 0.0
    %1122 = vmatpush1.msra.mxu0 %v81
    %1123 = vmatprep.subr.mxu0 0.0
    %1124 = vmatpush1.msra.mxu0 %v80
    %1125 = vmatprep.subr.mxu0 0.0
    %1126 = vmatpush1.msra.mxu0 %v79
    %1127 = vmatprep.subr.mxu0 0.0
    %1128 = vmatpush1.msra.mxu0 %v78
    %1129 = vmatprep.subr.mxu0 0.0
    %1130 = vmatpush1.msra.mxu0 %v77
    %1131 = vmatprep.subr.mxu0 0.0
    %1132 = vmatpush1.msra.mxu0 %v76
    %1133 = vmatprep.subr.mxu0 0.0
    %1134 = vmatpush1.msra.mxu0 %v75
    %1135 = vmatprep.subr.mxu0 0.0
    %1136 = vmatpush1.msra.mxu0 %v74
    %1137 = vmatprep.subr.mxu0 0.0
    %1138 = vmatpush2.msra.mxu0 0.0
    %1139 = vmatprep.subr.mxu0 0.0
    %1140 = vmatpush2.msra.mxu0 0.0
    %1141 = vmatprep.subr.mxu0 0.0
    %1142 = vmatpush2.msra.mxu0 0.0
    %1143 = vmatprep.subr.mxu0 0.0
    %1144 = vmatpush2.msra.mxu0 0.0
    %1145 = vmatprep.subr.mxu0 0.0
    %1146 = vmatpush2.msra.mxu0 0.0
    %1147 = vmatprep.subr.mxu0 0.0
    %1148 = vmatpush2.msra.mxu0 0.0
    %1149 = vmatprep.subr.mxu0 0.0
    %1150 = vmatpush2.msra.mxu0 0.0
    %1151 = vmatprep.subr.mxu0 0.0
    %1152 = vmatpush2.msra.mxu0 0.0
    %1153 = vmatprep.subr.mxu0 0.0
    %1154 = vmatpush2.msra.mxu0 0.0
    %1155 = vmatprep.subr.mxu0 0.0
    %1156 = vmatpush2.msra.mxu0 0.0
    %1157 = vmatprep.subr.mxu0 0.0
    %1158 = vmatpush2.msra.mxu0 0.0
    %1159 = vmatprep.subr.mxu0 0.0
    %1160 = vmatpush2.msra.mxu0 0.0
    %1161 = vmatprep.subr.mxu0 0.0
    %1162 = vmatpush2.msra.mxu0 0.0
    %1163 = vmatprep.subr.mxu0 0.0
    %1164 = vmatpush2.msra.mxu0 0.0
    %1165 = vmatprep.subr.mxu0 0.0
    %1166 = vmatpush2.msra.mxu0 0.0
    %1167 = vmatprep.subr.mxu0 0.0
    %1168 = vmatpush2.msra.mxu0 0.0
    %1169 = vmatprep.mubr.f32.mxu0 0.0
    %1170 = vmatmul.mubr.f32.gmra.mxu0 %v1100
    %v1171 = vpop.f32.mrf.mxu0
    %v1172 = vadd.f32 %v1097, %v1171
    %v1173 = vpop.f32.mrf.mxu0
    %1174 = vmatprep.mubr.f32.mxu0 0.0
    %1175 = vmatmul.mubr.f32.gmra.mxu0 %v1103
    %v1176 = vpop.f32.mrf.mxu0
    %v1177 = vadd.f32 %v1097, %v1176
    %v1178 = vpop.f32.mrf.mxu0
    %1179 = vdwg.mxu0
    %v1180 = vadd.f32 %v1172, %v987
    %v1181 = vadd.f32 %v1177, %v988
    %v1182 = vld [vmem:[%s3 + $0x8] sm:$0x1]
    %v1183 = vld [vmem:[%s3 + $0x9] sm:$0x1]
    %v1184 = vsel %vm22, %v1180, 0.0
    %1185 = vadd.xlane.f32.xlu0 %v1184
    %v1186 = vpop.xlane.xlu0 %1185
    %v1187 = vsel %vm22, %v1181, 0.0
    %1188 = vadd.xlane.f32.xlu0 %v1187
    %v1189 = vpop.xlane.xlu0 %1188
    %v1190 = vmul.f32 %v1186, %v29
    %v1191 = vmul.f32 %v1189, %v29
    %v1192 = vsub.f32 %v1180, %v1190
    %v1193 = vsub.f32 %v1181, %v1191
    %v1194 = vmul.f32 %v1192, %v1192
    %v1195 = vmul.f32 %v1193, %v1193
    %v1196 = vsel %vm22, %v1194, 0.0
    %1197 = vadd.xlane.f32.xlu0 %v1196
    %v1198 = vpop.xlane.xlu0 %1197
    %v1199 = vsel %vm22, %v1195, 0.0
    %1200 = vadd.xlane.f32.xlu0 %v1199
    %v1201 = vpop.xlane.xlu0 %1200
    %v1202 = vmul.f32 %v1198, %v29
    %v1203 = vmul.f32 %v1201, %v29
    %v1204 = vadd.f32 %v1202, 1e-12
    %v1205 = vadd.f32 %v1203, 1e-12
    %v1206 = vrsqrt.pop %v1204
    %v1207 = vrsqrt.pop %v1205
    %v1208 = vmul.f32 %v1192, %v1206
    %v1209 = vmul.f32 %v1193, %v1207
    %v1210 = vlaneseq
    %v1211 = vshrl.u32 %v1210, 7
    %v1212 = vsub.s32 0, %v1211
    %v1213 = vrot.slane %v1182, %v1212
    %v1214 = vmul.f32 %v1208, %v1213
    %v1215 = vmul.f32 %v1209, %v1213
    %v1216 = vlaneseq
    %v1217 = vshrl.u32 %v1216, 7
    %v1218 = vsub.s32 0, %v1217
    %v1219 = vrot.slane %v1183, %v1218
    %v1220 = vadd.f32 %v1214, %v1219
    %v1221 = vadd.f32 %v1215, %v1219
    %v1222 = vld [vmem:[%s2 + $0xa0] sm:$0xff]
    %v1223 = vld [vmem:[%s2 + $0xa8] sm:$0xff]
    %v1224 = vld [vmem:[%s2 + $0xb0] sm:$0xff]
    %v1225 = vld [vmem:[%s2 + $0xb8] sm:$0xff]
    %v1226 = vld [vmem:[%s2 + $0xc0] sm:$0xff]
    %v1227 = vld [vmem:[%s2 + $0xc8] sm:$0xff]
    %v1228 = vld [vmem:[%s2 + $0xd0] sm:$0xff]
    %v1229 = vld [vmem:[%s2 + $0xd8] sm:$0xff]
    %v1230 = vld [vmem:[%s2 + $0xe0] sm:$0xff]
    %v1231 = vld [vmem:[%s2 + $0xe8] sm:$0xff]
    %v1232 = vld [vmem:[%s2 + $0xf0] sm:$0xff]
    %v1233 = vld [vmem:[%s2 + $0xf8] sm:$0xff]
    %v1234 = vld [vmem:[%s2 + $0x100] sm:$0xff]
    %v1235 = vld [vmem:[%s2 + $0x108] sm:$0xff]
    %v1236 = vld [vmem:[%s2 + $0x110] sm:$0xff]
    %v1237 = vld [vmem:[%s2 + $0x118] sm:$0xff]
    %v1238 = vld [vmem:[%s2 + $0x120] sm:$0xff]
    %v1239 = vld [vmem:[%s2 + $0x128] sm:$0xff]
    %v1240 = vld [vmem:[%s2 + $0x130] sm:$0xff]
    %v1241 = vld [vmem:[%s2 + $0x138] sm:$0xff]
    %v1242 = vld [vmem:[%s3 + $0xa] sm:$0x1]
    %v1243 = vlaneseq
    %v1244 = vshrl.u32 %v1243, 7
    %v1245 = vsub.s32 0, %v1244
    %v1246 = vrot.slane %v1242, %v1245
    %v1248 = vsel %vm22, %v1220, 0
    %v1251 = vsel %vm22, %v1221, 0
    %1253 = vmatprep.subr.mxu0 0.0
    %1254 = vmatpush1.msra.mxu0 0.0
    %1255 = vmatprep.subr.mxu0 0.0
    %1256 = vmatpush1.msra.mxu0 0.0
    %1257 = vmatprep.subr.mxu0 0.0
    %1258 = vmatpush1.msra.mxu0 0.0
    %1259 = vmatprep.subr.mxu0 0.0
    %1260 = vmatpush1.msra.mxu0 0.0
    %1261 = vmatprep.subr.mxu0 0.0
    %1262 = vmatpush1.msra.mxu0 0.0
    %1263 = vmatprep.subr.mxu0 0.0
    %1264 = vmatpush1.msra.mxu0 0.0
    %1265 = vmatprep.subr.mxu0 0.0
    %1266 = vmatpush1.msra.mxu0 0.0
    %1267 = vmatprep.subr.mxu0 0.0
    %1268 = vmatpush1.msra.mxu0 0.0
    %1269 = vmatprep.subr.mxu0 0.0
    %1270 = vmatpush1.msra.mxu0 0.0
    %1271 = vmatprep.subr.mxu0 0.0
    %1272 = vmatpush1.msra.mxu0 0.0
    %1273 = vmatprep.subr.mxu0 0.0
    %1274 = vmatpush1.msra.mxu0 0.0
    %1275 = vmatprep.subr.mxu0 0.0
    %1276 = vmatpush1.msra.mxu0 0.0
    %1277 = vmatprep.subr.mxu0 0.0
    %1278 = vmatpush1.msra.mxu0 %v1225
    %1279 = vmatprep.subr.mxu0 0.0
    %1280 = vmatpush1.msra.mxu0 %v1224
    %1281 = vmatprep.subr.mxu0 0.0
    %1282 = vmatpush1.msra.mxu0 %v1223
    %1283 = vmatprep.subr.mxu0 0.0
    %1284 = vmatpush1.msra.mxu0 %v1222
    %1285 = vmatprep.subr.mxu0 0.0
    %1286 = vmatpush2.msra.mxu0 0.0
    %1287 = vmatprep.subr.mxu0 0.0
    %1288 = vmatpush2.msra.mxu0 0.0
    %1289 = vmatprep.subr.mxu0 0.0
    %1290 = vmatpush2.msra.mxu0 0.0
    %1291 = vmatprep.subr.mxu0 0.0
    %1292 = vmatpush2.msra.mxu0 0.0
    %1293 = vmatprep.subr.mxu0 0.0
    %1294 = vmatpush2.msra.mxu0 0.0
    %1295 = vmatprep.subr.mxu0 0.0
    %1296 = vmatpush2.msra.mxu0 0.0
    %1297 = vmatprep.subr.mxu0 0.0
    %1298 = vmatpush2.msra.mxu0 0.0
    %1299 = vmatprep.subr.mxu0 0.0
    %1300 = vmatpush2.msra.mxu0 0.0
    %1301 = vmatprep.subr.mxu0 0.0
    %1302 = vmatpush2.msra.mxu0 0.0
    %1303 = vmatprep.subr.mxu0 0.0
    %1304 = vmatpush2.msra.mxu0 0.0
    %1305 = vmatprep.subr.mxu0 0.0
    %1306 = vmatpush2.msra.mxu0 0.0
    %1307 = vmatprep.subr.mxu0 0.0
    %1308 = vmatpush2.msra.mxu0 0.0
    %1309 = vmatprep.subr.mxu0 0.0
    %1310 = vmatpush2.msra.mxu0 0.0
    %1311 = vmatprep.subr.mxu0 0.0
    %1312 = vmatpush2.msra.mxu0 0.0
    %1313 = vmatprep.subr.mxu0 0.0
    %1314 = vmatpush2.msra.mxu0 0.0
    %1315 = vmatprep.subr.mxu0 0.0
    %1316 = vmatpush2.msra.mxu0 0.0
    %1317 = vmatprep.mubr.f32.mxu0 0.0
    %1318 = vmatmul.mubr.f32.gmra.mxu0 %v1248
    %v1319 = vpop.f32.mrf.mxu0
    %v1320 = vadd.f32 %v1246, %v1319
    %v1321 = vpop.f32.mrf.mxu0
    %1322 = vmatprep.mubr.f32.mxu0 0.0
    %1323 = vmatmul.mubr.f32.gmra.mxu0 %v1251
    %v1324 = vpop.f32.mrf.mxu0
    %v1325 = vadd.f32 %v1246, %v1324
    %v1326 = vpop.f32.mrf.mxu0
    %1327 = vdwg.mxu0
    %v1328 = vld [vmem:[%s1] sm:$0x1]
    %1330 = vrot.lane.b32.xlu0 %v1320, 96
    %v1331 = vpop.permute.xlu0 %1330
    %v1332 = vsel %vm172, %v1320, 0
    %v1334 = vsel %vm172, %v1331, 0
    %1336 = vmatprep.subr.mxu0 0.0
    %1337 = vmatpush1.xpose.msra.mxu0 0.0
    %1338 = vmatprep.subr.mxu0 0.0
    %1339 = vmatpush1.xpose.msra.mxu0 0.0
    %1340 = vmatprep.subr.mxu0 0.0
    %1341 = vmatpush1.xpose.msra.mxu0 0.0
    %1342 = vmatprep.subr.mxu0 0.0
    %1343 = vmatpush1.xpose.msra.mxu0 0.0
    %1344 = vmatprep.subr.mxu0 0.0
    %1345 = vmatpush1.xpose.msra.mxu0 0.0
    %1346 = vmatprep.subr.mxu0 0.0
    %1347 = vmatpush1.xpose.msra.mxu0 0.0
    %1348 = vmatprep.subr.mxu0 0.0
    %1349 = vmatpush1.xpose.msra.mxu0 0.0
    %1350 = vmatprep.subr.mxu0 0.0
    %1351 = vmatpush1.xpose.msra.mxu0 0.0
    %1352 = vmatprep.subr.mxu0 0.0
    %1353 = vmatpush1.xpose.msra.mxu0 0.0
    %1354 = vmatprep.subr.mxu0 0.0
    %1355 = vmatpush1.xpose.msra.mxu0 0.0
    %1356 = vmatprep.subr.mxu0 0.0
    %1357 = vmatpush1.xpose.msra.mxu0 0.0
    %1358 = vmatprep.subr.mxu0 0.0
    %1359 = vmatpush1.xpose.msra.mxu0 0.0
    %1360 = vmatprep.subr.mxu0 0.0
    %1361 = vmatpush1.xpose.msra.mxu0 0.0
    %1362 = vmatprep.subr.mxu0 0.0
    %1363 = vmatpush1.xpose.msra.mxu0 0.0
    %1364 = vmatprep.subr.mxu0 0.0
    %1365 = vmatpush1.xpose.msra.mxu0 0.0
    %1366 = vmatprep.subr.mxu0 0.0
    %1367 = vmatpush1.xpose.msra.mxu0 %v1334
    %1368 = vmatprep.subr.mxu0 0.0
    %1369 = vmatpush2.xpose.msra.mxu0 0.0
    %1370 = vmatprep.subr.mxu0 0.0
    %1371 = vmatpush2.xpose.msra.mxu0 0.0
    %1372 = vmatprep.subr.mxu0 0.0
    %1373 = vmatpush2.xpose.msra.mxu0 0.0
    %1374 = vmatprep.subr.mxu0 0.0
    %1375 = vmatpush2.xpose.msra.mxu0 0.0
    %1376 = vmatprep.subr.mxu0 0.0
    %1377 = vmatpush2.xpose.msra.mxu0 0.0
    %1378 = vmatprep.subr.mxu0 0.0
    %1379 = vmatpush2.xpose.msra.mxu0 0.0
    %1380 = vmatprep.subr.mxu0 0.0
    %1381 = vmatpush2.xpose.msra.mxu0 0.0
    %1382 = vmatprep.subr.mxu0 0.0
    %1383 = vmatpush2.xpose.msra.mxu0 0.0
    %1384 = vmatprep.subr.mxu0 0.0
    %1385 = vmatpush2.xpose.msra.mxu0 0.0
    %1386 = vmatprep.subr.mxu0 0.0
    %1387 = vmatpush2.xpose.msra.mxu0 0.0
    %1388 = vmatprep.subr.mxu0 0.0
    %1389 = vmatpush2.xpose.msra.mxu0 0.0
    %1390 = vmatprep.subr.mxu0 0.0
    %1391 = vmatpush2.xpose.msra.mxu0 0.0
    %1392 = vmatprep.subr.mxu0 0.0
    %1393 = vmatpush2.xpose.msra.mxu0 0.0
    %1394 = vmatprep.subr.mxu0 0.0
    %1395 = vmatpush2.xpose.msra.mxu0 0.0
    %1396 = vmatprep.subr.mxu0 0.0
    %1397 = vmatpush2.xpose.msra.mxu0 0.0
    %1398 = vmatprep.subr.mxu0 0.0
    %1399 = vmatpush2.xpose.msra.mxu0 0.0
    %1400 = vmatprep.mubr.f32.mxu0 0.0
    %1401 = vmatmul.mubr.f32.gmra.mxu0 %v1332
    %v1402 = vpop.f32.mrf.mxu0
    %v1403 = vadd.f32 0.0, %v1402
    %v1404 = vpop.f32.mrf.mxu0
    %1405 = vdwg.mxu0
    %v1406 = vmul.f32 %v1403, 0.25
    %v1407 = vlaneseq
    %v1408 = vshrl.u32 %v1407, 7
    %v1409 = vsub.s32 0, %v1408
    %v1410 = vrot.slane %v1328, %v1409
    %v1411 = vadd.f32 %v1406, %v1410
    %v1412 = vsel %vm253, %v1411, -inf
    %1413 = vmax.xlane.f32.xlu0 %v1412
    %v1414 = vpop.xlane.xlu0 %1413
    %v1415 = vsub.f32 %v1411, %v1414
    %v1416 = vmul.f32 %v1415, 1.442695
    %v1417 = vpow.pop %v1416
    %v1418 = vsel %vm253, %v1417, 0.0
    %1419 = vadd.xlane.f32.xlu0 %v1418
    %v1420 = vpop.xlane.xlu0 %1419
    %v1421 = vrcp.pop %v1420
    %v1422 = vmul.f32 %v1417, %v1421
    %1423 = vrot.lane.b32.xlu0 %v1320, 64
    %v1424 = vpop.permute.xlu0 %1423
    %v1427 = vsel %vm253, %v1422, 0
    %1429 = vmatprep.subr.mxu0 0.0
    %1430 = vmatpush1.msra.mxu0 0.0
    %1431 = vmatprep.subr.mxu0 0.0
    %1432 = vmatpush1.msra.mxu0 0.0
    %1433 = vmatprep.subr.mxu0 0.0
    %1434 = vmatpush1.msra.mxu0 0.0
    %1435 = vmatprep.subr.mxu0 0.0
    %1436 = vmatpush1.msra.mxu0 0.0
    %1437 = vmatprep.subr.mxu0 0.0
    %1438 = vmatpush1.msra.mxu0 0.0
    %1439 = vmatprep.subr.mxu0 0.0
    %1440 = vmatpush1.msra.mxu0 0.0
    %1441 = vmatprep.subr.mxu0 0.0
    %1442 = vmatpush1.msra.mxu0 0.0
    %1443 = vmatprep.subr.mxu0 0.0
    %1444 = vmatpush1.msra.mxu0 0.0
    %1445 = vmatprep.subr.mxu0 0.0
    %1446 = vmatpush1.msra.mxu0 0.0
    %1447 = vmatprep.subr.mxu0 0.0
    %1448 = vmatpush1.msra.mxu0 0.0
    %1449 = vmatprep.subr.mxu0 0.0
    %1450 = vmatpush1.msra.mxu0 0.0
    %1451 = vmatprep.subr.mxu0 0.0
    %1452 = vmatpush1.msra.mxu0 0.0
    %1453 = vmatprep.subr.mxu0 0.0
    %1454 = vmatpush1.msra.mxu0 0.0
    %1455 = vmatprep.subr.mxu0 0.0
    %1456 = vmatpush1.msra.mxu0 0.0
    %1457 = vmatprep.subr.mxu0 0.0
    %1458 = vmatpush1.msra.mxu0 0.0
    %1459 = vmatprep.subr.mxu0 0.0
    %1460 = vmatpush1.msra.mxu0 %v1424
    %1461 = vmatprep.subr.mxu0 0.0
    %1462 = vmatpush2.msra.mxu0 0.0
    %1463 = vmatprep.subr.mxu0 0.0
    %1464 = vmatpush2.msra.mxu0 0.0
    %1465 = vmatprep.subr.mxu0 0.0
    %1466 = vmatpush2.msra.mxu0 0.0
    %1467 = vmatprep.subr.mxu0 0.0
    %1468 = vmatpush2.msra.mxu0 0.0
    %1469 = vmatprep.subr.mxu0 0.0
    %1470 = vmatpush2.msra.mxu0 0.0
    %1471 = vmatprep.subr.mxu0 0.0
    %1472 = vmatpush2.msra.mxu0 0.0
    %1473 = vmatprep.subr.mxu0 0.0
    %1474 = vmatpush2.msra.mxu0 0.0
    %1475 = vmatprep.subr.mxu0 0.0
    %1476 = vmatpush2.msra.mxu0 0.0
    %1477 = vmatprep.subr.mxu0 0.0
    %1478 = vmatpush2.msra.mxu0 0.0
    %1479 = vmatprep.subr.mxu0 0.0
    %1480 = vmatpush2.msra.mxu0 0.0
    %1481 = vmatprep.subr.mxu0 0.0
    %1482 = vmatpush2.msra.mxu0 0.0
    %1483 = vmatprep.subr.mxu0 0.0
    %1484 = vmatpush2.msra.mxu0 0.0
    %1485 = vmatprep.subr.mxu0 0.0
    %1486 = vmatpush2.msra.mxu0 0.0
    %1487 = vmatprep.subr.mxu0 0.0
    %1488 = vmatpush2.msra.mxu0 0.0
    %1489 = vmatprep.subr.mxu0 0.0
    %1490 = vmatpush2.msra.mxu0 0.0
    %1491 = vmatprep.subr.mxu0 0.0
    %1492 = vmatpush2.msra.mxu0 0.0
    %1493 = vmatprep.mubr.f32.mxu0 0.0
    %1494 = vmatmul.mubr.f32.gmra.mxu0 %v1427
    %v1495 = vpop.f32.mrf.mxu0
    %v1496 = vadd.f32 0.0, %v1495
    %v1497 = vpop.f32.mrf.mxu0
    %1498 = vdwg.mxu0
    %1499 = vst.msk [vmem:[#allocation2] sm:$0xff] %vm172, %v1496
    %1500 = vrot.lane.b32.xlu0 %v1320, 112
    %v1501 = vpop.permute.xlu0 %1500
    %1502 = vrot.lane.b32.xlu0 %v1320, 80
    %v1503 = vpop.permute.xlu0 %1502
    %v1504 = vsel %vm172, %v1501, 0
    %v1506 = vsel %vm172, %v1503, 0
    %1508 = vmatprep.subr.mxu0 0.0
    %1509 = vmatpush1.xpose.msra.mxu0 0.0
    %1510 = vmatprep.subr.mxu0 0.0
    %1511 = vmatpush1.xpose.msra.mxu0 0.0
    %1512 = vmatprep.subr.mxu0 0.0
    %1513 = vmatpush1.xpose.msra.mxu0 0.0
    %1514 = vmatprep.subr.mxu0 0.0
    %1515 = vmatpush1.xpose.msra.mxu0 0.0
    %1516 = vmatprep.subr.mxu0 0.0
    %1517 = vmatpush1.xpose.msra.mxu0 0.0
    %1518 = vmatprep.subr.mxu0 0.0
    %1519 = vmatpush1.xpose.msra.mxu0 0.0
    %1520 = vmatprep.subr.mxu0 0.0
    %1521 = vmatpush1.xpose.msra.mxu0 0.0
    %1522 = vmatprep.subr.mxu0 0.0
    %1523 = vmatpush1.xpose.msra.mxu0 0.0
    %1524 = vmatprep.subr.mxu0 0.0
    %1525 = vmatpush1.xpose.msra.mxu0 0.0
    %1526 = vmatprep.subr.mxu0 0.0
    %1527 = vmatpush1.xpose.msra.mxu0 0.0
    %1528 = vmatprep.subr.mxu0 0.0
    %1529 = vmatpush1.xpose.msra.mxu0 0.0
    %1530 = vmatprep.subr.mxu0 0.0
    %1531 = vmatpush1.xpose.msra.mxu0 0.0
    %1532 = vmatprep.subr.mxu0 0.0
    %1533 = vmatpush1.xpose.msra.mxu0 0.0
    %1534 = vmatprep.subr.mxu0 0.0
    %1535 = vmatpush1.xpose.msra.mxu0 0.0
    %1536 = vmatprep.subr.mxu0 0.0
    %1537 = vmatpush1.xpose.msra.mxu0 0.0
    %1538 = vmatprep.subr.mxu0 0.0
    %1539 = vmatpush1.xpose.msra.mxu0 %v1506
    %1540 = vmatprep.subr.mxu0 0.0
    %1541 = vmatpush2.xpose.msra.mxu0 0.0
    %1542 = vmatprep.subr.mxu0 0.0
    %1543 = vmatpush2.xpose.msra.mxu0 0.0
    %1544 = vmatprep.subr.mxu0 0.0
    %1545 = vmatpush2.xpose.msra.mxu0 0.0
    %1546 = vmatprep.subr.mxu0 0.0
    %1547 = vmatpush2.xpose.msra.mxu0 0.0
    %1548 = vmatprep.subr.mxu0 0.0
    %1549 = vmatpush2.xpose.msra.mxu0 0.0
    %1550 = vmatprep.subr.mxu0 0.0
    %1551 = vmatpush2.xpose.msra.mxu0 0.0
    %1552 = vmatprep.subr.mxu0 0.0
    %1553 = vmatpush2.xpose.msra.mxu0 0.0
    %1554 = vmatprep.subr.mxu0 0.0
    %1555 = vmatpush2.xpose.msra.mxu0 0.0
    %1556 = vmatprep.subr.mxu0 0.0
    %1557 = vmatpush2.xpose.msra.mxu0 0.0
    %1558 = vmatprep.subr.mxu0 0.0
    %1559 = vmatpush2.xpose.msra.mxu0 0.0
    %1560 = vmatprep.subr.mxu0 0.0
    %1561 = vmatpush2.xpose.msra.mxu0 0.0
    %1562 = vmatprep.subr.mxu0 0.0
    %1563 = vmatpush2.xpose.msra.mxu0 0.0
    %1564 = vmatprep.subr.mxu0 0.0
    %1565 = vmatpush2.xpose.msra.mxu0 0.0
    %1566 = vmatprep.subr.mxu0 0.0
    %1567 = vmatpush2.xpose.msra.mxu0 0.0
    %1568 = vmatprep.subr.mxu0 0.0
    %1569 = vmatpush2.xpose.msra.mxu0 0.0
    %1570 = vmatprep.subr.mxu0 0.0
    %1571 = vmatpush2.xpose.msra.mxu0 0.0
    %1572 = vmatprep.mubr.f32.mxu0 0.0
    %1573 = vmatmul.mubr.f32.gmra.mxu0 %v1504
    %v1574 = vpop.f32.mrf.mxu0
    %v1575 = vadd.f32 0.0, %v1574
    %v1576 = vpop.f32.mrf.mxu0
    %1577 = vdwg.mxu0
    %v1578 = vmul.f32 %v1575, 0.25
    %v1579 = vadd.f32 %v1578, %v1410
    %v1580 = vsel %vm253, %v1579, -inf
    %1581 = vmax.xlane.f32.xlu0 %v1580
    %v1582 = vpop.xlane.xlu0 %1581
    %v1583 = vsub.f32 %v1579, %v1582
    %v1584 = vmul.f32 %v1583, 1.442695
    %v1585 = vpow.pop %v1584
    %v1586 = vsel %vm253, %v1585, 0.0
    %1587 = vadd.xlane.f32.xlu0 %v1586
    %v1588 = vpop.xlane.xlu0 %1587
    %v1589 = vrcp.pop %v1588
    %v1590 = vmul.f32 %v1585, %v1589
    %1591 = vrot.lane.b32.xlu0 %v1320, 48
    %v1592 = vpop.permute.xlu0 %1591
    %v1595 = vsel %vm253, %v1590, 0
    %1597 = vmatprep.subr.mxu0 0.0
    %1598 = vmatpush1.msra.mxu0 0.0
    %1599 = vmatprep.subr.mxu0 0.0
    %1600 = vmatpush1.msra.mxu0 0.0
    %1601 = vmatprep.subr.mxu0 0.0
    %1602 = vmatpush1.msra.mxu0 0.0
    %1603 = vmatprep.subr.mxu0 0.0
    %1604 = vmatpush1.msra.mxu0 0.0
    %1605 = vmatprep.subr.mxu0 0.0
    %1606 = vmatpush1.msra.mxu0 0.0
    %1607 = vmatprep.subr.mxu0 0.0
    %1608 = vmatpush1.msra.mxu0 0.0
    %1609 = vmatprep.subr.mxu0 0.0
    %1610 = vmatpush1.msra.mxu0 0.0
    %1611 = vmatprep.subr.mxu0 0.0
    %1612 = vmatpush1.msra.mxu0 0.0
    %1613 = vmatprep.subr.mxu0 0.0
    %1614 = vmatpush1.msra.mxu0 0.0
    %1615 = vmatprep.subr.mxu0 0.0
    %1616 = vmatpush1.msra.mxu0 0.0
    %1617 = vmatprep.subr.mxu0 0.0
    %1618 = vmatpush1.msra.mxu0 0.0
    %1619 = vmatprep.subr.mxu0 0.0
    %1620 = vmatpush1.msra.mxu0 0.0
    %1621 = vmatprep.subr.mxu0 0.0
    %1622 = vmatpush1.msra.mxu0 0.0
    %1623 = vmatprep.subr.mxu0 0.0
    %1624 = vmatpush1.msra.mxu0 0.0
    %1625 = vmatprep.subr.mxu0 0.0
    %1626 = vmatpush1.msra.mxu0 0.0
    %1627 = vmatprep.subr.mxu0 0.0
    %1628 = vmatpush1.msra.mxu0 %v1592
    %1629 = vmatprep.subr.mxu0 0.0
    %1630 = vmatpush2.msra.mxu0 0.0
    %1631 = vmatprep.subr.mxu0 0.0
    %1632 = vmatpush2.msra.mxu0 0.0
    %1633 = vmatprep.subr.mxu0 0.0
    %1634 = vmatpush2.msra.mxu0 0.0
    %1635 = vmatprep.subr.mxu0 0.0
    %1636 = vmatpush2.msra.mxu0 0.0
    %1637 = vmatprep.subr.mxu0 0.0
    %1638 = vmatpush2.msra.mxu0 0.0
    %1639 = vmatprep.subr.mxu0 0.0
    %1640 = vmatpush2.msra.mxu0 0.0
    %1641 = vmatprep.subr.mxu0 0.0
    %1642 = vmatpush2.msra.mxu0 0.0
    %1643 = vmatprep.subr.mxu0 0.0
    %1644 = vmatpush2.msra.mxu0 0.0
    %1645 = vmatprep.subr.mxu0 0.0
    %1646 = vmatpush2.msra.mxu0 0.0
    %1647 = vmatprep.subr.mxu0 0.0
    %1648 = vmatpush2.msra.mxu0 0.0
    %1649 = vmatprep.subr.mxu0 0.0
    %1650 = vmatpush2.msra.mxu0 0.0
    %1651 = vmatprep.subr.mxu0 0.0
    %1652 = vmatpush2.msra.mxu0 0.0
    %1653 = vmatprep.subr.mxu0 0.0
    %1654 = vmatpush2.msra.mxu0 0.0
    %1655 = vmatprep.subr.mxu0 0.0
    %1656 = vmatpush2.msra.mxu0 0.0
    %1657 = vmatprep.subr.mxu0 0.0
    %1658 = vmatpush2.msra.mxu0 0.0
    %1659 = vmatprep.subr.mxu0 0.0
    %1660 = vmatpush2.msra.mxu0 0.0
    %1661 = vmatprep.mubr.f32.mxu0 0.0
    %1662 = vmatmul.mubr.f32.gmra.mxu0 %v1595
    %v1663 = vpop.f32.mrf.mxu0
    %v1664 = vadd.f32 0.0, %v1663
    %v1665 = vpop.f32.mrf.mxu0
    %1666 = vdwg.mxu0
    %1668 = vrot.lane.b32.xlu0 %v1664, 16
    %v1669 = vpop.permute.xlu0 %1668
    %1671 = vst.msk [vmem:[#allocation2] sm:$0xff] %vm513, %v1669
    %v1672 = vld [vmem:[%s1 + $0x1] sm:$0x1]
    %1674 = vrot.lane.b32.xlu0 %v1325, 96
    %v1675 = vpop.permute.xlu0 %1674
    %v1676 = vsel %vm172, %v1325, 0
    %v1678 = vsel %vm172, %v1675, 0
    %1680 = vmatprep.subr.mxu0 0.0
    %1681 = vmatpush1.xpose.msra.mxu0 0.0
    %1682 = vmatprep.subr.mxu0 0.0
    %1683 = vmatpush1.xpose.msra.mxu0 0.0
    %1684 = vmatprep.subr.mxu0 0.0
    %1685 = vmatpush1.xpose.msra.mxu0 0.0
    %1686 = vmatprep.subr.mxu0 0.0
    %1687 = vmatpush1.xpose.msra.mxu0 0.0
    %1688 = vmatprep.subr.mxu0 0.0
    %1689 = vmatpush1.xpose.msra.mxu0 0.0
    %1690 = vmatprep.subr.mxu0 0.0
    %1691 = vmatpush1.xpose.msra.mxu0 0.0
    %1692 = vmatprep.subr.mxu0 0.0
    %1693 = vmatpush1.xpose.msra.mxu0 0.0
    %1694 = vmatprep.subr.mxu0 0.0
    %1695 = vmatpush1.xpose.msra.mxu0 0.0
    %1696 = vmatprep.subr.mxu0 0.0
    %1697 = vmatpush1.xpose.msra.mxu0 0.0
    %1698 = vmatprep.subr.mxu0 0.0
    %1699 = vmatpush1.xpose.msra.mxu0 0.0
    %1700 = vmatprep.subr.mxu0 0.0
    %1701 = vmatpush1.xpose.msra.mxu0 0.0
    %1702 = vmatprep.subr.mxu0 0.0
    %1703 = vmatpush1.xpose.msra.mxu0 0.0
    %1704 = vmatprep.subr.mxu0 0.0
    %1705 = vmatpush1.xpose.msra.mxu0 0.0
    %1706 = vmatprep.subr.mxu0 0.0
    %1707 = vmatpush1.xpose.msra.mxu0 0.0
    %1708 = vmatprep.subr.mxu0 0.0
    %1709 = vmatpush1.xpose.msra.mxu0 0.0
    %1710 = vmatprep.subr.mxu0 0.0
    %1711 = vmatpush1.xpose.msra.mxu0 %v1678
    %1712 = vmatprep.subr.mxu0 0.0
    %1713 = vmatpush2.xpose.msra.mxu0 0.0
    %1714 = vmatprep.subr.mxu0 0.0
    %1715 = vmatpush2.xpose.msra.mxu0 0.0
    %1716 = vmatprep.subr.mxu0 0.0
    %1717 = vmatpush2.xpose.msra.mxu0 0.0
    %1718 = vmatprep.subr.mxu0 0.0
    %1719 = vmatpush2.xpose.msra.mxu0 0.0
    %1720 = vmatprep.subr.mxu0 0.0
    %1721 = vmatpush2.xpose.msra.mxu0 0.0
    %1722 = vmatprep.subr.mxu0 0.0
    %1723 = vmatpush2.xpose.msra.mxu0 0.0
    %1724 = vmatprep.subr.mxu0 0.0
    %1725 = vmatpush2.xpose.msra.mxu0 0.0
    %1726 = vmatprep.subr.mxu0 0.0
    %1727 = vmatpush2.xpose.msra.mxu0 0.0
    %1728 = vmatprep.subr.mxu0 0.0
    %1729 = vmatpush2.xpose.msra.mxu0 0.0
    %1730 = vmatprep.subr.mxu0 0.0
    %1731 = vmatpush2.xpose.msra.mxu0 0.0
    %1732 = vmatprep.subr.mxu0 0.0
    %1733 = vmatpush2.xpose.msra.mxu0 0.0
    %1734 = vmatprep.subr.mxu0 0.0
    %1735 = vmatpush2.xpose.msra.mxu0 0.0
    %1736 = vmatprep.subr.mxu0 0.0
    %1737 = vmatpush2.xpose.msra.mxu0 0.0
    %1738 = vmatprep.subr.mxu0 0.0
    %1739 = vmatpush2.xpose.msra.mxu0 0.0
    %1740 = vmatprep.subr.mxu0 0.0
    %1741 = vmatpush2.xpose.msra.mxu0 0.0
    %1742 = vmatprep.subr.mxu0 0.0
    %1743 = vmatpush2.xpose.msra.mxu0 0.0
    %1744 = vmatprep.mubr.f32.mxu0 0.0
    %1745 = vmatmul.mubr.f32.gmra.mxu0 %v1676
    %v1746 = vpop.f32.mrf.mxu0
    %v1747 = vadd.f32 0.0, %v1746
    %v1748 = vpop.f32.mrf.mxu0
    %1749 = vdwg.mxu0
    %v1750 = vmul.f32 %v1747, 0.25
    %v1751 = vlaneseq
    %v1752 = vshrl.u32 %v1751, 7
    %v1753 = vsub.s32 0, %v1752
    %v1754 = vrot.slane %v1672, %v1753
    %v1755 = vadd.f32 %v1750, %v1754
    %v1756 = vsel %vm253, %v1755, -inf
    %1757 = vmax.xlane.f32.xlu0 %v1756
    %v1758 = vpop.xlane.xlu0 %1757
    %v1759 = vsub.f32 %v1755, %v1758
    %v1760 = vmul.f32 %v1759, 1.442695
    %v1761 = vpow.pop %v1760
    %v1762 = vsel %vm253, %v1761, 0.0
    %1763 = vadd.xlane.f32.xlu0 %v1762
    %v1764 = vpop.xlane.xlu0 %1763
    %v1765 = vrcp.pop %v1764
    %v1766 = vmul.f32 %v1761, %v1765
    %1767 = vrot.lane.b32.xlu0 %v1325, 64
    %v1768 = vpop.permute.xlu0 %1767
    %v1771 = vsel %vm253, %v1766, 0
    %1773 = vmatprep.subr.mxu0 0.0
    %1774 = vmatpush1.msra.mxu0 0.0
    %1775 = vmatprep.subr.mxu0 0.0
    %1776 = vmatpush1.msra.mxu0 0.0
    %1777 = vmatprep.subr.mxu0 0.0
    %1778 = vmatpush1.msra.mxu0 0.0
    %1779 = vmatprep.subr.mxu0 0.0
    %1780 = vmatpush1.msra.mxu0 0.0
    %1781 = vmatprep.subr.mxu0 0.0
    %1782 = vmatpush1.msra.mxu0 0.0
    %1783 = vmatprep.subr.mxu0 0.0
    %1784 = vmatpush1.msra.mxu0 0.0
    %1785 = vmatprep.subr.mxu0 0.0
    %1786 = vmatpush1.msra.mxu0 0.0
    %1787 = vmatprep.subr.mxu0 0.0
    %1788 = vmatpush1.msra.mxu0 0.0
    %1789 = vmatprep.subr.mxu0 0.0
    %1790 = vmatpush1.msra.mxu0 0.0
    %1791 = vmatprep.subr.mxu0 0.0
    %1792 = vmatpush1.msra.mxu0 0.0
    %1793 = vmatprep.subr.mxu0 0.0
    %1794 = vmatpush1.msra.mxu0 0.0
    %1795 = vmatprep.subr.mxu0 0.0
    %1796 = vmatpush1.msra.mxu0 0.0
    %1797 = vmatprep.subr.mxu0 0.0
    %1798 = vmatpush1.msra.mxu0 0.0
    %1799 = vmatprep.subr.mxu0 0.0
    %1800 = vmatpush1.msra.mxu0 0.0
    %1801 = vmatprep.subr.mxu0 0.0
    %1802 = vmatpush1.msra.mxu0 0.0
    %1803 = vmatprep.subr.mxu0 0.0
    %1804 = vmatpush1.msra.mxu0 %v1768
    %1805 = vmatprep.subr.mxu0 0.0
    %1806 = vmatpush2.msra.mxu0 0.0
    %1807 = vmatprep.subr.mxu0 0.0
    %1808 = vmatpush2.msra.mxu0 0.0
    %1809 = vmatprep.subr.mxu0 0.0
    %1810 = vmatpush2.msra.mxu0 0.0
    %1811 = vmatprep.subr.mxu0 0.0
    %1812 = vmatpush2.msra.mxu0 0.0
    %1813 = vmatprep.subr.mxu0 0.0
    %1814 = vmatpush2.msra.mxu0 0.0
    %1815 = vmatprep.subr.mxu0 0.0
    %1816 = vmatpush2.msra.mxu0 0.0
    %1817 = vmatprep.subr.mxu0 0.0
    %1818 = vmatpush2.msra.mxu0 0.0
    %1819 = vmatprep.subr.mxu0 0.0
    %1820 = vmatpush2.msra.mxu0 0.0
    %1821 = vmatprep.subr.mxu0 0.0
    %1822 = vmatpush2.msra.mxu0 0.0
    %1823 = vmatprep.subr.mxu0 0.0
    %1824 = vmatpush2.msra.mxu0 0.0
    %1825 = vmatprep.subr.mxu0 0.0
    %1826 = vmatpush2.msra.mxu0 0.0
    %1827 = vmatprep.subr.mxu0 0.0
    %1828 = vmatpush2.msra.mxu0 0.0
    %1829 = vmatprep.subr.mxu0 0.0
    %1830 = vmatpush2.msra.mxu0 0.0
    %1831 = vmatprep.subr.mxu0 0.0
    %1832 = vmatpush2.msra.mxu0 0.0
    %1833 = vmatprep.subr.mxu0 0.0
    %1834 = vmatpush2.msra.mxu0 0.0
    %1835 = vmatprep.subr.mxu0 0.0
    %1836 = vmatpush2.msra.mxu0 0.0
    %1837 = vmatprep.mubr.f32.mxu0 0.0
    %1838 = vmatmul.mubr.f32.gmra.mxu0 %v1771
    %v1839 = vpop.f32.mrf.mxu0
    %v1840 = vadd.f32 0.0, %v1839
    %v1841 = vpop.f32.mrf.mxu0
    %1842 = vdwg.mxu0
    %1843 = vst.msk [vmem:[#allocation2 + $0x8] sm:$0xff] %vm172, %v1840
    %1844 = vrot.lane.b32.xlu0 %v1325, 112
    %v1845 = vpop.permute.xlu0 %1844
    %1846 = vrot.lane.b32.xlu0 %v1325, 80
    %v1847 = vpop.permute.xlu0 %1846
    %v1848 = vsel %vm172, %v1845, 0
    %v1850 = vsel %vm172, %v1847, 0
    %1852 = vmatprep.subr.mxu0 0.0
    %1853 = vmatpush1.xpose.msra.mxu0 0.0
    %1854 = vmatprep.subr.mxu0 0.0
    %1855 = vmatpush1.xpose.msra.mxu0 0.0
    %1856 = vmatprep.subr.mxu0 0.0
    %1857 = vmatpush1.xpose.msra.mxu0 0.0
    %1858 = vmatprep.subr.mxu0 0.0
    %1859 = vmatpush1.xpose.msra.mxu0 0.0
    %1860 = vmatprep.subr.mxu0 0.0
    %1861 = vmatpush1.xpose.msra.mxu0 0.0
    %1862 = vmatprep.subr.mxu0 0.0
    %1863 = vmatpush1.xpose.msra.mxu0 0.0
    %1864 = vmatprep.subr.mxu0 0.0
    %1865 = vmatpush1.xpose.msra.mxu0 0.0
    %1866 = vmatprep.subr.mxu0 0.0
    %1867 = vmatpush1.xpose.msra.mxu0 0.0
    %1868 = vmatprep.subr.mxu0 0.0
    %1869 = vmatpush1.xpose.msra.mxu0 0.0
    %1870 = vmatprep.subr.mxu0 0.0
    %1871 = vmatpush1.xpose.msra.mxu0 0.0
    %1872 = vmatprep.subr.mxu0 0.0
    %1873 = vmatpush1.xpose.msra.mxu0 0.0
    %1874 = vmatprep.subr.mxu0 0.0
    %1875 = vmatpush1.xpose.msra.mxu0 0.0
    %1876 = vmatprep.subr.mxu0 0.0
    %1877 = vmatpush1.xpose.msra.mxu0 0.0
    %1878 = vmatprep.subr.mxu0 0.0
    %1879 = vmatpush1.xpose.msra.mxu0 0.0
    %1880 = vmatprep.subr.mxu0 0.0
    %1881 = vmatpush1.xpose.msra.mxu0 0.0
    %1882 = vmatprep.subr.mxu0 0.0
    %1883 = vmatpush1.xpose.msra.mxu0 %v1850
    %1884 = vmatprep.subr.mxu0 0.0
    %1885 = vmatpush2.xpose.msra.mxu0 0.0
    %1886 = vmatprep.subr.mxu0 0.0
    %1887 = vmatpush2.xpose.msra.mxu0 0.0
    %1888 = vmatprep.subr.mxu0 0.0
    %1889 = vmatpush2.xpose.msra.mxu0 0.0
    %1890 = vmatprep.subr.mxu0 0.0
    %1891 = vmatpush2.xpose.msra.mxu0 0.0
    %1892 = vmatprep.subr.mxu0 0.0
    %1893 = vmatpush2.xpose.msra.mxu0 0.0
    %1894 = vmatprep.subr.mxu0 0.0
    %1895 = vmatpush2.xpose.msra.mxu0 0.0
    %1896 = vmatprep.subr.mxu0 0.0
    %1897 = vmatpush2.xpose.msra.mxu0 0.0
    %1898 = vmatprep.subr.mxu0 0.0
    %1899 = vmatpush2.xpose.msra.mxu0 0.0
    %1900 = vmatprep.subr.mxu0 0.0
    %1901 = vmatpush2.xpose.msra.mxu0 0.0
    %1902 = vmatprep.subr.mxu0 0.0
    %1903 = vmatpush2.xpose.msra.mxu0 0.0
    %1904 = vmatprep.subr.mxu0 0.0
    %1905 = vmatpush2.xpose.msra.mxu0 0.0
    %1906 = vmatprep.subr.mxu0 0.0
    %1907 = vmatpush2.xpose.msra.mxu0 0.0
    %1908 = vmatprep.subr.mxu0 0.0
    %1909 = vmatpush2.xpose.msra.mxu0 0.0
    %1910 = vmatprep.subr.mxu0 0.0
    %1911 = vmatpush2.xpose.msra.mxu0 0.0
    %1912 = vmatprep.subr.mxu0 0.0
    %1913 = vmatpush2.xpose.msra.mxu0 0.0
    %1914 = vmatprep.subr.mxu0 0.0
    %1915 = vmatpush2.xpose.msra.mxu0 0.0
    %1916 = vmatprep.mubr.f32.mxu0 0.0
    %1917 = vmatmul.mubr.f32.gmra.mxu0 %v1848
    %v1918 = vpop.f32.mrf.mxu0
    %v1919 = vadd.f32 0.0, %v1918
    %v1920 = vpop.f32.mrf.mxu0
    %1921 = vdwg.mxu0
    %v1922 = vmul.f32 %v1919, 0.25
    %v1923 = vadd.f32 %v1922, %v1754
    %v1924 = vsel %vm253, %v1923, -inf
    %1925 = vmax.xlane.f32.xlu0 %v1924
    %v1926 = vpop.xlane.xlu0 %1925
    %v1927 = vsub.f32 %v1923, %v1926
    %v1928 = vmul.f32 %v1927, 1.442695
    %v1929 = vpow.pop %v1928
    %v1930 = vsel %vm253, %v1929, 0.0
    %1931 = vadd.xlane.f32.xlu0 %v1930
    %v1932 = vpop.xlane.xlu0 %1931
    %v1933 = vrcp.pop %v1932
    %v1934 = vmul.f32 %v1929, %v1933
    %1935 = vrot.lane.b32.xlu0 %v1325, 48
    %v1936 = vpop.permute.xlu0 %1935
    %v1939 = vsel %vm253, %v1934, 0
    %1941 = vmatprep.subr.mxu0 0.0
    %1942 = vmatpush1.msra.mxu0 0.0
    %1943 = vmatprep.subr.mxu0 0.0
    %1944 = vmatpush1.msra.mxu0 0.0
    %1945 = vmatprep.subr.mxu0 0.0
    %1946 = vmatpush1.msra.mxu0 0.0
    %1947 = vmatprep.subr.mxu0 0.0
    %1948 = vmatpush1.msra.mxu0 0.0
    %1949 = vmatprep.subr.mxu0 0.0
    %1950 = vmatpush1.msra.mxu0 0.0
    %1951 = vmatprep.subr.mxu0 0.0
    %1952 = vmatpush1.msra.mxu0 0.0
    %1953 = vmatprep.subr.mxu0 0.0
    %1954 = vmatpush1.msra.mxu0 0.0
    %1955 = vmatprep.subr.mxu0 0.0
    %1956 = vmatpush1.msra.mxu0 0.0
    %1957 = vmatprep.subr.mxu0 0.0
    %1958 = vmatpush1.msra.mxu0 0.0
    %1959 = vmatprep.subr.mxu0 0.0
    %1960 = vmatpush1.msra.mxu0 0.0
    %1961 = vmatprep.subr.mxu0 0.0
    %1962 = vmatpush1.msra.mxu0 0.0
    %1963 = vmatprep.subr.mxu0 0.0
    %1964 = vmatpush1.msra.mxu0 0.0
    %1965 = vmatprep.subr.mxu0 0.0
    %1966 = vmatpush1.msra.mxu0 0.0
    %1967 = vmatprep.subr.mxu0 0.0
    %1968 = vmatpush1.msra.mxu0 0.0
    %1969 = vmatprep.subr.mxu0 0.0
    %1970 = vmatpush1.msra.mxu0 0.0
    %1971 = vmatprep.subr.mxu0 0.0
    %1972 = vmatpush1.msra.mxu0 %v1936
    %1973 = vmatprep.subr.mxu0 0.0
    %1974 = vmatpush2.msra.mxu0 0.0
    %1975 = vmatprep.subr.mxu0 0.0
    %1976 = vmatpush2.msra.mxu0 0.0
    %1977 = vmatprep.subr.mxu0 0.0
    %1978 = vmatpush2.msra.mxu0 0.0
    %1979 = vmatprep.subr.mxu0 0.0
    %1980 = vmatpush2.msra.mxu0 0.0
    %1981 = vmatprep.subr.mxu0 0.0
    %1982 = vmatpush2.msra.mxu0 0.0
    %1983 = vmatprep.subr.mxu0 0.0
    %1984 = vmatpush2.msra.mxu0 0.0
    %1985 = vmatprep.subr.mxu0 0.0
    %1986 = vmatpush2.msra.mxu0 0.0
    %1987 = vmatprep.subr.mxu0 0.0
    %1988 = vmatpush2.msra.mxu0 0.0
    %1989 = vmatprep.subr.mxu0 0.0
    %1990 = vmatpush2.msra.mxu0 0.0
    %1991 = vmatprep.subr.mxu0 0.0
    %1992 = vmatpush2.msra.mxu0 0.0
    %1993 = vmatprep.subr.mxu0 0.0
    %1994 = vmatpush2.msra.mxu0 0.0
    %1995 = vmatprep.subr.mxu0 0.0
    %1996 = vmatpush2.msra.mxu0 0.0
    %1997 = vmatprep.subr.mxu0 0.0
    %1998 = vmatpush2.msra.mxu0 0.0
    %1999 = vmatprep.subr.mxu0 0.0
    %2000 = vmatpush2.msra.mxu0 0.0
    %2001 = vmatprep.subr.mxu0 0.0
    %2002 = vmatpush2.msra.mxu0 0.0
    %2003 = vmatprep.subr.mxu0 0.0
    %2004 = vmatpush2.msra.mxu0 0.0
    %2005 = vmatprep.mubr.f32.mxu0 0.0
    %2006 = vmatmul.mubr.f32.gmra.mxu0 %v1939
    %v2007 = vpop.f32.mrf.mxu0
    %v2008 = vadd.f32 0.0, %v2007
    %v2009 = vpop.f32.mrf.mxu0
    %2010 = vdwg.mxu0
    %2012 = vrot.lane.b32.xlu0 %v2008, 16
    %v2013 = vpop.permute.xlu0 %2012
    %2015 = vst.msk [vmem:[#allocation2 + $0x8] sm:$0xff] %vm513, %v2013
    %v2016 = vld [vmem:[#allocation2] sm:$0xff]
    %v2017 = vld [vmem:[#allocation2 + $0x8] sm:$0xff]
    %v2018 = vld [vmem:[%s3 + $0xb] sm:$0x1]
    %v2019 = vlaneseq
    %v2020 = vshrl.u32 %v2019, 7
    %v2021 = vsub.s32 0, %v2020
    %v2022 = vrot.slane %v2018, %v2021
    %v2024 = vsel %vm22, %v2016, 0
    %v2027 = vsel %vm22, %v2017, 0
    %2029 = vmatprep.subr.mxu0 0.0
    %2030 = vmatpush1.msra.mxu0 0.0
    %2031 = vmatprep.subr.mxu0 0.0
    %2032 = vmatpush1.msra.mxu0 0.0
    %2033 = vmatprep.subr.mxu0 0.0
    %2034 = vmatpush1.msra.mxu0 0.0
    %2035 = vmatprep.subr.mxu0 0.0
    %2036 = vmatpush1.msra.mxu0 0.0
    %2037 = vmatprep.subr.mxu0 0.0
    %2038 = vmatpush1.msra.mxu0 0.0
    %2039 = vmatprep.subr.mxu0 0.0
    %2040 = vmatpush1.msra.mxu0 0.0
    %2041 = vmatprep.subr.mxu0 0.0
    %2042 = vmatpush1.msra.mxu0 0.0
    %2043 = vmatprep.subr.mxu0 0.0
    %2044 = vmatpush1.msra.mxu0 0.0
    %2045 = vmatprep.subr.mxu0 0.0
    %2046 = vmatpush1.msra.mxu0 0.0
    %2047 = vmatprep.subr.mxu0 0.0
    %2048 = vmatpush1.msra.mxu0 0.0
    %2049 = vmatprep.subr.mxu0 0.0
    %2050 = vmatpush1.msra.mxu0 0.0
    %2051 = vmatprep.subr.mxu0 0.0
    %2052 = vmatpush1.msra.mxu0 0.0
    %2053 = vmatprep.subr.mxu0 0.0
    %2054 = vmatpush1.msra.mxu0 %v1229
    %2055 = vmatprep.subr.mxu0 0.0
    %2056 = vmatpush1.msra.mxu0 %v1228
    %2057 = vmatprep.subr.mxu0 0.0
    %2058 = vmatpush1.msra.mxu0 %v1227
    %2059 = vmatprep.subr.mxu0 0.0
    %2060 = vmatpush1.msra.mxu0 %v1226
    %2061 = vmatprep.subr.mxu0 0.0
    %2062 = vmatpush2.msra.mxu0 0.0
    %2063 = vmatprep.subr.mxu0 0.0
    %2064 = vmatpush2.msra.mxu0 0.0
    %2065 = vmatprep.subr.mxu0 0.0
    %2066 = vmatpush2.msra.mxu0 0.0
    %2067 = vmatprep.subr.mxu0 0.0
    %2068 = vmatpush2.msra.mxu0 0.0
    %2069 = vmatprep.subr.mxu0 0.0
    %2070 = vmatpush2.msra.mxu0 0.0
    %2071 = vmatprep.subr.mxu0 0.0
    %2072 = vmatpush2.msra.mxu0 0.0
    %2073 = vmatprep.subr.mxu0 0.0
    %2074 = vmatpush2.msra.mxu0 0.0
    %2075 = vmatprep.subr.mxu0 0.0
    %2076 = vmatpush2.msra.mxu0 0.0
    %2077 = vmatprep.subr.mxu0 0.0
    %2078 = vmatpush2.msra.mxu0 0.0
    %2079 = vmatprep.subr.mxu0 0.0
    %2080 = vmatpush2.msra.mxu0 0.0
    %2081 = vmatprep.subr.mxu0 0.0
    %2082 = vmatpush2.msra.mxu0 0.0
    %2083 = vmatprep.subr.mxu0 0.0
    %2084 = vmatpush2.msra.mxu0 0.0
    %2085 = vmatprep.subr.mxu0 0.0
    %2086 = vmatpush2.msra.mxu0 0.0
    %2087 = vmatprep.subr.mxu0 0.0
    %2088 = vmatpush2.msra.mxu0 0.0
    %2089 = vmatprep.subr.mxu0 0.0
    %2090 = vmatpush2.msra.mxu0 0.0
    %2091 = vmatprep.subr.mxu0 0.0
    %2092 = vmatpush2.msra.mxu0 0.0
    %2093 = vmatprep.mubr.f32.mxu0 0.0
    %2094 = vmatmul.mubr.f32.gmra.mxu0 %v2024
    %v2095 = vpop.f32.mrf.mxu0
    %v2096 = vadd.f32 %v2022, %v2095
    %v2097 = vpop.f32.mrf.mxu0
    %2098 = vmatprep.mubr.f32.mxu0 0.0
    %2099 = vmatmul.mubr.f32.gmra.mxu0 %v2027
    %v2100 = vpop.f32.mrf.mxu0
    %v2101 = vadd.f32 %v2022, %v2100
    %v2102 = vpop.f32.mrf.mxu0
    %2103 = vdwg.mxu0
    %v2104 = vadd.f32 %v2096, %v1220
    %v2105 = vadd.f32 %v2101, %v1221
    %v2106 = vld [vmem:[%s3 + $0xc] sm:$0x1]
    %v2107 = vld [vmem:[%s3 + $0xd] sm:$0x1]
    %v2108 = vsel %vm22, %v2104, 0.0
    %2109 = vadd.xlane.f32.xlu0 %v2108
    %v2110 = vpop.xlane.xlu0 %2109
    %v2111 = vsel %vm22, %v2105, 0.0
    %2112 = vadd.xlane.f32.xlu0 %v2111
    %v2113 = vpop.xlane.xlu0 %2112
    %v2114 = vmul.f32 %v2110, %v29
    %v2115 = vmul.f32 %v2113, %v29
    %v2116 = vsub.f32 %v2104, %v2114
    %v2117 = vsub.f32 %v2105, %v2115
    %v2118 = vmul.f32 %v2116, %v2116
    %v2119 = vmul.f32 %v2117, %v2117
    %v2120 = vsel %vm22, %v2118, 0.0
    %2121 = vadd.xlane.f32.xlu0 %v2120
    %v2122 = vpop.xlane.xlu0 %2121
    %v2123 = vsel %vm22, %v2119, 0.0
    %2124 = vadd.xlane.f32.xlu0 %v2123
    %v2125 = vpop.xlane.xlu0 %2124
    %v2126 = vmul.f32 %v2122, %v29
    %v2127 = vmul.f32 %v2125, %v29
    %v2128 = vadd.f32 %v2126, 1e-12
    %v2129 = vadd.f32 %v2127, 1e-12
    %v2130 = vrsqrt.pop %v2128
    %v2131 = vrsqrt.pop %v2129
    %v2132 = vmul.f32 %v2116, %v2130
    %v2133 = vmul.f32 %v2117, %v2131
    %v2134 = vlaneseq
    %v2135 = vshrl.u32 %v2134, 7
    %v2136 = vsub.s32 0, %v2135
    %v2137 = vrot.slane %v2106, %v2136
    %v2138 = vmul.f32 %v2132, %v2137
    %v2139 = vmul.f32 %v2133, %v2137
    %v2140 = vlaneseq
    %v2141 = vshrl.u32 %v2140, 7
    %v2142 = vsub.s32 0, %v2141
    %v2143 = vrot.slane %v2107, %v2142
    %v2144 = vadd.f32 %v2138, %v2143
    %v2145 = vadd.f32 %v2139, %v2143
    %v2146 = vld [vmem:[%s3 + $0xe] sm:$0x1]
    %v2147 = vlaneseq
    %v2148 = vshrl.u32 %v2147, 7
    %v2149 = vsub.s32 0, %v2148
    %v2150 = vrot.slane %v2146, %v2149
    %v2152 = vsel %vm22, %v2144, 0
    %v2155 = vsel %vm22, %v2145, 0
    %2157 = vmatprep.subr.mxu0 0.0
    %2158 = vmatpush1.msra.mxu0 0.0
    %2159 = vmatprep.subr.mxu0 0.0
    %2160 = vmatpush1.msra.mxu0 0.0
    %2161 = vmatprep.subr.mxu0 0.0
    %2162 = vmatpush1.msra.mxu0 0.0
    %2163 = vmatprep.subr.mxu0 0.0
    %2164 = vmatpush1.msra.mxu0 0.0
    %2165 = vmatprep.subr.mxu0 0.0
    %2166 = vmatpush1.msra.mxu0 0.0
    %2167 = vmatprep.subr.mxu0 0.0
    %2168 = vmatpush1.msra.mxu0 0.0
    %2169 = vmatprep.subr.mxu0 0.0
    %2170 = vmatpush1.msra.mxu0 0.0
    %2171 = vmatprep.subr.mxu0 0.0
    %2172 = vmatpush1.msra.mxu0 0.0
    %2173 = vmatprep.subr.mxu0 0.0
    %2174 = vmatpush1.msra.mxu0 0.0
    %2175 = vmatprep.subr.mxu0 0.0
    %2176 = vmatpush1.msra.mxu0 0.0
    %2177 = vmatprep.subr.mxu0 0.0
    %2178 = vmatpush1.msra.mxu0 0.0
    %2179 = vmatprep.subr.mxu0 0.0
    %2180 = vmatpush1.msra.mxu0 0.0
    %2181 = vmatprep.subr.mxu0 0.0
    %2182 = vmatpush1.msra.mxu0 %v1233
    %2183 = vmatprep.subr.mxu0 0.0
    %2184 = vmatpush1.msra.mxu0 %v1232
    %2185 = vmatprep.subr.mxu0 0.0
    %2186 = vmatpush1.msra.mxu0 %v1231
    %2187 = vmatprep.subr.mxu0 0.0
    %2188 = vmatpush1.msra.mxu0 %v1230
    %2189 = vmatprep.subr.mxu0 0.0
    %2190 = vmatpush2.msra.mxu0 0.0
    %2191 = vmatprep.subr.mxu0 0.0
    %2192 = vmatpush2.msra.mxu0 0.0
    %2193 = vmatprep.subr.mxu0 0.0
    %2194 = vmatpush2.msra.mxu0 0.0
    %2195 = vmatprep.subr.mxu0 0.0
    %2196 = vmatpush2.msra.mxu0 0.0
    %2197 = vmatprep.subr.mxu0 0.0
    %2198 = vmatpush2.msra.mxu0 0.0
    %2199 = vmatprep.subr.mxu0 0.0
    %2200 = vmatpush2.msra.mxu0 0.0
    %2201 = vmatprep.subr.mxu0 0.0
    %2202 = vmatpush2.msra.mxu0 0.0
    %2203 = vmatprep.subr.mxu0 0.0
    %2204 = vmatpush2.msra.mxu0 0.0
    %2205 = vmatprep.subr.mxu0 0.0
    %2206 = vmatpush2.msra.mxu0 0.0
    %2207 = vmatprep.subr.mxu0 0.0
    %2208 = vmatpush2.msra.mxu0 0.0
    %2209 = vmatprep.subr.mxu0 0.0
    %2210 = vmatpush2.msra.mxu0 0.0
    %2211 = vmatprep.subr.mxu0 0.0
    %2212 = vmatpush2.msra.mxu0 0.0
    %2213 = vmatprep.subr.mxu0 0.0
    %2214 = vmatpush2.msra.mxu0 0.0
    %2215 = vmatprep.subr.mxu0 0.0
    %2216 = vmatpush2.msra.mxu0 0.0
    %2217 = vmatprep.subr.mxu0 0.0
    %2218 = vmatpush2.msra.mxu0 0.0
    %2219 = vmatprep.subr.mxu0 0.0
    %2220 = vmatpush2.msra.mxu0 0.0
    %2221 = vmatprep.mubr.f32.mxu0 0.0
    %2222 = vmatmul.mubr.f32.gmra.mxu0 %v2152
    %v2223 = vpop.f32.mrf.mxu0
    %v2224 = vadd.f32 %v2150, %v2223
    %v2225 = vpop.f32.mrf.mxu0
    %2226 = vmatprep.mubr.f32.mxu0 0.0
    %2227 = vmatmul.mubr.f32.gmra.mxu0 %v2155
    %v2228 = vpop.f32.mrf.mxu0
    %v2229 = vadd.f32 %v2150, %v2228
    %v2230 = vpop.f32.mrf.mxu0
    %2231 = vdwg.mxu0
    %v2232 = vmul.f32 %v2224, 0.5
    %v2233 = vmul.f32 %v2229, 0.5
    %v2234 = vmul.f32 %v2224, 0.044715
    %v2235 = vmul.f32 %v2229, 0.044715
    %v2236 = vmul.f32 %v2234, %v2224
    %v2237 = vmul.f32 %v2235, %v2229
    %v2238 = vmul.f32 %v2236, %v2224
    %v2239 = vmul.f32 %v2237, %v2229
    %v2240 = vadd.f32 %v2224, %v2238
    %v2241 = vadd.f32 %v2229, %v2239
    %v2242 = vmul.f32 %v2240, 0.7978846
    %v2243 = vmul.f32 %v2241, 0.7978846
    %v2244 = vtanh.pop %v2242
    %v2245 = vtanh.pop %v2243
    %v2246 = vadd.f32 %v2244, 1.0
    %v2247 = vadd.f32 %v2245, 1.0
    %v2248 = vmul.f32 %v2232, %v2246
    %v2249 = vmul.f32 %v2233, %v2247
    %v2250 = vld [vmem:[%s3 + $0xf] sm:$0x1]
    %v2251 = vlaneseq
    %v2252 = vshrl.u32 %v2251, 7
    %v2253 = vsub.s32 0, %v2252
    %v2254 = vrot.slane %v2250, %v2253
    %v2256 = vsel %vm1098, %v2248, 0
    %v2259 = vsel %vm1098, %v2249, 0
    %2261 = vmatprep.subr.mxu0 0.0
    %2262 = vmatpush1.msra.mxu0 0.0
    %2263 = vmatprep.subr.mxu0 0.0
    %2264 = vmatpush1.msra.mxu0 0.0
    %2265 = vmatprep.subr.mxu0 0.0
    %2266 = vmatpush1.msra.mxu0 0.0
    %2267 = vmatprep.subr.mxu0 0.0
    %2268 = vmatpush1.msra.mxu0 0.0
    %2269 = vmatprep.subr.mxu0 0.0
    %2270 = vmatpush1.msra.mxu0 0.0
    %2271 = vmatprep.subr.mxu0 0.0
    %2272 = vmatpush1.msra.mxu0 0.0
    %2273 = vmatprep.subr.mxu0 0.0
    %2274 = vmatpush1.msra.mxu0 0.0
    %2275 = vmatprep.subr.mxu0 0.0
    %2276 = vmatpush1.msra.mxu0 0.0
    %2277 = vmatprep.subr.mxu0 0.0
    %2278 = vmatpush1.msra.mxu0 %v1241
    %2279 = vmatprep.subr.mxu0 0.0
    %2280 = vmatpush1.msra.mxu0 %v1240
    %2281 = vmatprep.subr.mxu0 0.0
    %2282 = vmatpush1.msra.mxu0 %v1239
    %2283 = vmatprep.subr.mxu0 0.0
    %2284 = vmatpush1.msra.mxu0 %v1238
    %2285 = vmatprep.subr.mxu0 0.0
    %2286 = vmatpush1.msra.mxu0 %v1237
    %2287 = vmatprep.subr.mxu0 0.0
    %2288 = vmatpush1.msra.mxu0 %v1236
    %2289 = vmatprep.subr.mxu0 0.0
    %2290 = vmatpush1.msra.mxu0 %v1235
    %2291 = vmatprep.subr.mxu0 0.0
    %2292 = vmatpush1.msra.mxu0 %v1234
    %2293 = vmatprep.subr.mxu0 0.0
    %2294 = vmatpush2.msra.mxu0 0.0
    %2295 = vmatprep.subr.mxu0 0.0
    %2296 = vmatpush2.msra.mxu0 0.0
    %2297 = vmatprep.subr.mxu0 0.0
    %2298 = vmatpush2.msra.mxu0 0.0
    %2299 = vmatprep.subr.mxu0 0.0
    %2300 = vmatpush2.msra.mxu0 0.0
    %2301 = vmatprep.subr.mxu0 0.0
    %2302 = vmatpush2.msra.mxu0 0.0
    %2303 = vmatprep.subr.mxu0 0.0
    %2304 = vmatpush2.msra.mxu0 0.0
    %2305 = vmatprep.subr.mxu0 0.0
    %2306 = vmatpush2.msra.mxu0 0.0
    %2307 = vmatprep.subr.mxu0 0.0
    %2308 = vmatpush2.msra.mxu0 0.0
    %2309 = vmatprep.subr.mxu0 0.0
    %2310 = vmatpush2.msra.mxu0 0.0
    %2311 = vmatprep.subr.mxu0 0.0
    %2312 = vmatpush2.msra.mxu0 0.0
    %2313 = vmatprep.subr.mxu0 0.0
    %2314 = vmatpush2.msra.mxu0 0.0
    %2315 = vmatprep.subr.mxu0 0.0
    %2316 = vmatpush2.msra.mxu0 0.0
    %2317 = vmatprep.subr.mxu0 0.0
    %2318 = vmatpush2.msra.mxu0 0.0
    %2319 = vmatprep.subr.mxu0 0.0
    %2320 = vmatpush2.msra.mxu0 0.0
    %2321 = vmatprep.subr.mxu0 0.0
    %2322 = vmatpush2.msra.mxu0 0.0
    %2323 = vmatprep.subr.mxu0 0.0
    %2324 = vmatpush2.msra.mxu0 0.0
    %2325 = vmatprep.mubr.f32.mxu0 0.0
    %2326 = vmatmul.mubr.f32.gmra.mxu0 %v2256
    %v2327 = vpop.f32.mrf.mxu0
    %v2328 = vadd.f32 %v2254, %v2327
    %v2329 = vpop.f32.mrf.mxu0
    %2330 = vmatprep.mubr.f32.mxu0 0.0
    %2331 = vmatmul.mubr.f32.gmra.mxu0 %v2259
    %v2332 = vpop.f32.mrf.mxu0
    %v2333 = vadd.f32 %v2254, %v2332
    %v2334 = vpop.f32.mrf.mxu0
    %2335 = vdwg.mxu0
    %v2336 = vadd.f32 %v2328, %v2144
    %v2337 = vadd.f32 %v2333, %v2145
    %v2338 = vld [vmem:[%s3 + $0x10] sm:$0x1]
    %v2339 = vld [vmem:[%s3 + $0x11] sm:$0x1]
    %v2340 = vsel %vm22, %v2336, 0.0
    %2341 = vadd.xlane.f32.xlu0 %v2340
    %v2342 = vpop.xlane.xlu0 %2341
    %v2343 = vsel %vm22, %v2337, 0.0
    %2344 = vadd.xlane.f32.xlu0 %v2343
    %v2345 = vpop.xlane.xlu0 %2344
    %v2346 = vmul.f32 %v2342, %v29
    %v2347 = vmul.f32 %v2345, %v29
    %v2348 = vsub.f32 %v2336, %v2346
    %v2349 = vsub.f32 %v2337, %v2347
    %v2350 = vmul.f32 %v2348, %v2348
    %v2351 = vmul.f32 %v2349, %v2349
    %v2352 = vsel %vm22, %v2350, 0.0
    %2353 = vadd.xlane.f32.xlu0 %v2352
    %v2354 = vpop.xlane.xlu0 %2353
    %v2355 = vsel %vm22, %v2351, 0.0
    %2356 = vadd.xlane.f32.xlu0 %v2355
    %v2357 = vpop.xlane.xlu0 %2356
    %v2358 = vmul.f32 %v2354, %v29
    %v2359 = vmul.f32 %v2357, %v29
    %v2360 = vadd.f32 %v2358, 1e-12
    %v2361 = vadd.f32 %v2359, 1e-12
    %v2362 = vrsqrt.pop %v2360
    %v2363 = vrsqrt.pop %v2361
    %v2364 = vmul.f32 %v2348, %v2362
    %v2365 = vmul.f32 %v2349, %v2363
    %v2366 = vlaneseq
    %v2367 = vshrl.u32 %v2366, 7
    %v2368 = vsub.s32 0, %v2367
    %v2369 = vrot.slane %v2338, %v2368
    %v2370 = vmul.f32 %v2364, %v2369
    %v2371 = vmul.f32 %v2365, %v2369
    %v2372 = vlaneseq
    %v2373 = vshrl.u32 %v2372, 7
    %v2374 = vsub.s32 0, %v2373
    %v2375 = vrot.slane %v2339, %v2374
    %v2376 = vadd.f32 %v2370, %v2375
    %v2377 = vadd.f32 %v2371, %v2375
    %v2379 = vrot.slane %v2377, 7
    %vm2381 = vcmask 1040384
    %v2382 = vsel %vm2381, %v2376, %v2379
    %v2383 = vld [vmem:[%s2 + $0x140] sm:$0xff]
    %v2384 = vld [vmem:[%s2 + $0x148] sm:$0xff]
    %v2385 = vld [vmem:[%s2 + $0x150] sm:$0xff]
    %v2386 = vld [vmem:[%s2 + $0x158] sm:$0xff]
    %v2387 = vld [vmem:[%s3 + $0x12] sm:$0x1]
    %v2388 = vlaneseq
    %v2389 = vshrl.u32 %v2388, 7
    %v2390 = vsub.s32 0, %v2389
    %v2391 = vrot.slane %v2387, %v2390
    %v2393 = vsel %vm22, %v2382, 0
    %2395 = vmatprep.subr.mxu0 0.0
    %2396 = vmatpush1.msra.mxu0 0.0
    %2397 = vmatprep.subr.mxu0 0.0
    %2398 = vmatpush1.msra.mxu0 0.0
    %2399 = vmatprep.subr.mxu0 0.0
    %2400 = vmatpush1.msra.mxu0 0.0
    %2401 = vmatprep.subr.mxu0 0.0
    %2402 = vmatpush1.msra.mxu0 0.0
    %2403 = vmatprep.subr.mxu0 0.0
    %2404 = vmatpush1.msra.mxu0 0.0
    %2405 = vmatprep.subr.mxu0 0.0
    %2406 = vmatpush1.msra.mxu0 0.0
    %2407 = vmatprep.subr.mxu0 0.0
    %2408 = vmatpush1.msra.mxu0 0.0
    %2409 = vmatprep.subr.mxu0 0.0
    %2410 = vmatpush1.msra.mxu0 0.0
    %2411 = vmatprep.subr.mxu0 0.0
    %2412 = vmatpush1.msra.mxu0 0.0
    %2413 = vmatprep.subr.mxu0 0.0
    %2414 = vmatpush1.msra.mxu0 0.0
    %2415 = vmatprep.subr.mxu0 0.0
    %2416 = vmatpush1.msra.mxu0 0.0
    %2417 = vmatprep.subr.mxu0 0.0
    %2418 = vmatpush1.msra.mxu0 0.0
    %2419 = vmatprep.subr.mxu0 0.0
    %2420 = vmatpush1.msra.mxu0 %v2386
    %2421 = vmatprep.subr.mxu0 0.0
    %2422 = vmatpush1.msra.mxu0 %v2385
    %2423 = vmatprep.subr.mxu0 0.0
    %2424 = vmatpush1.msra.mxu0 %v2384
    %2425 = vmatprep.subr.mxu0 0.0
    %2426 = vmatpush1.msra.mxu0 %v2383
    %2427 = vmatprep.subr.mxu0 0.0
    %2428 = vmatpush2.msra.mxu0 0.0
    %2429 = vmatprep.subr.mxu0 0.0
    %2430 = vmatpush2.msra.mxu0 0.0
    %2431 = vmatprep.subr.mxu0 0.0
    %2432 = vmatpush2.msra.mxu0 0.0
    %2433 = vmatprep.subr.mxu0 0.0
    %2434 = vmatpush2.msra.mxu0 0.0
    %2435 = vmatprep.subr.mxu0 0.0
    %2436 = vmatpush2.msra.mxu0 0.0
    %2437 = vmatprep.subr.mxu0 0.0
    %2438 = vmatpush2.msra.mxu0 0.0
    %2439 = vmatprep.subr.mxu0 0.0
    %2440 = vmatpush2.msra.mxu0 0.0
    %2441 = vmatprep.subr.mxu0 0.0
    %2442 = vmatpush2.msra.mxu0 0.0
    %2443 = vmatprep.subr.mxu0 0.0
    %2444 = vmatpush2.msra.mxu0 0.0
    %2445 = vmatprep.subr.mxu0 0.0
    %2446 = vmatpush2.msra.mxu0 0.0
    %2447 = vmatprep.subr.mxu0 0.0
    %2448 = vmatpush2.msra.mxu0 0.0
    %2449 = vmatprep.subr.mxu0 0.0
    %2450 = vmatpush2.msra.mxu0 0.0
    %2451 = vmatprep.subr.mxu0 0.0
    %2452 = vmatpush2.msra.mxu0 0.0
    %2453 = vmatprep.subr.mxu0 0.0
    %2454 = vmatpush2.msra.mxu0 0.0
    %2455 = vmatprep.subr.mxu0 0.0
    %2456 = vmatpush2.msra.mxu0 0.0
    %2457 = vmatprep.subr.mxu0 0.0
    %2458 = vmatpush2.msra.mxu0 0.0
    %2459 = vmatprep.mubr.f32.mxu0 0.0
    %2460 = vmatmul.mubr.f32.gmra.mxu0 %v2393
    %v2461 = vpop.f32.mrf.mxu0
    %v2462 = vadd.f32 %v2391, %v2461
    %v2463 = vpop.f32.mrf.mxu0
    %2464 = vdwg.mxu0
    %v2465 = vtanh.pop %v2462
    %v2466 = vld [vmem:[%s2 + $0x160] sm:$0xff]
    %v2467 = vld [vmem:[%s2 + $0x168] sm:$0xff]
    %v2468 = vld [vmem:[%s2 + $0x170] sm:$0xff]
    %v2469 = vld [vmem:[%s2 + $0x178] sm:$0xff]
    %v2470 = vld [vmem:[%s3 + $0x13] sm:$0x1]
    %v2471 = vlaneseq
    %v2472 = vshrl.u32 %v2471, 7
    %v2473 = vsub.s32 0, %v2472
    %v2474 = vrot.slane %v2470, %v2473
    %v2476 = vsel %vm22, %v2465, 0
    %2478 = vmatprep.subr.mxu0 0.0
    %2479 = vmatpush1.msra.mxu0 0.0
    %2480 = vmatprep.subr.mxu0 0.0
    %2481 = vmatpush1.msra.mxu0 0.0
    %2482 = vmatprep.subr.mxu0 0.0
    %2483 = vmatpush1.msra.mxu0 0.0
    %2484 = vmatprep.subr.mxu0 0.0
    %2485 = vmatpush1.msra.mxu0 0.0
    %2486 = vmatprep.subr.mxu0 0.0
    %2487 = vmatpush1.msra.mxu0 0.0
    %2488 = vmatprep.subr.mxu0 0.0
    %2489 = vmatpush1.msra.mxu0 0.0
    %2490 = vmatprep.subr.mxu0 0.0
    %2491 = vmatpush1.msra.mxu0 0.0
    %2492 = vmatprep.subr.mxu0 0.0
    %2493 = vmatpush1.msra.mxu0 0.0
    %2494 = vmatprep.subr.mxu0 0.0
    %2495 = vmatpush1.msra.mxu0 0.0
    %2496 = vmatprep.subr.mxu0 0.0
    %2497 = vmatpush1.msra.mxu0 0.0
    %2498 = vmatprep.subr.mxu0 0.0
    %2499 = vmatpush1.msra.mxu0 0.0
    %2500 = vmatprep.subr.mxu0 0.0
    %2501 = vmatpush1.msra.mxu0 0.0
    %2502 = vmatprep.subr.mxu0 0.0
    %2503 = vmatpush1.msra.mxu0 %v2469
    %2504 = vmatprep.subr.mxu0 0.0
    %2505 = vmatpush1.msra.mxu0 %v2468
    %2506 = vmatprep.subr.mxu0 0.0
    %2507 = vmatpush1.msra.mxu0 %v2467
    %2508 = vmatprep.subr.mxu0 0.0
    %2509 = vmatpush1.msra.mxu0 %v2466
    %2510 = vmatprep.subr.mxu0 0.0
    %2511 = vmatpush2.msra.mxu0 0.0
    %2512 = vmatprep.subr.mxu0 0.0
    %2513 = vmatpush2.msra.mxu0 0.0
    %2514 = vmatprep.subr.mxu0 0.0
    %2515 = vmatpush2.msra.mxu0 0.0
    %2516 = vmatprep.subr.mxu0 0.0
    %2517 = vmatpush2.msra.mxu0 0.0
    %2518 = vmatprep.subr.mxu0 0.0
    %2519 = vmatpush2.msra.mxu0 0.0
    %2520 = vmatprep.subr.mxu0 0.0
    %2521 = vmatpush2.msra.mxu0 0.0
    %2522 = vmatprep.subr.mxu0 0.0
    %2523 = vmatpush2.msra.mxu0 0.0
    %2524 = vmatprep.subr.mxu0 0.0
    %2525 = vmatpush2.msra.mxu0 0.0
    %2526 = vmatprep.subr.mxu0 0.0
    %2527 = vmatpush2.msra.mxu0 0.0
    %2528 = vmatprep.subr.mxu0 0.0
    %2529 = vmatpush2.msra.mxu0 0.0
    %2530 = vmatprep.subr.mxu0 0.0
    %2531 = vmatpush2.msra.mxu0 0.0
    %2532 = vmatprep.subr.mxu0 0.0
    %2533 = vmatpush2.msra.mxu0 0.0
    %2534 = vmatprep.subr.mxu0 0.0
    %2535 = vmatpush2.msra.mxu0 0.0
    %2536 = vmatprep.subr.mxu0 0.0
    %2537 = vmatpush2.msra.mxu0 0.0
    %2538 = vmatprep.subr.mxu0 0.0
    %2539 = vmatpush2.msra.mxu0 0.0
    %2540 = vmatprep.subr.mxu0 0.0
    %2541 = vmatpush2.msra.mxu0 0.0
    %2542 = vmatprep.mubr.f32.mxu0 0.0
    %2543 = vmatmul.mubr.f32.gmra.mxu0 %v2476
    %v2544 = vpop.f32.mrf.mxu0
    %v2545 = vadd.f32 %v2474, %v2544
    %v2546 = vpop.f32.mrf.mxu0
    %2547 = vdwg.mxu0
    %vm2548 = vcmask 17408
    %2549 = vst.msk [vmem:[#allocation3] sm:$0x3] %vm2548, %v2545
    // Predicated region
    $region18: #{sentiment_classifier_forward.1} parent=1 // pred_check
      _
    $region19: #{sentiment_classifier_forward.1} parent=1 // pred_check_branch
      %2551 = sbr.rel (0) target = $region21
    $region20: #{sentiment_classifier_forward.1} parent=1 // pred_region
      %s2553 = ssub.s32 32, 32
      %2554 = vsyncadd [#allocation4], %s2553
      %s2556 = sshll.u32 [#allocation3], 4
      %s2557 = int_to_ptr.vmem [resolvable:$true] %s2556
      %2559 = dma.vmem_to_hbm [thread:$0]  %s2557, 32, %s4, [#allocation4]
    $region21: #{sentiment_classifier_forward.1} parent=1 // pred_fallthru
      _
    // Predicated region
    $region22: #{sentiment_classifier_forward.1} parent=1 // pred_check
      _
    $region23: #{sentiment_classifier_forward.1} parent=1 // pred_check_branch
      %2561 = sbr.rel (0) target = $region25
    $region24: #{sentiment_classifier_forward.1} parent=1 // pred_region
      %2562 = dma.done [#allocation4], 32
    $region25: #{sentiment_classifier_forward.1} parent=1 // pred_fallthru
      _
    %2563 = vsyncpa [#allocation4], 1

</llo_original>
